<compile_context>
chip_gen: v6e
topology: v6e:2x2x1
jax: 0.10.0
libtpu: 0.0.40
codegen_flags: <defaults>
</compile_context>

<pallas_src>
import math

import jax
import jax.numpy as jnp
from jax.experimental import pallas as pl
from jax.experimental.pallas import tpu as pltpu


def _round_up(x, m):
    return ((x + m - 1) // m) * m


def _default_vmem_limit_bytes():
    """Per-generation VMEM budget: ~7/8 of physical, capped at 112 MiB."""
    try:
        cap = int(pltpu.get_tpu_info().vmem_capacity_bytes)
        return min(cap - cap // 8, 112 * 1024 * 1024)
    except Exception:
        return 48 * 1024 * 1024  # conservative: fits every generation


def _anchor_graph_learner_kernel(x_ref, ha_ref, w1x_ref, w2blk_ref, b2_ref,
                                 att_ref):
    """One (node tile, anchor tile) block of the AnchorGraphLearner forward.

    x_ref     : (nt, H)       bf16  node features for this node tile
    ha_ref    : (a_blk, P*H)  bf16  anchors @ W1a + b1, all perspectives (node-invariant)
    w1x_ref   : (H, P*H)      bf16  node half of all P Linear1 weights, batched
    w2blk_ref : (P*H, P)      bf16  block-diagonal Linear2 weights
    b2_ref    : (1, P)        f32   Linear2 biases
    att_ref   : (nt, a_blk)   f32   attention tile (mean over perspectives of sigmoid)
    """
    nt = x_ref.shape[0]
    a_blk = ha_ref.shape[0]
    num_p = w2blk_ref.shape[1]

    # Node-side Linear1 terms for all P perspectives: one wide MXU matmul
    # (bf16 operands, f32 accumulation) instead of P skinny matmuls.
    hx = jnp.dot(x_ref[...], w1x_ref[...],
                 preferred_element_type=jnp.float32)              # (nt, P*H) f32

    # Pairwise (node, anchor) hidden activations: a single broadcast add + ReLU
    # on the VPU, in ha_ref's dtype (bf16 on v6e/v7x).  Rows are node-major /
    # anchor-minor so the attention tile below is a plain reshape.
    hid = jnp.maximum(
        hx.astype(ha_ref.dtype)[:, None, :] + ha_ref[...][None, :, :], 0.0
    ).astype(jnp.bfloat16)                                        # (nt, a_blk, P*H)
    hid2 = hid.reshape(nt * a_blk, hid.shape[-1])                 # leading-dim collapse

    # Block-diagonal Linear2: all P perspective scores from one MXU matmul,
    # instead of a VPU multiply + XLU lane reduce over H.
    scores = (jnp.dot(hid2, w2blk_ref[...], preferred_element_type=jnp.float32)
              + b2_ref[...])                                      # (nt*a_blk, P)

    # sigmoid(s) = 0.5*(1 + tanh(0.5*s)):  tanh issues on the (idle) EUP slot.
    sig = 0.5 * (1.0 + jnp.tanh(0.5 * scores))
    att = jnp.sum(sig, axis=-1, keepdims=True) * (1.0 / num_p)    # (nt*a_blk, 1)

    # n-major / a-minor row order -> the tile is a single relayout, no concats.
    att_ref[...] = att.reshape(nt, a_blk)


def pack_anchor_graph_learner_params(anchors, w1, b1, w2, b2, *,
                                     elem_dtype=jnp.bfloat16):
    """One-time weight repacking (hoisted out of the forward path).

    elem_dtype: dtype of the broadcast add/ReLU inside the kernel.  bf16 on
    v6e/v7x (bf16 VALUs); use jnp.float32 on v5e (no bf16 VALUs).
    """
    A, H = anchors.shape
    P = w1.shape[0]
    assert w1.shape == (P, 2 * H, H)
    assert b1.shape == (P, H) and w2.shape == (P, H) and b2.shape == (P,)
    PH = P * H

    # concat([x, anchor]) @ W1_p  ==  x @ W1_p[:H]  +  anchor @ W1_p[H:]
    # Batched over perspectives: hidden column index = p*H + h.
    w1x_all = jnp.transpose(w1[:, :H, :], (1, 0, 2)).reshape(H, PH)   # node half
    w1a_all = jnp.transpose(w1[:, H:, :], (1, 0, 2)).reshape(H, PH)   # anchor half
    b1_all = b1.reshape(1, PH).astype(jnp.float32)

    # Block-diagonal Linear2 weights: output column p only sees hidden block p.
    w2_blk = (jnp.eye(P, dtype=w2.dtype)[:, None, :] * w2[:, :, None]).reshape(PH, P)
    b2_row = b2.reshape(1, P).astype(jnp.float32)

    # Anchor padding: sublane multiple for small A, 128-multiple when the anchor
    # dimension has to be blocked (output block last dim must then be 128-dense).
    a_pad = _round_up(A, 8) if A <= 128 else _round_up(A, 128)
    anchors_p = jnp.zeros((a_pad, H), jnp.float32).at[:A].set(
        anchors.astype(jnp.float32))

    # Anchor-side Linear1 term with the bias folded in: node-independent, computed
    # once here (f32) instead of per node tile inside the kernel.
    ha_all = (jnp.dot(anchors_p, w1a_all, preferred_element_type=jnp.float32)
              + b1_all).astype(elem_dtype)                            # (a_pad, PH)

    return dict(
        anchors=anchors,
        ha_all=ha_all,
        w1x=w1x_all.astype(jnp.bfloat16),
        w2_blk=w2_blk.astype(jnp.bfloat16),
        b2=b2_row,
        A=A, a_pad=a_pad, P=P, H=H,
    )


def anchor_graph_learner(context, packed, *, node_tile=256, anchor_tile=128,
                         vmem_limit_bytes=None):
    """Pallas forward of AnchorGraphLearner: returns (attention (N, A), anchors)."""
    N, H = context.shape
    assert H == packed["H"]
    A, a_pad, P = packed["A"], packed["a_pad"], packed["P"]
    PH = P * H

    # Node tile: multiple of 16 (bf16 sublane packing).  Default 256; use
    # 128-256 on v7x (hid scales with nt against 64 MiB VMEM).
    nt = _round_up(min(node_tile, max(N, 16)), 16)
    n_pad = _round_up(N, nt)

    # Anchor tile: whole (padded) anchor set when small, else 128-wide blocks so
    # peak VMEM is independent of A.
    if a_pad <= anchor_tile:
        a_blk = a_pad
    else:
        a_blk = anchor_tile
        assert a_blk % 128 == 0 and a_pad % a_blk == 0

    x_p = jnp.zeros((n_pad, H), jnp.bfloat16).at[:N].set(context.astype(jnp.bfloat16))

    if vmem_limit_bytes is None:
        vmem_limit_bytes = _default_vmem_limit_bytes()

    grid = (n_pad // nt, a_pad // a_blk)
    const = lambda i, j: (0, 0)
    resident = dict(pipeline_mode=pl.Buffered(1))  # constant blocks: single-buffer

    ha_spec = (pl.BlockSpec((a_blk, PH), lambda i, j: (j, 0), **resident)
               if a_pad == a_blk else
               pl.BlockSpec((a_blk, PH), lambda i, j: (j, 0)))

    att_pad = pl.pallas_call(
        _anchor_graph_learner_kernel,
        out_shape=jax.ShapeDtypeStruct((n_pad, a_pad), jnp.float32),
        grid=grid,
        in_specs=[
            pl.BlockSpec((nt, H), lambda i, j: (i, 0)),      # node tile (pipelined)
            ha_spec,                                         # anchor Linear1 terms (+ b1)
            pl.BlockSpec((H, PH), const, **resident),        # batched node-half Linear1
            pl.BlockSpec((PH, P), const, **resident),        # block-diagonal Linear2
            pl.BlockSpec((1, P), const, **resident),         # Linear2 biases
        ],
        out_specs=pl.BlockSpec((nt, a_blk), lambda i, j: (i, j)),
        compiler_params=pltpu.CompilerParams(
            # node tiles are independent -> shards across v7x's two TensorCores
            dimension_semantics=("parallel", "arbitrary"),
            vmem_limit_bytes=vmem_limit_bytes,
        ),
    )(x_p, packed["ha_all"], packed["w1x"], packed["w2_blk"], packed["b2"])

    attention = att_pad[:N, :A]
    return attention, packed["anchors"]


def make_params(key, hidden_size, anchor_nums, num_pers):
    keys = jax.random.split(key, 1 + 4 * num_pers)
    # TODO(synk): torch uses nn.init.orthogonal_ for the anchors; a plain normal
    # init is used here (initialization does not affect the forward kernel).
    anchors = jax.random.normal(keys[0], (anchor_nums, hidden_size), jnp.float32)

    def _lin(k, fan_in, shape):
        bound = 1.0 / math.sqrt(fan_in)
        return jax.random.uniform(k, shape, jnp.float32, -bound, bound)

    w1, b1, w2, b2 = [], [], [], []
    for p in range(num_pers):
        kw1, kb1, kw2, kb2 = keys[1 + 4 * p: 5 + 4 * p]
        w1.append(_lin(kw1, 2 * hidden_size, (2 * hidden_size, hidden_size)))
        b1.append(_lin(kb1, 2 * hidden_size, (hidden_size,)))
        w2.append(_lin(kw2, hidden_size, (hidden_size,)))
        b2.append(_lin(kb2, hidden_size, ()))
    return dict(anchors=anchors, w1=jnp.stack(w1), b1=jnp.stack(b1),
                w2=jnp.stack(w2), b2=jnp.stack(b2))


def reference_forward(context, anchors, w1, b1, w2, b2):
    """Pure-JAX (f32) mirror of the PyTorch AnchorGraphLearner.forward."""
    H = context.shape[1]
    attn = []
    for p in range(w1.shape[0]):
        hx = context @ w1[p, :H, :]
        ha = anchors @ w1[p, H:, :] + b1[p]
        hid = jax.nn.relu(hx[:, None, :] + ha[None, :, :])      # (N, A, H)
        score = hid @ w2[p] + b2[p]                             # (N, A)
        attn.append(jax.nn.sigmoid(score))
    return jnp.mean(jnp.stack(attn, 0), axis=0), anchors


if __name__ == "__main__":
    key = jax.random.PRNGKey(0)
    k_ctx, k_par = jax.random.split(key)

    N, H = 200, 32              # nodes, hidden_size (== input_size)
    A, P = 10, 4                # anchor_nums, num_pers

    context = jax.random.normal(k_ctx, (N, H), dtype=jnp.float32)
    params = make_params(k_par, H, A, P)

    # One-time weight repacking, hoisted out of the forward path.
    packed = pack_anchor_graph_learner_params(
        params["anchors"], params["w1"], params["b1"], params["w2"], params["b2"])

    attention, anchors_out = anchor_graph_learner(context, packed, node_tile=128)
    attention, anchors_out = jax.block_until_ready((attention, anchors_out))

    ref_attention, _ = reference_forward(
        context, params["anchors"], params["w1"], params["b1"],
        params["w2"], params["b2"])

    assert attention.shape == (N, A)
    assert anchors_out.shape == (A, H)
    max_err = float(jnp.max(jnp.abs(attention - ref_attention)))
    assert max_err < 3e-2, f"mismatch vs reference: max |err| = {max_err}"
    print("KERNEL_OK")
</pallas_src>

<mosaic_0001>
module attributes {stable_mosaic.version = 11 : i64} {
  func.func @_anchor_graph_learner_kernel(%arg0: i32, %arg1: i32, %arg2: memref<128x32xbf16, #tpu.memory_space<vmem>>, %arg3: memref<16x128xbf16, #tpu.memory_space<vmem>>, %arg4: memref<32x128xbf16, #tpu.memory_space<vmem>>, %arg5: memref<128x4xbf16, #tpu.memory_space<vmem>>, %arg6: memref<1x4xf32, #tpu.memory_space<vmem>>, %arg7: memref<128x16xf32, #tpu.memory_space<vmem>>) attributes {dimension_semantics = [#tpu.dimension_semantics<parallel>, #tpu.dimension_semantics<arbitrary>], iteration_bounds = array<i64: 2, 1>, scalar_prefetch = 0 : i64, scratch_operands = 0 : i64, tpu.core_type = #tpu.core_type<tc>, window_params = [{transform_indices = @transform_0, window_bounds = array<i64: 128, 32>}, {pipeline_mode = #tpu.pipeline_mode<synchronous>, transform_indices = @transform_1, window_bounds = array<i64: 16, 128>}, {pipeline_mode = #tpu.pipeline_mode<synchronous>, transform_indices = @transform_2, window_bounds = array<i64: 32, 128>}, {pipeline_mode = #tpu.pipeline_mode<synchronous>, transform_indices = @transform_3, window_bounds = array<i64: 128, 4>}, {pipeline_mode = #tpu.pipeline_mode<synchronous>, transform_indices = @transform_4, window_bounds = array<i64: 1, 4>}, {transform_indices = @transform_5, window_bounds = array<i64: 128, 16>}]} {
    %c0 = arith.constant 0 : index
    %c0_0 = arith.constant 0 : index
    %0 = vector.load %arg2[%c0, %c0_0] : memref<128x32xbf16, #tpu.memory_space<vmem>>, vector<128x32xbf16>
    %c0_1 = arith.constant 0 : index
    %c0_2 = arith.constant 0 : index
    %1 = vector.load %arg4[%c0_1, %c0_2] : memref<32x128xbf16, #tpu.memory_space<vmem>>, vector<32x128xbf16>
    %cst = arith.constant dense<0.000000e+00> : vector<128x128xf32>
    %2 = tpu.matmul %0, %1, %cst {dimension_numbers = #tpu.dot_dimension_numbers<[1], [0], [0], [1], [0, 0, 1, 1], [], []>} : vector<128x32xbf16>, vector<32x128xbf16>, vector<128x128xf32> -> vector<128x128xf32>
    %3 = arith.truncf %2 : vector<128x128xf32> to vector<128x128xbf16>
    %4 = vector.shape_cast %3 : vector<128x128xbf16> to vector<128x1x128xbf16>
    %c0_3 = arith.constant 0 : index
    %c0_4 = arith.constant 0 : index
    %5 = vector.load %arg3[%c0_3, %c0_4] : memref<16x128xbf16, #tpu.memory_space<vmem>>, vector<16x128xbf16>
    %6 = vector.shape_cast %5 : vector<16x128xbf16> to vector<1x16x128xbf16>
    %7 = vector.broadcast %4 : vector<128x1x128xbf16> to vector<128x16x128xbf16>
    %8 = vector.broadcast %6 : vector<1x16x128xbf16> to vector<128x16x128xbf16>
    %9 = arith.addf %7, %8 : vector<128x16x128xbf16>
    %cst_5 = arith.constant 0.000000e+00 : bf16
    %10 = vector.broadcast %cst_5 : bf16 to vector<128x16x128xbf16>
    %11 = arith.maximumf %9, %10 : vector<128x16x128xbf16>
    %12 = vector.shape_cast %11 : vector<128x16x128xbf16> to vector<2048x128xbf16>
    %c0_6 = arith.constant 0 : index
    %c0_7 = arith.constant 0 : index
    %13 = vector.load %arg5[%c0_6, %c0_7] : memref<128x4xbf16, #tpu.memory_space<vmem>>, vector<128x4xbf16>
    %cst_8 = arith.constant dense<0.000000e+00> : vector<2048x4xf32>
    %14 = tpu.matmul %12, %13, %cst_8 {dimension_numbers = #tpu.dot_dimension_numbers<[1], [0], [0], [1], [0, 0, 1, 1], [], []>} : vector<2048x128xbf16>, vector<128x4xbf16>, vector<2048x4xf32> -> vector<2048x4xf32>
    %c0_9 = arith.constant 0 : index
    %c0_10 = arith.constant 0 : index
    %15 = vector.load %arg6[%c0_9, %c0_10] : memref<1x4xf32, #tpu.memory_space<vmem>>, vector<1x4xf32>
    %16 = vector.broadcast %15 : vector<1x4xf32> to vector<2048x4xf32>
    %17 = arith.addf %14, %16 : vector<2048x4xf32>
    %cst_11 = arith.constant 5.000000e-01 : f32
    %18 = vector.broadcast %cst_11 : f32 to vector<2048x4xf32>
    %19 = arith.mulf %18, %17 : vector<2048x4xf32>
    %20 = math.tanh %19 : vector<2048x4xf32>
    %cst_12 = arith.constant 1.000000e+00 : f32
    %21 = vector.broadcast %cst_12 : f32 to vector<2048x4xf32>
    %22 = arith.addf %21, %20 : vector<2048x4xf32>
    %cst_13 = arith.constant 5.000000e-01 : f32
    %23 = vector.broadcast %cst_13 : f32 to vector<2048x4xf32>
    %24 = arith.mulf %23, %22 : vector<2048x4xf32>
    %cst_14 = arith.constant dense<0.000000e+00> : vector<2048xf32>
    %25 = vector.multi_reduction <add>, %24, %cst_14 [1] : vector<2048x4xf32> to vector<2048xf32>
    %26 = vector.shape_cast %25 : vector<2048xf32> to vector<2048x1xf32>
    %cst_15 = arith.constant 2.500000e-01 : f32
    %27 = vector.broadcast %cst_15 : f32 to vector<2048x1xf32>
    %28 = arith.mulf %26, %27 : vector<2048x1xf32>
    %29 = vector.shape_cast %28 : vector<2048x1xf32> to vector<128x16xf32>
    %c0_16 = arith.constant 0 : index
    %c0_17 = arith.constant 0 : index
    %30 = vector.load %arg7[%c0_16, %c0_17] : memref<128x16xf32, #tpu.memory_space<vmem>>, vector<128x16xf32>
    tpu.vector_store %arg7[%c0_16, %c0_17], %29 {strides = array<i32>} : memref<128x16xf32, #tpu.memory_space<vmem>>, vector<128x16xf32>,
    return
  }
  func.func @transform_0(%arg0: i32, %arg1: i32) -> (i32, i32) {
    %c0_i32 = arith.constant 0 : i32
    %c0_i32_0 = arith.constant 0 : i32
    return %arg0, %c0_i32 : i32, i32
  }
  func.func @transform_1(%arg0: i32, %arg1: i32) -> (i32, i32) {
    %c0_i32 = arith.constant 0 : i32
    %c0_i32_0 = arith.constant 0 : i32
    return %arg1, %c0_i32 : i32, i32
  }
  func.func @transform_2(%arg0: i32, %arg1: i32) -> (i32, i32) {
    %c0_i32 = arith.constant 0 : i32
    %c0_i32_0 = arith.constant 0 : i32
    %c0_i32_1 = arith.constant 0 : i32
    return %c0_i32, %c0_i32_0 : i32, i32
  }
  func.func @transform_3(%arg0: i32, %arg1: i32) -> (i32, i32) {
    %c0_i32 = arith.constant 0 : i32
    %c0_i32_0 = arith.constant 0 : i32
    %c0_i32_1 = arith.constant 0 : i32
    return %c0_i32, %c0_i32_0 : i32, i32
  }
  func.func @transform_4(%arg0: i32, %arg1: i32) -> (i32, i32) {
    %c0_i32 = arith.constant 0 : i32
    %c0_i32_0 = arith.constant 0 : i32
    %c0_i32_1 = arith.constant 0 : i32
    return %c0_i32, %c0_i32_0 : i32, i32
  }
  func.func @transform_5(%arg0: i32, %arg1: i32) -> (i32, i32) {
    %c0_i32 = arith.constant 0 : i32
    return %arg0, %arg1 : i32, i32
  }
}

</mosaic_0001>

<llo_original>
// kernel: tpu_custom_call.1
$region0: #{tpu_custom_call.1}
  #allocation0 [shape = 'u32[]', space=smem, size = 0x4, offset = 0x4, fixed_abs, tag = 'smem constant byte address 0x4 - core index']
  #allocation1 [shape = 'u32[144,128]{1,0:T(1,128)}', space=vmem, size = 0x12000, scoped, tag = 'internal scratch']
  %s0 = inlined_call_operand.vmem [shape: bf16[256,32], index: 0, kind: input, shape index: {}]
  %s1 = inlined_call_operand.vmem [shape: bf16[16,128], index: 1, kind: input, shape index: {}]
  %s2 = inlined_call_operand.vmem [shape: bf16[32,128], index: 2, kind: input, shape index: {}]
  %s3 = inlined_call_operand.vmem [shape: bf16[128,4], index: 3, kind: input, shape index: {}]
  %s4 = inlined_call_operand.vmem [shape: f32[1,4], index: 4, kind: input, shape index: {}]
  %s5 = inlined_call_operand.vmem [shape: f32[256,16], index: 5, kind: output, shape index: {}]
  %s6 = sld [smem:[#allocation0]]
  $region53: #{tpu_custom_call.1} parent=0
    _
  %s8 = ssub.s32 1, %s6
  %s9 = scalar_select 0, %s8, %s6
  loop: start=0, step=1, limit=4
  $region2: #{tpu_custom_call.1} parent=0 // loop_pre_header
    _
  $region3: #{tpu_custom_call.1} parent=0 // loop_header
    %s11 = sphi 0, %s15
    %p12 = scmp.ge.s32.totalorder %s11, 4
    %s18 = sphi 0, %s30
    %s19 = sphi 0, %s26
    %s20 = sphi 0, %s18
    %s21 = sphi 0, %s19
    %s22 = sphi 0, %s20
    %s23 = sphi 0, %s21
    %s33 = sphi 0, %s35
    %s36 = sphi 0, %s33
    %s37 = sphi 0, %s36
    %s53 = sphi 0, %s37
    %s59 = sphi 0, %s61
    %s62 = sphi 0, %s59
    %s63 = sphi 0, %s62
    %s79 = sphi 0, %s63
    %s83 = sphi 0, %s83
    %s85 = sphi 0, %s83
    %s86 = sphi 0, %s85
    %s100 = sphi 0, %s86
    %s104 = sphi 0, %s104
    %s106 = sphi 0, %s104
    %s107 = sphi 0, %s106
    %s121 = sphi 0, %s107
    %s125 = sphi 0, %s125
    %s127 = sphi 0, %s125
    %s128 = sphi 0, %s127
    %s142 = sphi 0, %s128
    %s150 = sphi 0, %s152
    %s153 = sphi 0, %s150
    %s154 = sphi 0, %s153
    %s170 = sphi 0, %s154
  $region4: #{tpu_custom_call.1} parent=0 // loop_header_branch
    %14 = sbr.rel (%p12) target = $region8
  $region5: #{tpu_custom_call.1} parent=0 // loop_body
    %s16 = ssub.s32 %s11, 1
    %s17 = ssub.s32 %s11, 2
    %s24 = sadd.s32 1, %s19
    %p25 = scmp.ge.s32.totalorder %s24, 1
    %s26 = scalar_select %p25, 0, %s24
    %s27 = sadd.s32 1, %s18
    %s28 = scalar_select %p25, %s27, %s18
    %p29 = scmp.ge.s32.totalorder %s28, 2
    %s30 = scalar_select %p29, 0, %s28
    %s31 = ssub.s32 %s18, %s30
    %p32 = scmp.eq.s32.totalorder %s31, 0
    %s34 = sadd.s32 %s33, 1
    %s35 = scalar_select %p32, %s33, %s34
    %p38 = pneg %p32
    %p39 = scmp.eq.s32.totalorder %s11, 1
    %p40 = por %p38, %p39
    %p41 = scmp.ne.s32.totalorder %s33, %s36
    %p42 = scmp.eq.s32.totalorder %s11, 0
    %p43 = por %p41, %p42
    %p44 = scmp.ne.s32.totalorder %s33, %s36
    %p45 = scmp.eq.s32.totalorder %s16, 1
    %p46 = por %p44, %p45
    %p47 = scmp.ne.s32.totalorder %s36, %s37
    %p48 = scmp.eq.s32.totalorder %s16, 0
    %p49 = por %p47, %p48
    %p50 = scmp.ne.s32.totalorder %s36, %s37
    %p51 = scmp.eq.s32.totalorder %s17, 1
    %p52 = por %p50, %p51
    %p54 = scmp.ne.s32.totalorder %s37, %s53
    %p55 = scmp.eq.s32.totalorder %s17, 0
    %p56 = por %p54, %p55
    %s57 = ssub.s32 %s19, %s26
    %p58 = scmp.eq.s32.totalorder %s57, 0
    %s60 = sadd.s32 %s59, 1
    %s61 = scalar_select %p58, %s59, %s60
    %p64 = pneg %p58
    %p65 = scmp.eq.s32.totalorder %s11, 1
    %p66 = por %p64, %p65
    %p67 = scmp.ne.s32.totalorder %s59, %s62
    %p68 = scmp.eq.s32.totalorder %s11, 0
    %p69 = por %p67, %p68
    %p70 = scmp.ne.s32.totalorder %s59, %s62
    %p71 = scmp.eq.s32.totalorder %s16, 1
    %p72 = por %p70, %p71
    %p73 = scmp.ne.s32.totalorder %s62, %s63
    %p74 = scmp.eq.s32.totalorder %s16, 0
    %p75 = por %p73, %p74
    %p76 = scmp.ne.s32.totalorder %s62, %s63
    %p77 = scmp.eq.s32.totalorder %s17, 1
    %p78 = por %p76, %p77
    %p80 = scmp.ne.s32.totalorder %s63, %s79
    %p81 = scmp.eq.s32.totalorder %s17, 0
    %p82 = por %p80, %p81
    %s84 = sadd.s32 %s83, 1
    %p87 = scmp.eq.s32.totalorder %s11, 1
    %p88 = scmp.ne.s32.totalorder %s83, %s85
    %p89 = scmp.eq.s32.totalorder %s11, 0
    %p90 = por %p88, %p89
    %p91 = scmp.ne.s32.totalorder %s83, %s85
    %p92 = scmp.eq.s32.totalorder %s16, 1
    %p93 = por %p91, %p92
    %p94 = scmp.ne.s32.totalorder %s85, %s86
    %p95 = scmp.eq.s32.totalorder %s16, 0
    %p96 = por %p94, %p95
    %p97 = scmp.ne.s32.totalorder %s85, %s86
    %p98 = scmp.eq.s32.totalorder %s17, 1
    %p99 = por %p97, %p98
    %p101 = scmp.ne.s32.totalorder %s86, %s100
    %p102 = scmp.eq.s32.totalorder %s17, 0
    %p103 = por %p101, %p102
    %s105 = sadd.s32 %s104, 1
    %p108 = scmp.eq.s32.totalorder %s11, 1
    %p109 = scmp.ne.s32.totalorder %s104, %s106
    %p110 = scmp.eq.s32.totalorder %s11, 0
    %p111 = por %p109, %p110
    %p112 = scmp.ne.s32.totalorder %s104, %s106
    %p113 = scmp.eq.s32.totalorder %s16, 1
    %p114 = por %p112, %p113
    %p115 = scmp.ne.s32.totalorder %s106, %s107
    %p116 = scmp.eq.s32.totalorder %s16, 0
    %p117 = por %p115, %p116
    %p118 = scmp.ne.s32.totalorder %s106, %s107
    %p119 = scmp.eq.s32.totalorder %s17, 1
    %p120 = por %p118, %p119
    %p122 = scmp.ne.s32.totalorder %s107, %s121
    %p123 = scmp.eq.s32.totalorder %s17, 0
    %p124 = por %p122, %p123
    %s126 = sadd.s32 %s125, 1
    %p129 = scmp.eq.s32.totalorder %s11, 1
    %p130 = scmp.ne.s32.totalorder %s125, %s127
    %p131 = scmp.eq.s32.totalorder %s11, 0
    %p132 = por %p130, %p131
    %p133 = scmp.ne.s32.totalorder %s125, %s127
    %p134 = scmp.eq.s32.totalorder %s16, 1
    %p135 = por %p133, %p134
    %p136 = scmp.ne.s32.totalorder %s127, %s128
    %p137 = scmp.eq.s32.totalorder %s16, 0
    %p138 = por %p136, %p137
    %p139 = scmp.ne.s32.totalorder %s127, %s128
    %p140 = scmp.eq.s32.totalorder %s17, 1
    %p141 = por %p139, %p140
    %p143 = scmp.ne.s32.totalorder %s128, %s142
    %p144 = scmp.eq.s32.totalorder %s17, 0
    %p145 = por %p143, %p144
    %s146 = ssub.s32 %s18, %s30
    %s147 = ssub.s32 %s19, %s26
    %s148 = sor.u32 %s146, %s147
    %p149 = scmp.eq.s32.totalorder %s148, 0
    %s151 = sadd.s32 %s150, 1
    %s152 = scalar_select %p149, %s150, %s151
    %p155 = pneg %p149
    %p156 = scmp.eq.s32.totalorder %s11, 1
    %p157 = por %p155, %p156
    %p158 = scmp.ne.s32.totalorder %s150, %s153
    %p159 = scmp.eq.s32.totalorder %s11, 0
    %p160 = por %p158, %p159
    %p161 = scmp.ne.s32.totalorder %s150, %s153
    %p162 = scmp.eq.s32.totalorder %s16, 1
    %p163 = por %p161, %p162
    %p164 = scmp.ne.s32.totalorder %s153, %s154
    %p165 = scmp.eq.s32.totalorder %s16, 0
    %p166 = por %p164, %p165
    %p167 = scmp.ne.s32.totalorder %s153, %s154
    %p168 = scmp.eq.s32.totalorder %s17, 1
    %p169 = por %p167, %p168
    %p171 = scmp.ne.s32.totalorder %s154, %s170
    %p172 = scmp.eq.s32.totalorder %s17, 0
    %p173 = por %p171, %p172
    %p174 = scmp.le.s32.totalorder 1, %s11
    %p175 = scmp.lt.s32.totalorder %s11, 3
    %p176 = pnand %p174, %p175
    %p177 = pneg %p176
    // Predicated region
    $region9: #{tpu_custom_call.1} parent=5 // pred_check
      _
    $region10: #{tpu_custom_call.1} parent=5 // pred_check_branch
      %179 = sbr.rel (%p176) target = $region12
    $region11: #{tpu_custom_call.1} parent=5 // pred_region
      %s180 = ssub.s32 %s11, 1
      // Predicated region
      $region13: #{tpu_custom_call.1} parent=11 // pred_check
        %p181 = pneg %p75
      $region14: #{tpu_custom_call.1} parent=11 // pred_check_branch
        %183 = sbr.rel (%p181) target = $region16
      $region15: #{tpu_custom_call.1} parent=11 // pred_region
        %s184 = smul.u32 2, %s21
        %p185 = scmp.lt.s32.totalorder %s184, 1
        %s186 = scalar_select %p185, %s184, 1
        %s187 = smul.addr %s186, 4
        %s188 = scalar_lea.vmem %s1, %s187
        %s189 = smul.u32 2, %s21
      $region16: #{tpu_custom_call.1} parent=11 // pred_fallthru
        _
      // Predicated region
      $region17: #{tpu_custom_call.1} parent=11 // pred_check
        %p190 = pneg %p96
      $region18: #{tpu_custom_call.1} parent=11 // pred_check_branch
        %192 = sbr.rel (%p190) target = $region20
      $region19: #{tpu_custom_call.1} parent=11 // pred_region
        _
      $region20: #{tpu_custom_call.1} parent=11 // pred_fallthru
        _
      // Predicated region
      $region21: #{tpu_custom_call.1} parent=11 // pred_check
        %p193 = pneg %p117
      $region22: #{tpu_custom_call.1} parent=11 // pred_check_branch
        %195 = sbr.rel (%p193) target = $region24
      $region23: #{tpu_custom_call.1} parent=11 // pred_region
        _
      $region24: #{tpu_custom_call.1} parent=11 // pred_fallthru
        _
      // Predicated region
      $region25: #{tpu_custom_call.1} parent=11 // pred_check
        %p196 = pneg %p138
      $region26: #{tpu_custom_call.1} parent=11 // pred_check_branch
        %198 = sbr.rel (%p196) target = $region28
      $region27: #{tpu_custom_call.1} parent=11 // pred_region
        _
      $region28: #{tpu_custom_call.1} parent=11 // pred_fallthru
        _
    $region12: #{tpu_custom_call.1} parent=5 // pred_fallthru
      _
    %p199 = scmp.lt.s32.totalorder %s11, 2
    // Predicated region
    $region29: #{tpu_custom_call.1} parent=5 // pred_check
      %p200 = pneg %p199
    $region30: #{tpu_custom_call.1} parent=5 // pred_check_branch
      %202 = sbr.rel (%p200) target = $region32
    $region31: #{tpu_custom_call.1} parent=5 // pred_region
      // Predicated region
      $region33: #{tpu_custom_call.1} parent=31 // pred_check
        %p203 = pneg %p43
      $region34: #{tpu_custom_call.1} parent=31 // pred_check_branch
        %205 = sbr.rel (%p203) target = $region36
      $region35: #{tpu_custom_call.1} parent=31 // pred_region
        %s206 = smul.u32 16, %s18
        %p207 = scmp.lt.s32.totalorder %s206, 31
        %s208 = scalar_select %p207, %s206, 31
        %s209 = smul.addr %s208, 4
        %s210 = scalar_lea.vmem %s0, %s209
        %s211 = smul.u32 16, %s18
      $region36: #{tpu_custom_call.1} parent=31 // pred_fallthru
        _
    $region32: #{tpu_custom_call.1} parent=5 // pred_fallthru
      _
    %p212 = scmp.le.s32.totalorder 1, %s11
    %p213 = scmp.lt.s32.totalorder %s11, 3
    %p214 = pnand %p212, %p213
    %p215 = pneg %p214
    // Predicated region
    $region37: #{tpu_custom_call.1} parent=5 // pred_check
      _
    $region38: #{tpu_custom_call.1} parent=5 // pred_check_branch
      %217 = sbr.rel (%p214) target = $region40
    $region39: #{tpu_custom_call.1} parent=5 // pred_region
      %s218 = ssub.s32 %s11, 1
      %s219 = smul.u32 16, %s20
      %p220 = scmp.lt.s32.totalorder %s219, 31
      %s221 = scalar_select %p220, %s219, 31
      %s222 = smul.addr %s221, 4
      %s223 = scalar_lea.vmem %s0, %s222
      %p224 = pneg %p49
      %p225 = pneg %p46
      %s226 = smul.u32 2, %s21
      %p227 = scmp.lt.s32.totalorder %s226, 1
      %s228 = scalar_select %p227, %s226, 1
      %s229 = smul.addr %s228, 4
      %s230 = scalar_lea.vmem %s1, %s229
      %p231 = pneg %p75
      %p232 = pneg %p72
      %p233 = pneg %p96
      %p234 = pneg %p93
      %p235 = pneg %p117
      %p236 = pneg %p114
      %p237 = pneg %p138
      %p238 = pneg %p135
      %p239 = pneg %p166
      %p240 = pneg %p163
      %s241 = smul.u32 16, %s20
      %p242 = scmp.lt.s32.totalorder %s241, 31
      %s243 = scalar_select %p242, %s241, 31
      %p244 = scmp.lt.s32.totalorder %s21, 0
      %s245 = scalar_select %p244, %s21, 0
      %s246 = sadd.s32 %s245, %s243
      %s247 = smul.addr %s246, 8
      %s248 = scalar_lea.vmem %s5, %s247
      %s249 = smul.u32 16, %s20
      %p250 = scmp.lt.s32.totalorder %s249, 31
      %s251 = scalar_select %p250, %s249, 31
      %s252 = smul.addr %s251, 4
      %s253 = scalar_lea.vmem %s0, %s252
      %s254 = smul.u32 16, %s20
      %s255 = smul.u32 2, %s21
      %p256 = scmp.lt.s32.totalorder %s255, 1
      %s257 = scalar_select %p256, %s255, 1
      %s258 = smul.addr %s257, 4
      %s259 = scalar_lea.vmem %s1, %s258
      %s260 = smul.u32 2, %s21
      %s261 = smul.u32 16, %s20
      %p262 = scmp.lt.s32.totalorder %s261, 31
      %s263 = scalar_select %p262, %s261, 31
      %p264 = scmp.lt.s32.totalorder %s21, 0
      %s265 = scalar_select %p264, %s21, 0
      %s266 = sadd.s32 %s265, %s263
      %s267 = smul.addr %s266, 8
      %s268 = scalar_lea.vmem %s5, %s267
      %s269 = smul.u32 16, %s20
      %v271 = vld [vmem:[%s253] sm:$0xf]
      %v272 = vld [vmem:[%s253 + $0x4] sm:$0xf]
      %v273 = vld [vmem:[%s253 + $0x8] sm:$0xf]
      %v274 = vld [vmem:[%s253 + $0xc] sm:$0xf]
      %v275 = vld [vmem:[%s253 + $0x10] sm:$0xf]
      %v276 = vld [vmem:[%s253 + $0x14] sm:$0xf]
      %v277 = vld [vmem:[%s253 + $0x18] sm:$0xf]
      %v278 = vld [vmem:[%s253 + $0x1c] sm:$0xf]
      %v279 = vld [vmem:[%s253 + $0x20] sm:$0xf]
      %v280 = vld [vmem:[%s253 + $0x24] sm:$0xf]
      %v281 = vld [vmem:[%s253 + $0x28] sm:$0xf]
      %v282 = vld [vmem:[%s253 + $0x2c] sm:$0xf]
      %v283 = vld [vmem:[%s253 + $0x30] sm:$0xf]
      %v284 = vld [vmem:[%s253 + $0x34] sm:$0xf]
      %v285 = vld [vmem:[%s253 + $0x38] sm:$0xf]
      %v286 = vld [vmem:[%s253 + $0x3c] sm:$0xf]
      %v287 = vld [vmem:[%s2] sm:$0xf]
      %v288 = vld [vmem:[%s2 + $0x4] sm:$0xf]
      %v289 = vld [vmem:[%s2 + $0x8] sm:$0xf]
      %v290 = vld [vmem:[%s2 + $0xc] sm:$0xf]
      %v307 = vunpack.c.l.b16 %v271
      %v308 = vunpack.c.l.b16 %v272
      %v309 = vunpack.c.l.b16 %v273
      %v310 = vunpack.c.l.b16 %v274
      %v311 = vunpack.c.l.b16 %v275
      %v312 = vunpack.c.l.b16 %v276
      %v313 = vunpack.c.l.b16 %v277
      %v314 = vunpack.c.l.b16 %v278
      %v315 = vunpack.c.l.b16 %v279
      %v316 = vunpack.c.l.b16 %v280
      %v317 = vunpack.c.l.b16 %v281
      %v318 = vunpack.c.l.b16 %v282
      %v319 = vunpack.c.l.b16 %v283
      %v320 = vunpack.c.l.b16 %v284
      %v321 = vunpack.c.l.b16 %v285
      %v322 = vunpack.c.l.b16 %v286
      %v323 = vpack.c.b16 %v308, %v307
      %v324 = vpack.c.b16 %v310, %v309
      %v325 = vpack.c.b16 %v312, %v311
      %v326 = vpack.c.b16 %v314, %v313
      %v327 = vpack.c.b16 %v316, %v315
      %v328 = vpack.c.b16 %v318, %v317
      %v329 = vpack.c.b16 %v320, %v319
      %v330 = vpack.c.b16 %v322, %v321
      %v335 = vunpack.c.l.b16 %v287
      %v336 = vunpack.c.l.b16 %v288
      %v337 = vunpack.c.l.b16 %v289
      %v338 = vunpack.c.l.b16 %v290
      %v339 = vpack.c.b16 %v336, %v335
      %v340 = vpack.c.b16 %v338, %v337
      %vm343 = vcmask 261120
      %v345 = vsel %vm343, %v323, 0
      %v348 = vsel %vm343, %v324, 0
      %v351 = vsel %vm343, %v325, 0
      %v354 = vsel %vm343, %v326, 0
      %v357 = vsel %vm343, %v327, 0
      %v360 = vsel %vm343, %v328, 0
      %v363 = vsel %vm343, %v329, 0
      %v366 = vsel %vm343, %v330, 0
      %368 = vmatprep.subr.bf16.mxu0 0
      %369 = vmatpush1.bf16.msra.mxu0 0
      %370 = vmatprep.subr.bf16.mxu0 0
      %371 = vmatpush1.bf16.msra.mxu0 0
      %372 = vmatprep.subr.bf16.mxu0 0
      %373 = vmatpush1.bf16.msra.mxu0 0
      %374 = vmatprep.subr.bf16.mxu0 0
      %375 = vmatpush1.bf16.msra.mxu0 0
      %376 = vmatprep.subr.bf16.mxu0 0
      %377 = vmatpush1.bf16.msra.mxu0 0
      %378 = vmatprep.subr.bf16.mxu0 0
      %379 = vmatpush1.bf16.msra.mxu0 0
      %380 = vmatprep.subr.bf16.mxu0 0
      %381 = vmatpush1.bf16.msra.mxu0 %v340
      %382 = vmatprep.subr.bf16.mxu0 0
      %383 = vmatpush1.bf16.msra.mxu0 %v339
      %384 = vmatprep.subr.bf16.mxu0 0
      %385 = vmatpush2.bf16.msra.mxu0 0
      %386 = vmatprep.subr.bf16.mxu0 0
      %387 = vmatpush2.bf16.msra.mxu0 0
      %388 = vmatprep.subr.bf16.mxu0 0
      %389 = vmatpush2.bf16.msra.mxu0 0
      %390 = vmatprep.subr.bf16.mxu0 0
      %391 = vmatpush2.bf16.msra.mxu0 0
      %392 = vmatprep.subr.bf16.mxu0 0
      %393 = vmatpush2.bf16.msra.mxu0 0
      %394 = vmatprep.subr.bf16.mxu0 0
      %395 = vmatpush2.bf16.msra.mxu0 0
      %396 = vmatprep.subr.bf16.mxu0 0
      %397 = vmatpush2.bf16.msra.mxu0 0
      %398 = vmatprep.subr.bf16.mxu0 0
      %399 = vmatpush2.bf16.msra.mxu0 0
      %400 = vmatprep.mubr.bf16.mxu0 0
      %401 = vmatmul.mubr.bf16.gmra.mxu0 %v345
      %v402 = vpop.f32.mrf.mxu0
      %v403 = vadd.f32 0.0, %v402
      %v404 = vpop.f32.mrf.mxu0
      %v405 = vpop.f32.mrf.mxu0
      %v406 = vadd.f32 0.0, %v405
      %v407 = vpop.f32.mrf.mxu0
      %408 = vmatprep.mubr.bf16.mxu0 0
      %409 = vmatmul.mubr.bf16.gmra.mxu0 %v348
      %v410 = vpop.f32.mrf.mxu0
      %v411 = vadd.f32 0.0, %v410
      %v412 = vpop.f32.mrf.mxu0
      %v413 = vpop.f32.mrf.mxu0
      %v414 = vadd.f32 0.0, %v413
      %v415 = vpop.f32.mrf.mxu0
      %416 = vmatprep.mubr.bf16.mxu0 0
      %417 = vmatmul.mubr.bf16.gmra.mxu0 %v351
      %v418 = vpop.f32.mrf.mxu0
      %v419 = vadd.f32 0.0, %v418
      %v420 = vpop.f32.mrf.mxu0
      %v421 = vpop.f32.mrf.mxu0
      %v422 = vadd.f32 0.0, %v421
      %v423 = vpop.f32.mrf.mxu0
      %424 = vmatprep.mubr.bf16.mxu0 0
      %425 = vmatmul.mubr.bf16.gmra.mxu0 %v354
      %v426 = vpop.f32.mrf.mxu0
      %v427 = vadd.f32 0.0, %v426
      %v428 = vpop.f32.mrf.mxu0
      %v429 = vpop.f32.mrf.mxu0
      %v430 = vadd.f32 0.0, %v429
      %v431 = vpop.f32.mrf.mxu0
      %432 = vmatprep.mubr.bf16.mxu0 0
      %433 = vmatmul.mubr.bf16.gmra.mxu0 %v357
      %v434 = vpop.f32.mrf.mxu0
      %v435 = vadd.f32 0.0, %v434
      %v436 = vpop.f32.mrf.mxu0
      %v437 = vpop.f32.mrf.mxu0
      %v438 = vadd.f32 0.0, %v437
      %v439 = vpop.f32.mrf.mxu0
      %440 = vmatprep.mubr.bf16.mxu0 0
      %441 = vmatmul.mubr.bf16.gmra.mxu0 %v360
      %v442 = vpop.f32.mrf.mxu0
      %v443 = vadd.f32 0.0, %v442
      %v444 = vpop.f32.mrf.mxu0
      %v445 = vpop.f32.mrf.mxu0
      %v446 = vadd.f32 0.0, %v445
      %v447 = vpop.f32.mrf.mxu0
      %448 = vmatprep.mubr.bf16.mxu0 0
      %449 = vmatmul.mubr.bf16.gmra.mxu0 %v363
      %v450 = vpop.f32.mrf.mxu0
      %v451 = vadd.f32 0.0, %v450
      %v452 = vpop.f32.mrf.mxu0
      %v453 = vpop.f32.mrf.mxu0
      %v454 = vadd.f32 0.0, %v453
      %v455 = vpop.f32.mrf.mxu0
      %456 = vmatprep.mubr.bf16.mxu0 0
      %457 = vmatmul.mubr.bf16.gmra.mxu0 %v366
      %v458 = vpop.f32.mrf.mxu0
      %v459 = vadd.f32 0.0, %v458
      %v460 = vpop.f32.mrf.mxu0
      %v461 = vpop.f32.mrf.mxu0
      %v462 = vadd.f32 0.0, %v461
      %v463 = vpop.f32.mrf.mxu0
      %464 = vdwg.mxu0
      %v465 = vpack.c.bf16 %v406, %v403
      %v466 = vpack.c.bf16 %v414, %v411
      %v467 = vpack.c.bf16 %v422, %v419
      %v468 = vpack.c.bf16 %v430, %v427
      %v469 = vpack.c.bf16 %v438, %v435
      %v470 = vpack.c.bf16 %v446, %v443
      %v471 = vpack.c.bf16 %v454, %v451
      %v472 = vpack.c.bf16 %v462, %v459
      %v481 = vcombine.high %v465, %v465
      %v483 = vunpack.c.l.s4 1966171168
      %v484 = vunpack.c.0.s8 %v483
      %v485 = vlaneseq
      %v486 = vshrl.u32 %v485, 7
      %v487 = vsub.s32 %v484, %v486
      %v488 = vrot.slane %v465, %v487
      %v490 = vunpack.c.l.s4 1966171168
      %v491 = vunpack.c.0.s8 %v490
      %v492 = vlaneseq
      %v493 = vshrl.u32 %v492, 7
      %v494 = vsub.s32 %v491, %v493
      %v495 = vrot.slane %v481, %v494
      %v496 = vcombine.high %v488, %v488
      %v497 = vcombine.high %v495, %v495
      %v499 = vunpack.c.l.s4 1966171168
      %v500 = vunpack.c.0.s8 %v499
      %v501 = vlaneseq
      %v502 = vshrl.u32 %v501, 7
      %v503 = vsub.s32 %v500, %v502
      %v504 = vrot.slane %v488, %v503
      %v506 = vunpack.c.l.s4 1966171168
      %v507 = vunpack.c.0.s8 %v506
      %v508 = vlaneseq
      %v509 = vshrl.u32 %v508, 7
      %v510 = vsub.s32 %v507, %v509
      %v511 = vrot.slane %v495, %v510
      %v513 = vunpack.c.l.s4 1966171168
      %v514 = vunpack.c.0.s8 %v513
      %v515 = vlaneseq
      %v516 = vshrl.u32 %v515, 7
      %v517 = vsub.s32 %v514, %v516
      %v518 = vrot.slane %v496, %v517
      %v520 = vunpack.c.l.s4 1966171168
      %v521 = vunpack.c.0.s8 %v520
      %v522 = vlaneseq
      %v523 = vshrl.u32 %v522, 7
      %v524 = vsub.s32 %v521, %v523
      %v525 = vrot.slane %v497, %v524
      %v526 = vcombine.high %v504, %v504
      %v527 = vcombine.high %v511, %v511
      %v528 = vcombine.high %v518, %v518
      %v529 = vcombine.high %v525, %v525
      %v530 = vcombine.high %v466, %v466
      %v532 = vunpack.c.l.s4 1966171168
      %v533 = vunpack.c.0.s8 %v532
      %v534 = vlaneseq
      %v535 = vshrl.u32 %v534, 7
      %v536 = vsub.s32 %v533, %v535
      %v537 = vrot.slane %v466, %v536
      %v539 = vunpack.c.l.s4 1966171168
      %v540 = vunpack.c.0.s8 %v539
      %v541 = vlaneseq
      %v542 = vshrl.u32 %v541, 7
      %v543 = vsub.s32 %v540, %v542
      %v544 = vrot.slane %v530, %v543
      %v545 = vcombine.high %v537, %v537
      %v546 = vcombine.high %v544, %v544
      %v548 = vunpack.c.l.s4 1966171168
      %v549 = vunpack.c.0.s8 %v548
      %v550 = vlaneseq
      %v551 = vshrl.u32 %v550, 7
      %v552 = vsub.s32 %v549, %v551
      %v553 = vrot.slane %v537, %v552
      %v555 = vunpack.c.l.s4 1966171168
      %v556 = vunpack.c.0.s8 %v555
      %v557 = vlaneseq
      %v558 = vshrl.u32 %v557, 7
      %v559 = vsub.s32 %v556, %v558
      %v560 = vrot.slane %v544, %v559
      %v562 = vunpack.c.l.s4 1966171168
      %v563 = vunpack.c.0.s8 %v562
      %v564 = vlaneseq
      %v565 = vshrl.u32 %v564, 7
      %v566 = vsub.s32 %v563, %v565
      %v567 = vrot.slane %v545, %v566
      %v569 = vunpack.c.l.s4 1966171168
      %v570 = vunpack.c.0.s8 %v569
      %v571 = vlaneseq
      %v572 = vshrl.u32 %v571, 7
      %v573 = vsub.s32 %v570, %v572
      %v574 = vrot.slane %v546, %v573
      %v575 = vcombine.high %v553, %v553
      %v576 = vcombine.high %v560, %v560
      %v577 = vcombine.high %v567, %v567
      %v578 = vcombine.high %v574, %v574
      %v579 = vcombine.high %v467, %v467
      %v581 = vunpack.c.l.s4 1966171168
      %v582 = vunpack.c.0.s8 %v581
      %v583 = vlaneseq
      %v584 = vshrl.u32 %v583, 7
      %v585 = vsub.s32 %v582, %v584
      %v586 = vrot.slane %v467, %v585
      %v588 = vunpack.c.l.s4 1966171168
      %v589 = vunpack.c.0.s8 %v588
      %v590 = vlaneseq
      %v591 = vshrl.u32 %v590, 7
      %v592 = vsub.s32 %v589, %v591
      %v593 = vrot.slane %v579, %v592
      %v594 = vcombine.high %v586, %v586
      %v595 = vcombine.high %v593, %v593
      %v597 = vunpack.c.l.s4 1966171168
      %v598 = vunpack.c.0.s8 %v597
      %v599 = vlaneseq
      %v600 = vshrl.u32 %v599, 7
      %v601 = vsub.s32 %v598, %v600
      %v602 = vrot.slane %v586, %v601
      %v604 = vunpack.c.l.s4 1966171168
      %v605 = vunpack.c.0.s8 %v604
      %v606 = vlaneseq
      %v607 = vshrl.u32 %v606, 7
      %v608 = vsub.s32 %v605, %v607
      %v609 = vrot.slane %v593, %v608
      %v611 = vunpack.c.l.s4 1966171168
      %v612 = vunpack.c.0.s8 %v611
      %v613 = vlaneseq
      %v614 = vshrl.u32 %v613, 7
      %v615 = vsub.s32 %v612, %v614
      %v616 = vrot.slane %v594, %v615
      %v618 = vunpack.c.l.s4 1966171168
      %v619 = vunpack.c.0.s8 %v618
      %v620 = vlaneseq
      %v621 = vshrl.u32 %v620, 7
      %v622 = vsub.s32 %v619, %v621
      %v623 = vrot.slane %v595, %v622
      %v624 = vcombine.high %v602, %v602
      %v625 = vcombine.high %v609, %v609
      %v626 = vcombine.high %v616, %v616
      %v627 = vcombine.high %v623, %v623
      %v628 = vcombine.high %v468, %v468
      %v630 = vunpack.c.l.s4 1966171168
      %v631 = vunpack.c.0.s8 %v630
      %v632 = vlaneseq
      %v633 = vshrl.u32 %v632, 7
      %v634 = vsub.s32 %v631, %v633
      %v635 = vrot.slane %v468, %v634
      %v637 = vunpack.c.l.s4 1966171168
      %v638 = vunpack.c.0.s8 %v637
      %v639 = vlaneseq
      %v640 = vshrl.u32 %v639, 7
      %v641 = vsub.s32 %v638, %v640
      %v642 = vrot.slane %v628, %v641
      %v643 = vcombine.high %v635, %v635
      %v644 = vcombine.high %v642, %v642
      %v646 = vunpack.c.l.s4 1966171168
      %v647 = vunpack.c.0.s8 %v646
      %v648 = vlaneseq
      %v649 = vshrl.u32 %v648, 7
      %v650 = vsub.s32 %v647, %v649
      %v651 = vrot.slane %v635, %v650
      %v653 = vunpack.c.l.s4 1966171168
      %v654 = vunpack.c.0.s8 %v653
      %v655 = vlaneseq
      %v656 = vshrl.u32 %v655, 7
      %v657 = vsub.s32 %v654, %v656
      %v658 = vrot.slane %v642, %v657
      %v660 = vunpack.c.l.s4 1966171168
      %v661 = vunpack.c.0.s8 %v660
      %v662 = vlaneseq
      %v663 = vshrl.u32 %v662, 7
      %v664 = vsub.s32 %v661, %v663
      %v665 = vrot.slane %v643, %v664
      %v667 = vunpack.c.l.s4 1966171168
      %v668 = vunpack.c.0.s8 %v667
      %v669 = vlaneseq
      %v670 = vshrl.u32 %v669, 7
      %v671 = vsub.s32 %v668, %v670
      %v672 = vrot.slane %v644, %v671
      %v673 = vcombine.high %v651, %v651
      %v674 = vcombine.high %v658, %v658
      %v675 = vcombine.high %v665, %v665
      %v676 = vcombine.high %v672, %v672
      %v677 = vcombine.high %v469, %v469
      %v679 = vunpack.c.l.s4 1966171168
      %v680 = vunpack.c.0.s8 %v679
      %v681 = vlaneseq
      %v682 = vshrl.u32 %v681, 7
      %v683 = vsub.s32 %v680, %v682
      %v684 = vrot.slane %v469, %v683
      %v686 = vunpack.c.l.s4 1966171168
      %v687 = vunpack.c.0.s8 %v686
      %v688 = vlaneseq
      %v689 = vshrl.u32 %v688, 7
      %v690 = vsub.s32 %v687, %v689
      %v691 = vrot.slane %v677, %v690
      %v692 = vcombine.high %v684, %v684
      %v693 = vcombine.high %v691, %v691
      %v695 = vunpack.c.l.s4 1966171168
      %v696 = vunpack.c.0.s8 %v695
      %v697 = vlaneseq
      %v698 = vshrl.u32 %v697, 7
      %v699 = vsub.s32 %v696, %v698
      %v700 = vrot.slane %v684, %v699
      %v702 = vunpack.c.l.s4 1966171168
      %v703 = vunpack.c.0.s8 %v702
      %v704 = vlaneseq
      %v705 = vshrl.u32 %v704, 7
      %v706 = vsub.s32 %v703, %v705
      %v707 = vrot.slane %v691, %v706
      %v709 = vunpack.c.l.s4 1966171168
      %v710 = vunpack.c.0.s8 %v709
      %v711 = vlaneseq
      %v712 = vshrl.u32 %v711, 7
      %v713 = vsub.s32 %v710, %v712
      %v714 = vrot.slane %v692, %v713
      %v716 = vunpack.c.l.s4 1966171168
      %v717 = vunpack.c.0.s8 %v716
      %v718 = vlaneseq
      %v719 = vshrl.u32 %v718, 7
      %v720 = vsub.s32 %v717, %v719
      %v721 = vrot.slane %v693, %v720
      %v722 = vcombine.high %v700, %v700
      %v723 = vcombine.high %v707, %v707
      %v724 = vcombine.high %v714, %v714
      %v725 = vcombine.high %v721, %v721
      %v726 = vcombine.high %v470, %v470
      %v728 = vunpack.c.l.s4 1966171168
      %v729 = vunpack.c.0.s8 %v728
      %v730 = vlaneseq
      %v731 = vshrl.u32 %v730, 7
      %v732 = vsub.s32 %v729, %v731
      %v733 = vrot.slane %v470, %v732
      %v735 = vunpack.c.l.s4 1966171168
      %v736 = vunpack.c.0.s8 %v735
      %v737 = vlaneseq
      %v738 = vshrl.u32 %v737, 7
      %v739 = vsub.s32 %v736, %v738
      %v740 = vrot.slane %v726, %v739
      %v741 = vcombine.high %v733, %v733
      %v742 = vcombine.high %v740, %v740
      %v744 = vunpack.c.l.s4 1966171168
      %v745 = vunpack.c.0.s8 %v744
      %v746 = vlaneseq
      %v747 = vshrl.u32 %v746, 7
      %v748 = vsub.s32 %v745, %v747
      %v749 = vrot.slane %v733, %v748
      %v751 = vunpack.c.l.s4 1966171168
      %v752 = vunpack.c.0.s8 %v751
      %v753 = vlaneseq
      %v754 = vshrl.u32 %v753, 7
      %v755 = vsub.s32 %v752, %v754
      %v756 = vrot.slane %v740, %v755
      %v758 = vunpack.c.l.s4 1966171168
      %v759 = vunpack.c.0.s8 %v758
      %v760 = vlaneseq
      %v761 = vshrl.u32 %v760, 7
      %v762 = vsub.s32 %v759, %v761
      %v763 = vrot.slane %v741, %v762
      %v765 = vunpack.c.l.s4 1966171168
      %v766 = vunpack.c.0.s8 %v765
      %v767 = vlaneseq
      %v768 = vshrl.u32 %v767, 7
      %v769 = vsub.s32 %v766, %v768
      %v770 = vrot.slane %v742, %v769
      %v771 = vcombine.high %v749, %v749
      %v772 = vcombine.high %v756, %v756
      %v773 = vcombine.high %v763, %v763
      %v774 = vcombine.high %v770, %v770
      %v775 = vcombine.high %v471, %v471
      %v777 = vunpack.c.l.s4 1966171168
      %v778 = vunpack.c.0.s8 %v777
      %v779 = vlaneseq
      %v780 = vshrl.u32 %v779, 7
      %v781 = vsub.s32 %v778, %v780
      %v782 = vrot.slane %v471, %v781
      %v784 = vunpack.c.l.s4 1966171168
      %v785 = vunpack.c.0.s8 %v784
      %v786 = vlaneseq
      %v787 = vshrl.u32 %v786, 7
      %v788 = vsub.s32 %v785, %v787
      %v789 = vrot.slane %v775, %v788
      %v790 = vcombine.high %v782, %v782
      %v791 = vcombine.high %v789, %v789
      %v793 = vunpack.c.l.s4 1966171168
      %v794 = vunpack.c.0.s8 %v793
      %v795 = vlaneseq
      %v796 = vshrl.u32 %v795, 7
      %v797 = vsub.s32 %v794, %v796
      %v798 = vrot.slane %v782, %v797
      %v800 = vunpack.c.l.s4 1966171168
      %v801 = vunpack.c.0.s8 %v800
      %v802 = vlaneseq
      %v803 = vshrl.u32 %v802, 7
      %v804 = vsub.s32 %v801, %v803
      %v805 = vrot.slane %v789, %v804
      %v807 = vunpack.c.l.s4 1966171168
      %v808 = vunpack.c.0.s8 %v807
      %v809 = vlaneseq
      %v810 = vshrl.u32 %v809, 7
      %v811 = vsub.s32 %v808, %v810
      %v812 = vrot.slane %v790, %v811
      %v814 = vunpack.c.l.s4 1966171168
      %v815 = vunpack.c.0.s8 %v814
      %v816 = vlaneseq
      %v817 = vshrl.u32 %v816, 7
      %v818 = vsub.s32 %v815, %v817
      %v819 = vrot.slane %v791, %v818
      %v820 = vcombine.high %v798, %v798
      %v821 = vcombine.high %v805, %v805
      %v822 = vcombine.high %v812, %v812
      %v823 = vcombine.high %v819, %v819
      %v824 = vcombine.high %v472, %v472
      %v826 = vunpack.c.l.s4 1966171168
      %v827 = vunpack.c.0.s8 %v826
      %v828 = vlaneseq
      %v829 = vshrl.u32 %v828, 7
      %v830 = vsub.s32 %v827, %v829
      %v831 = vrot.slane %v472, %v830
      %v833 = vunpack.c.l.s4 1966171168
      %v834 = vunpack.c.0.s8 %v833
      %v835 = vlaneseq
      %v836 = vshrl.u32 %v835, 7
      %v837 = vsub.s32 %v834, %v836
      %v838 = vrot.slane %v824, %v837
      %v839 = vcombine.high %v831, %v831
      %v840 = vcombine.high %v838, %v838
      %v842 = vunpack.c.l.s4 1966171168
      %v843 = vunpack.c.0.s8 %v842
      %v844 = vlaneseq
      %v845 = vshrl.u32 %v844, 7
      %v846 = vsub.s32 %v843, %v845
      %v847 = vrot.slane %v831, %v846
      %v849 = vunpack.c.l.s4 1966171168
      %v850 = vunpack.c.0.s8 %v849
      %v851 = vlaneseq
      %v852 = vshrl.u32 %v851, 7
      %v853 = vsub.s32 %v850, %v852
      %v854 = vrot.slane %v838, %v853
      %v856 = vunpack.c.l.s4 1966171168
      %v857 = vunpack.c.0.s8 %v856
      %v858 = vlaneseq
      %v859 = vshrl.u32 %v858, 7
      %v860 = vsub.s32 %v857, %v859
      %v861 = vrot.slane %v839, %v860
      %v863 = vunpack.c.l.s4 1966171168
      %v864 = vunpack.c.0.s8 %v863
      %v865 = vlaneseq
      %v866 = vshrl.u32 %v865, 7
      %v867 = vsub.s32 %v864, %v866
      %v868 = vrot.slane %v840, %v867
      %v869 = vcombine.high %v847, %v847
      %v870 = vcombine.high %v854, %v854
      %v871 = vcombine.high %v861, %v861
      %v872 = vcombine.high %v868, %v868
      %v873 = vunpack.i.l.s16 %v504
      %v874 = vunpack.i.h.s16 %v504
      %v875 = vunpack.i.l.s16 %v518
      %v876 = vunpack.i.h.s16 %v518
      %v877 = vunpack.i.l.s16 %v526
      %v878 = vunpack.i.h.s16 %v526
      %v879 = vunpack.i.l.s16 %v528
      %v880 = vunpack.i.h.s16 %v528
      %v881 = vunpack.i.l.s16 %v511
      %v882 = vunpack.i.h.s16 %v511
      %v883 = vunpack.i.l.s16 %v525
      %v884 = vunpack.i.h.s16 %v525
      %v885 = vunpack.i.l.s16 %v527
      %v886 = vunpack.i.h.s16 %v527
      %v887 = vunpack.i.l.s16 %v529
      %v888 = vunpack.i.h.s16 %v529
      %v889 = vunpack.i.l.s16 %v553
      %v890 = vunpack.i.h.s16 %v553
      %v891 = vunpack.i.l.s16 %v567
      %v892 = vunpack.i.h.s16 %v567
      %v893 = vunpack.i.l.s16 %v575
      %v894 = vunpack.i.h.s16 %v575
      %v895 = vunpack.i.l.s16 %v577
      %v896 = vunpack.i.h.s16 %v577
      %v897 = vunpack.i.l.s16 %v560
      %v898 = vunpack.i.h.s16 %v560
      %v899 = vunpack.i.l.s16 %v574
      %v900 = vunpack.i.h.s16 %v574
      %v901 = vunpack.i.l.s16 %v576
      %v902 = vunpack.i.h.s16 %v576
      %v903 = vunpack.i.l.s16 %v578
      %v904 = vunpack.i.h.s16 %v578
      %v905 = vunpack.i.l.s16 %v602
      %v906 = vunpack.i.h.s16 %v602
      %v907 = vunpack.i.l.s16 %v616
      %v908 = vunpack.i.h.s16 %v616
      %v909 = vunpack.i.l.s16 %v624
      %v910 = vunpack.i.h.s16 %v624
      %v911 = vunpack.i.l.s16 %v626
      %v912 = vunpack.i.h.s16 %v626
      %v913 = vunpack.i.l.s16 %v609
      %v914 = vunpack.i.h.s16 %v609
      %v915 = vunpack.i.l.s16 %v623
      %v916 = vunpack.i.h.s16 %v623
      %v917 = vunpack.i.l.s16 %v625
      %v918 = vunpack.i.h.s16 %v625
      %v919 = vunpack.i.l.s16 %v627
      %v920 = vunpack.i.h.s16 %v627
      %v921 = vunpack.i.l.s16 %v651
      %v922 = vunpack.i.h.s16 %v651
      %v923 = vunpack.i.l.s16 %v665
      %v924 = vunpack.i.h.s16 %v665
      %v925 = vunpack.i.l.s16 %v673
      %v926 = vunpack.i.h.s16 %v673
      %v927 = vunpack.i.l.s16 %v675
      %v928 = vunpack.i.h.s16 %v675
      %v929 = vunpack.i.l.s16 %v658
      %v930 = vunpack.i.h.s16 %v658
      %v931 = vunpack.i.l.s16 %v672
      %v932 = vunpack.i.h.s16 %v672
      %v933 = vunpack.i.l.s16 %v674
      %v934 = vunpack.i.h.s16 %v674
      %v935 = vunpack.i.l.s16 %v676
      %v936 = vunpack.i.h.s16 %v676
      %v937 = vunpack.i.l.s16 %v700
      %v938 = vunpack.i.h.s16 %v700
      %v939 = vunpack.i.l.s16 %v714
      %v940 = vunpack.i.h.s16 %v714
      %v941 = vunpack.i.l.s16 %v722
      %v942 = vunpack.i.h.s16 %v722
      %v943 = vunpack.i.l.s16 %v724
      %v944 = vunpack.i.h.s16 %v724
      %v945 = vunpack.i.l.s16 %v707
      %v946 = vunpack.i.h.s16 %v707
      %v947 = vunpack.i.l.s16 %v721
      %v948 = vunpack.i.h.s16 %v721
      %v949 = vunpack.i.l.s16 %v723
      %v950 = vunpack.i.h.s16 %v723
      %v951 = vunpack.i.l.s16 %v725
      %v952 = vunpack.i.h.s16 %v725
      %v953 = vunpack.i.l.s16 %v749
      %v954 = vunpack.i.h.s16 %v749
      %v955 = vunpack.i.l.s16 %v763
      %v956 = vunpack.i.h.s16 %v763
      %v957 = vunpack.i.l.s16 %v771
      %v958 = vunpack.i.h.s16 %v771
      %v959 = vunpack.i.l.s16 %v773
      %v960 = vunpack.i.h.s16 %v773
      %v961 = vunpack.i.l.s16 %v756
      %v962 = vunpack.i.h.s16 %v756
      %v963 = vunpack.i.l.s16 %v770
      %v964 = vunpack.i.h.s16 %v770
      %v965 = vunpack.i.l.s16 %v772
      %v966 = vunpack.i.h.s16 %v772
      %v967 = vunpack.i.l.s16 %v774
      %v968 = vunpack.i.h.s16 %v774
      %v969 = vunpack.i.l.s16 %v798
      %v970 = vunpack.i.h.s16 %v798
      %v971 = vunpack.i.l.s16 %v812
      %v972 = vunpack.i.h.s16 %v812
      %v973 = vunpack.i.l.s16 %v820
      %v974 = vunpack.i.h.s16 %v820
      %v975 = vunpack.i.l.s16 %v822
      %v976 = vunpack.i.h.s16 %v822
      %v977 = vunpack.i.l.s16 %v805
      %v978 = vunpack.i.h.s16 %v805
      %v979 = vunpack.i.l.s16 %v819
      %v980 = vunpack.i.h.s16 %v819
      %v981 = vunpack.i.l.s16 %v821
      %v982 = vunpack.i.h.s16 %v821
      %v983 = vunpack.i.l.s16 %v823
      %v984 = vunpack.i.h.s16 %v823
      %v985 = vunpack.i.l.s16 %v847
      %v986 = vunpack.i.h.s16 %v847
      %v987 = vunpack.i.l.s16 %v861
      %v988 = vunpack.i.h.s16 %v861
      %v989 = vunpack.i.l.s16 %v869
      %v990 = vunpack.i.h.s16 %v869
      %v991 = vunpack.i.l.s16 %v871
      %v992 = vunpack.i.h.s16 %v871
      %v993 = vunpack.i.l.s16 %v854
      %v994 = vunpack.i.h.s16 %v854
      %v995 = vunpack.i.l.s16 %v868
      %v996 = vunpack.i.h.s16 %v868
      %v997 = vunpack.i.l.s16 %v870
      %v998 = vunpack.i.h.s16 %v870
      %v999 = vunpack.i.l.s16 %v872
      %v1000 = vunpack.i.h.s16 %v872
      %v1001 = vld [vmem:[%s259] sm:$0xf]
      %v1002 = vld [vmem:[%s259 + $0x4] sm:$0xf]
      %v1003 = vpack.i.b16 %v873, %v873
      %v1004 = vpack.i.b16 %v874, %v874
      %v1005 = vpack.i.b16 %v875, %v875
      %v1006 = vpack.i.b16 %v876, %v876
      %v1007 = vpack.i.b16 %v877, %v877
      %v1008 = vpack.i.b16 %v878, %v878
      %v1009 = vpack.i.b16 %v879, %v879
      %v1010 = vpack.i.b16 %v880, %v880
      %v1011 = vpack.i.b16 %v881, %v881
      %v1012 = vpack.i.b16 %v882, %v882
      %v1013 = vpack.i.b16 %v883, %v883
      %v1014 = vpack.i.b16 %v884, %v884
      %v1015 = vpack.i.b16 %v885, %v885
      %v1016 = vpack.i.b16 %v886, %v886
      %v1017 = vpack.i.b16 %v887, %v887
      %v1018 = vpack.i.b16 %v888, %v888
      %v1019 = vpack.i.b16 %v889, %v889
      %v1020 = vpack.i.b16 %v890, %v890
      %v1021 = vpack.i.b16 %v891, %v891
      %v1022 = vpack.i.b16 %v892, %v892
      %v1023 = vpack.i.b16 %v893, %v893
      %v1024 = vpack.i.b16 %v894, %v894
      %v1025 = vpack.i.b16 %v895, %v895
      %v1026 = vpack.i.b16 %v896, %v896
      %v1027 = vpack.i.b16 %v897, %v897
      %v1028 = vpack.i.b16 %v898, %v898
      %v1029 = vpack.i.b16 %v899, %v899
      %v1030 = vpack.i.b16 %v900, %v900
      %v1031 = vpack.i.b16 %v901, %v901
      %v1032 = vpack.i.b16 %v902, %v902
      %v1033 = vpack.i.b16 %v903, %v903
      %v1034 = vpack.i.b16 %v904, %v904
      %v1035 = vpack.i.b16 %v905, %v905
      %v1036 = vpack.i.b16 %v906, %v906
      %v1037 = vpack.i.b16 %v907, %v907
      %v1038 = vpack.i.b16 %v908, %v908
      %v1039 = vpack.i.b16 %v909, %v909
      %v1040 = vpack.i.b16 %v910, %v910
      %v1041 = vpack.i.b16 %v911, %v911
      %v1042 = vpack.i.b16 %v912, %v912
      %v1043 = vpack.i.b16 %v913, %v913
      %v1044 = vpack.i.b16 %v914, %v914
      %v1045 = vpack.i.b16 %v915, %v915
      %v1046 = vpack.i.b16 %v916, %v916
      %v1047 = vpack.i.b16 %v917, %v917
      %v1048 = vpack.i.b16 %v918, %v918
      %v1049 = vpack.i.b16 %v919, %v919
      %v1050 = vpack.i.b16 %v920, %v920
      %v1051 = vpack.i.b16 %v921, %v921
      %v1052 = vpack.i.b16 %v922, %v922
      %v1053 = vpack.i.b16 %v923, %v923
      %v1054 = vpack.i.b16 %v924, %v924
      %v1055 = vpack.i.b16 %v925, %v925
      %v1056 = vpack.i.b16 %v926, %v926
      %v1057 = vpack.i.b16 %v927, %v927
      %v1058 = vpack.i.b16 %v928, %v928
      %v1059 = vpack.i.b16 %v929, %v929
      %v1060 = vpack.i.b16 %v930, %v930
      %v1061 = vpack.i.b16 %v931, %v931
      %v1062 = vpack.i.b16 %v932, %v932
      %v1063 = vpack.i.b16 %v933, %v933
      %v1064 = vpack.i.b16 %v934, %v934
      %v1065 = vpack.i.b16 %v935, %v935
      %v1066 = vpack.i.b16 %v936, %v936
      %v1067 = vpack.i.b16 %v937, %v937
      %v1068 = vpack.i.b16 %v938, %v938
      %v1069 = vpack.i.b16 %v939, %v939
      %v1070 = vpack.i.b16 %v940, %v940
      %v1071 = vpack.i.b16 %v941, %v941
      %v1072 = vpack.i.b16 %v942, %v942
      %v1073 = vpack.i.b16 %v943, %v943
      %v1074 = vpack.i.b16 %v944, %v944
      %v1075 = vpack.i.b16 %v945, %v945
      %v1076 = vpack.i.b16 %v946, %v946
      %v1077 = vpack.i.b16 %v947, %v947
      %v1078 = vpack.i.b16 %v948, %v948
      %v1079 = vpack.i.b16 %v949, %v949
      %v1080 = vpack.i.b16 %v950, %v950
      %v1081 = vpack.i.b16 %v951, %v951
      %v1082 = vpack.i.b16 %v952, %v952
      %v1083 = vpack.i.b16 %v953, %v953
      %v1084 = vpack.i.b16 %v954, %v954
      %v1085 = vpack.i.b16 %v955, %v955
      %v1086 = vpack.i.b16 %v956, %v956
      %v1087 = vpack.i.b16 %v957, %v957
      %v1088 = vpack.i.b16 %v958, %v958
      %v1089 = vpack.i.b16 %v959, %v959
      %v1090 = vpack.i.b16 %v960, %v960
      %v1091 = vpack.i.b16 %v961, %v961
      %v1092 = vpack.i.b16 %v962, %v962
      %v1093 = vpack.i.b16 %v963, %v963
      %v1094 = vpack.i.b16 %v964, %v964
      %v1095 = vpack.i.b16 %v965, %v965
      %v1096 = vpack.i.b16 %v966, %v966
      %v1097 = vpack.i.b16 %v967, %v967
      %v1098 = vpack.i.b16 %v968, %v968
      %v1099 = vpack.i.b16 %v969, %v969
      %v1100 = vpack.i.b16 %v970, %v970
      %v1101 = vpack.i.b16 %v971, %v971
      %v1102 = vpack.i.b16 %v972, %v972
      %v1103 = vpack.i.b16 %v973, %v973
      %v1104 = vpack.i.b16 %v974, %v974
      %v1105 = vpack.i.b16 %v975, %v975
      %v1106 = vpack.i.b16 %v976, %v976
      %v1107 = vpack.i.b16 %v977, %v977
      %v1108 = vpack.i.b16 %v978, %v978
      %v1109 = vpack.i.b16 %v979, %v979
      %v1110 = vpack.i.b16 %v980, %v980
      %v1111 = vpack.i.b16 %v981, %v981
      %v1112 = vpack.i.b16 %v982, %v982
      %v1113 = vpack.i.b16 %v983, %v983
      %v1114 = vpack.i.b16 %v984, %v984
      %v1115 = vpack.i.b16 %v985, %v985
      %v1116 = vpack.i.b16 %v986, %v986
      %v1117 = vpack.i.b16 %v987, %v987
      %v1118 = vpack.i.b16 %v988, %v988
      %v1119 = vpack.i.b16 %v989, %v989
      %v1120 = vpack.i.b16 %v990, %v990
      %v1121 = vpack.i.b16 %v991, %v991
      %v1122 = vpack.i.b16 %v992, %v992
      %v1123 = vpack.i.b16 %v993, %v993
      %v1124 = vpack.i.b16 %v994, %v994
      %v1125 = vpack.i.b16 %v995, %v995
      %v1126 = vpack.i.b16 %v996, %v996
      %v1127 = vpack.i.b16 %v997, %v997
      %v1128 = vpack.i.b16 %v998, %v998
      %v1129 = vpack.i.b16 %v999, %v999
      %v1130 = vpack.i.b16 %v1000, %v1000
      %v1131 = vlaneseq
      %v1132 = vshrl.u32 %v1131, 7
      %v1133 = vsub.s32 0, %v1132
      %v1134 = vrot.slane %v1003, %v1133
      %v1135 = vlaneseq
      %v1136 = vshrl.u32 %v1135, 7
      %v1137 = vsub.s32 0, %v1136
      %v1138 = vrot.slane %v1004, %v1137
      %v1139 = vlaneseq
      %v1140 = vshrl.u32 %v1139, 7
      %v1141 = vsub.s32 0, %v1140
      %v1142 = vrot.slane %v1005, %v1141
      %v1143 = vlaneseq
      %v1144 = vshrl.u32 %v1143, 7
      %v1145 = vsub.s32 0, %v1144
      %v1146 = vrot.slane %v1006, %v1145
      %v1147 = vlaneseq
      %v1148 = vshrl.u32 %v1147, 7
      %v1149 = vsub.s32 0, %v1148
      %v1150 = vrot.slane %v1007, %v1149
      %v1151 = vlaneseq
      %v1152 = vshrl.u32 %v1151, 7
      %v1153 = vsub.s32 0, %v1152
      %v1154 = vrot.slane %v1008, %v1153
      %v1155 = vlaneseq
      %v1156 = vshrl.u32 %v1155, 7
      %v1157 = vsub.s32 0, %v1156
      %v1158 = vrot.slane %v1009, %v1157
      %v1159 = vlaneseq
      %v1160 = vshrl.u32 %v1159, 7
      %v1161 = vsub.s32 0, %v1160
      %v1162 = vrot.slane %v1010, %v1161
      %v1163 = vlaneseq
      %v1164 = vshrl.u32 %v1163, 7
      %v1165 = vsub.s32 0, %v1164
      %v1166 = vrot.slane %v1011, %v1165
      %v1167 = vlaneseq
      %v1168 = vshrl.u32 %v1167, 7
      %v1169 = vsub.s32 0, %v1168
      %v1170 = vrot.slane %v1012, %v1169
      %v1171 = vlaneseq
      %v1172 = vshrl.u32 %v1171, 7
      %v1173 = vsub.s32 0, %v1172
      %v1174 = vrot.slane %v1013, %v1173
      %v1175 = vlaneseq
      %v1176 = vshrl.u32 %v1175, 7
      %v1177 = vsub.s32 0, %v1176
      %v1178 = vrot.slane %v1014, %v1177
      %v1179 = vlaneseq
      %v1180 = vshrl.u32 %v1179, 7
      %v1181 = vsub.s32 0, %v1180
      %v1182 = vrot.slane %v1015, %v1181
      %v1183 = vlaneseq
      %v1184 = vshrl.u32 %v1183, 7
      %v1185 = vsub.s32 0, %v1184
      %v1186 = vrot.slane %v1016, %v1185
      %v1187 = vlaneseq
      %v1188 = vshrl.u32 %v1187, 7
      %v1189 = vsub.s32 0, %v1188
      %v1190 = vrot.slane %v1017, %v1189
      %v1191 = vlaneseq
      %v1192 = vshrl.u32 %v1191, 7
      %v1193 = vsub.s32 0, %v1192
      %v1194 = vrot.slane %v1018, %v1193
      %v1195 = vlaneseq
      %v1196 = vshrl.u32 %v1195, 7
      %v1197 = vsub.s32 0, %v1196
      %v1198 = vrot.slane %v1019, %v1197
      %v1199 = vlaneseq
      %v1200 = vshrl.u32 %v1199, 7
      %v1201 = vsub.s32 0, %v1200
      %v1202 = vrot.slane %v1020, %v1201
      %v1203 = vlaneseq
      %v1204 = vshrl.u32 %v1203, 7
      %v1205 = vsub.s32 0, %v1204
      %v1206 = vrot.slane %v1021, %v1205
      %v1207 = vlaneseq
      %v1208 = vshrl.u32 %v1207, 7
      %v1209 = vsub.s32 0, %v1208
      %v1210 = vrot.slane %v1022, %v1209
      %v1211 = vlaneseq
      %v1212 = vshrl.u32 %v1211, 7
      %v1213 = vsub.s32 0, %v1212
      %v1214 = vrot.slane %v1023, %v1213
      %v1215 = vlaneseq
      %v1216 = vshrl.u32 %v1215, 7
      %v1217 = vsub.s32 0, %v1216
      %v1218 = vrot.slane %v1024, %v1217
      %v1219 = vlaneseq
      %v1220 = vshrl.u32 %v1219, 7
      %v1221 = vsub.s32 0, %v1220
      %v1222 = vrot.slane %v1025, %v1221
      %v1223 = vlaneseq
      %v1224 = vshrl.u32 %v1223, 7
      %v1225 = vsub.s32 0, %v1224
      %v1226 = vrot.slane %v1026, %v1225
      %v1227 = vlaneseq
      %v1228 = vshrl.u32 %v1227, 7
      %v1229 = vsub.s32 0, %v1228
      %v1230 = vrot.slane %v1027, %v1229
      %v1231 = vlaneseq
      %v1232 = vshrl.u32 %v1231, 7
      %v1233 = vsub.s32 0, %v1232
      %v1234 = vrot.slane %v1028, %v1233
      %v1235 = vlaneseq
      %v1236 = vshrl.u32 %v1235, 7
      %v1237 = vsub.s32 0, %v1236
      %v1238 = vrot.slane %v1029, %v1237
      %v1239 = vlaneseq
      %v1240 = vshrl.u32 %v1239, 7
      %v1241 = vsub.s32 0, %v1240
      %v1242 = vrot.slane %v1030, %v1241
      %v1243 = vlaneseq
      %v1244 = vshrl.u32 %v1243, 7
      %v1245 = vsub.s32 0, %v1244
      %v1246 = vrot.slane %v1031, %v1245
      %v1247 = vlaneseq
      %v1248 = vshrl.u32 %v1247, 7
      %v1249 = vsub.s32 0, %v1248
      %v1250 = vrot.slane %v1032, %v1249
      %v1251 = vlaneseq
      %v1252 = vshrl.u32 %v1251, 7
      %v1253 = vsub.s32 0, %v1252
      %v1254 = vrot.slane %v1033, %v1253
      %v1255 = vlaneseq
      %v1256 = vshrl.u32 %v1255, 7
      %v1257 = vsub.s32 0, %v1256
      %v1258 = vrot.slane %v1034, %v1257
      %v1259 = vlaneseq
      %v1260 = vshrl.u32 %v1259, 7
      %v1261 = vsub.s32 0, %v1260
      %v1262 = vrot.slane %v1035, %v1261
      %v1263 = vlaneseq
      %v1264 = vshrl.u32 %v1263, 7
      %v1265 = vsub.s32 0, %v1264
      %v1266 = vrot.slane %v1036, %v1265
      %v1267 = vlaneseq
      %v1268 = vshrl.u32 %v1267, 7
      %v1269 = vsub.s32 0, %v1268
      %v1270 = vrot.slane %v1037, %v1269
      %v1271 = vlaneseq
      %v1272 = vshrl.u32 %v1271, 7
      %v1273 = vsub.s32 0, %v1272
      %v1274 = vrot.slane %v1038, %v1273
      %v1275 = vlaneseq
      %v1276 = vshrl.u32 %v1275, 7
      %v1277 = vsub.s32 0, %v1276
      %v1278 = vrot.slane %v1039, %v1277
      %v1279 = vlaneseq
      %v1280 = vshrl.u32 %v1279, 7
      %v1281 = vsub.s32 0, %v1280
      %v1282 = vrot.slane %v1040, %v1281
      %v1283 = vlaneseq
      %v1284 = vshrl.u32 %v1283, 7
      %v1285 = vsub.s32 0, %v1284
      %v1286 = vrot.slane %v1041, %v1285
      %v1287 = vlaneseq
      %v1288 = vshrl.u32 %v1287, 7
      %v1289 = vsub.s32 0, %v1288
      %v1290 = vrot.slane %v1042, %v1289
      %v1291 = vlaneseq
      %v1292 = vshrl.u32 %v1291, 7
      %v1293 = vsub.s32 0, %v1292
      %v1294 = vrot.slane %v1043, %v1293
      %v1295 = vlaneseq
      %v1296 = vshrl.u32 %v1295, 7
      %v1297 = vsub.s32 0, %v1296
      %v1298 = vrot.slane %v1044, %v1297
      %v1299 = vlaneseq
      %v1300 = vshrl.u32 %v1299, 7
      %v1301 = vsub.s32 0, %v1300
      %v1302 = vrot.slane %v1045, %v1301
      %v1303 = vlaneseq
      %v1304 = vshrl.u32 %v1303, 7
      %v1305 = vsub.s32 0, %v1304
      %v1306 = vrot.slane %v1046, %v1305
      %v1307 = vlaneseq
      %v1308 = vshrl.u32 %v1307, 7
      %v1309 = vsub.s32 0, %v1308
      %v1310 = vrot.slane %v1047, %v1309
      %v1311 = vlaneseq
      %v1312 = vshrl.u32 %v1311, 7
      %v1313 = vsub.s32 0, %v1312
      %v1314 = vrot.slane %v1048, %v1313
      %v1315 = vlaneseq
      %v1316 = vshrl.u32 %v1315, 7
      %v1317 = vsub.s32 0, %v1316
      %v1318 = vrot.slane %v1049, %v1317
      %v1319 = vlaneseq
      %v1320 = vshrl.u32 %v1319, 7
      %v1321 = vsub.s32 0, %v1320
      %v1322 = vrot.slane %v1050, %v1321
      %v1323 = vlaneseq
      %v1324 = vshrl.u32 %v1323, 7
      %v1325 = vsub.s32 0, %v1324
      %v1326 = vrot.slane %v1051, %v1325
      %v1327 = vlaneseq
      %v1328 = vshrl.u32 %v1327, 7
      %v1329 = vsub.s32 0, %v1328
      %v1330 = vrot.slane %v1052, %v1329
      %v1331 = vlaneseq
      %v1332 = vshrl.u32 %v1331, 7
      %v1333 = vsub.s32 0, %v1332
      %v1334 = vrot.slane %v1053, %v1333
      %v1335 = vlaneseq
      %v1336 = vshrl.u32 %v1335, 7
      %v1337 = vsub.s32 0, %v1336
      %v1338 = vrot.slane %v1054, %v1337
      %v1339 = vlaneseq
      %v1340 = vshrl.u32 %v1339, 7
      %v1341 = vsub.s32 0, %v1340
      %v1342 = vrot.slane %v1055, %v1341
      %v1343 = vlaneseq
      %v1344 = vshrl.u32 %v1343, 7
      %v1345 = vsub.s32 0, %v1344
      %v1346 = vrot.slane %v1056, %v1345
      %v1347 = vlaneseq
      %v1348 = vshrl.u32 %v1347, 7
      %v1349 = vsub.s32 0, %v1348
      %v1350 = vrot.slane %v1057, %v1349
      %v1351 = vlaneseq
      %v1352 = vshrl.u32 %v1351, 7
      %v1353 = vsub.s32 0, %v1352
      %v1354 = vrot.slane %v1058, %v1353
      %v1355 = vlaneseq
      %v1356 = vshrl.u32 %v1355, 7
      %v1357 = vsub.s32 0, %v1356
      %v1358 = vrot.slane %v1059, %v1357
      %v1359 = vlaneseq
      %v1360 = vshrl.u32 %v1359, 7
      %v1361 = vsub.s32 0, %v1360
      %v1362 = vrot.slane %v1060, %v1361
      %v1363 = vlaneseq
      %v1364 = vshrl.u32 %v1363, 7
      %v1365 = vsub.s32 0, %v1364
      %v1366 = vrot.slane %v1061, %v1365
      %v1367 = vlaneseq
      %v1368 = vshrl.u32 %v1367, 7
      %v1369 = vsub.s32 0, %v1368
      %v1370 = vrot.slane %v1062, %v1369
      %v1371 = vlaneseq
      %v1372 = vshrl.u32 %v1371, 7
      %v1373 = vsub.s32 0, %v1372
      %v1374 = vrot.slane %v1063, %v1373
      %v1375 = vlaneseq
      %v1376 = vshrl.u32 %v1375, 7
      %v1377 = vsub.s32 0, %v1376
      %v1378 = vrot.slane %v1064, %v1377
      %v1379 = vlaneseq
      %v1380 = vshrl.u32 %v1379, 7
      %v1381 = vsub.s32 0, %v1380
      %v1382 = vrot.slane %v1065, %v1381
      %v1383 = vlaneseq
      %v1384 = vshrl.u32 %v1383, 7
      %v1385 = vsub.s32 0, %v1384
      %v1386 = vrot.slane %v1066, %v1385
      %v1387 = vlaneseq
      %v1388 = vshrl.u32 %v1387, 7
      %v1389 = vsub.s32 0, %v1388
      %v1390 = vrot.slane %v1067, %v1389
      %v1391 = vlaneseq
      %v1392 = vshrl.u32 %v1391, 7
      %v1393 = vsub.s32 0, %v1392
      %v1394 = vrot.slane %v1068, %v1393
      %v1395 = vlaneseq
      %v1396 = vshrl.u32 %v1395, 7
      %v1397 = vsub.s32 0, %v1396
      %v1398 = vrot.slane %v1069, %v1397
      %v1399 = vlaneseq
      %v1400 = vshrl.u32 %v1399, 7
      %v1401 = vsub.s32 0, %v1400
      %v1402 = vrot.slane %v1070, %v1401
      %v1403 = vlaneseq
      %v1404 = vshrl.u32 %v1403, 7
      %v1405 = vsub.s32 0, %v1404
      %v1406 = vrot.slane %v1071, %v1405
      %v1407 = vlaneseq
      %v1408 = vshrl.u32 %v1407, 7
      %v1409 = vsub.s32 0, %v1408
      %v1410 = vrot.slane %v1072, %v1409
      %v1411 = vlaneseq
      %v1412 = vshrl.u32 %v1411, 7
      %v1413 = vsub.s32 0, %v1412
      %v1414 = vrot.slane %v1073, %v1413
      %v1415 = vlaneseq
      %v1416 = vshrl.u32 %v1415, 7
      %v1417 = vsub.s32 0, %v1416
      %v1418 = vrot.slane %v1074, %v1417
      %v1419 = vlaneseq
      %v1420 = vshrl.u32 %v1419, 7
      %v1421 = vsub.s32 0, %v1420
      %v1422 = vrot.slane %v1075, %v1421
      %v1423 = vlaneseq
      %v1424 = vshrl.u32 %v1423, 7
      %v1425 = vsub.s32 0, %v1424
      %v1426 = vrot.slane %v1076, %v1425
      %v1427 = vlaneseq
      %v1428 = vshrl.u32 %v1427, 7
      %v1429 = vsub.s32 0, %v1428
      %v1430 = vrot.slane %v1077, %v1429
      %v1431 = vlaneseq
      %v1432 = vshrl.u32 %v1431, 7
      %v1433 = vsub.s32 0, %v1432
      %v1434 = vrot.slane %v1078, %v1433
      %v1435 = vlaneseq
      %v1436 = vshrl.u32 %v1435, 7
      %v1437 = vsub.s32 0, %v1436
      %v1438 = vrot.slane %v1079, %v1437
      %v1439 = vlaneseq
      %v1440 = vshrl.u32 %v1439, 7
      %v1441 = vsub.s32 0, %v1440
      %v1442 = vrot.slane %v1080, %v1441
      %v1443 = vlaneseq
      %v1444 = vshrl.u32 %v1443, 7
      %v1445 = vsub.s32 0, %v1444
      %v1446 = vrot.slane %v1081, %v1445
      %v1447 = vlaneseq
      %v1448 = vshrl.u32 %v1447, 7
      %v1449 = vsub.s32 0, %v1448
      %v1450 = vrot.slane %v1082, %v1449
      %v1451 = vlaneseq
      %v1452 = vshrl.u32 %v1451, 7
      %v1453 = vsub.s32 0, %v1452
      %v1454 = vrot.slane %v1083, %v1453
      %v1455 = vlaneseq
      %v1456 = vshrl.u32 %v1455, 7
      %v1457 = vsub.s32 0, %v1456
      %v1458 = vrot.slane %v1084, %v1457
      %v1459 = vlaneseq
      %v1460 = vshrl.u32 %v1459, 7
      %v1461 = vsub.s32 0, %v1460
      %v1462 = vrot.slane %v1085, %v1461
      %v1463 = vlaneseq
      %v1464 = vshrl.u32 %v1463, 7
      %v1465 = vsub.s32 0, %v1464
      %v1466 = vrot.slane %v1086, %v1465
      %v1467 = vlaneseq
      %v1468 = vshrl.u32 %v1467, 7
      %v1469 = vsub.s32 0, %v1468
      %v1470 = vrot.slane %v1087, %v1469
      %v1471 = vlaneseq
      %v1472 = vshrl.u32 %v1471, 7
      %v1473 = vsub.s32 0, %v1472
      %v1474 = vrot.slane %v1088, %v1473
      %v1475 = vlaneseq
      %v1476 = vshrl.u32 %v1475, 7
      %v1477 = vsub.s32 0, %v1476
      %v1478 = vrot.slane %v1089, %v1477
      %v1479 = vlaneseq
      %v1480 = vshrl.u32 %v1479, 7
      %v1481 = vsub.s32 0, %v1480
      %v1482 = vrot.slane %v1090, %v1481
      %v1483 = vlaneseq
      %v1484 = vshrl.u32 %v1483, 7
      %v1485 = vsub.s32 0, %v1484
      %v1486 = vrot.slane %v1091, %v1485
      %v1487 = vlaneseq
      %v1488 = vshrl.u32 %v1487, 7
      %v1489 = vsub.s32 0, %v1488
      %v1490 = vrot.slane %v1092, %v1489
      %v1491 = vlaneseq
      %v1492 = vshrl.u32 %v1491, 7
      %v1493 = vsub.s32 0, %v1492
      %v1494 = vrot.slane %v1093, %v1493
      %v1495 = vlaneseq
      %v1496 = vshrl.u32 %v1495, 7
      %v1497 = vsub.s32 0, %v1496
      %v1498 = vrot.slane %v1094, %v1497
      %v1499 = vlaneseq
      %v1500 = vshrl.u32 %v1499, 7
      %v1501 = vsub.s32 0, %v1500
      %v1502 = vrot.slane %v1095, %v1501
      %v1503 = vlaneseq
      %v1504 = vshrl.u32 %v1503, 7
      %v1505 = vsub.s32 0, %v1504
      %v1506 = vrot.slane %v1096, %v1505
      %v1507 = vlaneseq
      %v1508 = vshrl.u32 %v1507, 7
      %v1509 = vsub.s32 0, %v1508
      %v1510 = vrot.slane %v1097, %v1509
      %v1511 = vlaneseq
      %v1512 = vshrl.u32 %v1511, 7
      %v1513 = vsub.s32 0, %v1512
      %v1514 = vrot.slane %v1098, %v1513
      %v1515 = vlaneseq
      %v1516 = vshrl.u32 %v1515, 7
      %v1517 = vsub.s32 0, %v1516
      %v1518 = vrot.slane %v1099, %v1517
      %v1519 = vlaneseq
      %v1520 = vshrl.u32 %v1519, 7
      %v1521 = vsub.s32 0, %v1520
      %v1522 = vrot.slane %v1100, %v1521
      %v1523 = vlaneseq
      %v1524 = vshrl.u32 %v1523, 7
      %v1525 = vsub.s32 0, %v1524
      %v1526 = vrot.slane %v1101, %v1525
      %v1527 = vlaneseq
      %v1528 = vshrl.u32 %v1527, 7
      %v1529 = vsub.s32 0, %v1528
      %v1530 = vrot.slane %v1102, %v1529
      %v1531 = vlaneseq
      %v1532 = vshrl.u32 %v1531, 7
      %v1533 = vsub.s32 0, %v1532
      %v1534 = vrot.slane %v1103, %v1533
      %v1535 = vlaneseq
      %v1536 = vshrl.u32 %v1535, 7
      %v1537 = vsub.s32 0, %v1536
      %v1538 = vrot.slane %v1104, %v1537
      %v1539 = vlaneseq
      %v1540 = vshrl.u32 %v1539, 7
      %v1541 = vsub.s32 0, %v1540
      %v1542 = vrot.slane %v1105, %v1541
      %v1543 = vlaneseq
      %v1544 = vshrl.u32 %v1543, 7
      %v1545 = vsub.s32 0, %v1544
      %v1546 = vrot.slane %v1106, %v1545
      %v1547 = vlaneseq
      %v1548 = vshrl.u32 %v1547, 7
      %v1549 = vsub.s32 0, %v1548
      %v1550 = vrot.slane %v1107, %v1549
      %v1551 = vlaneseq
      %v1552 = vshrl.u32 %v1551, 7
      %v1553 = vsub.s32 0, %v1552
      %v1554 = vrot.slane %v1108, %v1553
      %v1555 = vlaneseq
      %v1556 = vshrl.u32 %v1555, 7
      %v1557 = vsub.s32 0, %v1556
      %v1558 = vrot.slane %v1109, %v1557
      %v1559 = vlaneseq
      %v1560 = vshrl.u32 %v1559, 7
      %v1561 = vsub.s32 0, %v1560
      %v1562 = vrot.slane %v1110, %v1561
      %v1563 = vlaneseq
      %v1564 = vshrl.u32 %v1563, 7
      %v1565 = vsub.s32 0, %v1564
      %v1566 = vrot.slane %v1111, %v1565
      %v1567 = vlaneseq
      %v1568 = vshrl.u32 %v1567, 7
      %v1569 = vsub.s32 0, %v1568
      %v1570 = vrot.slane %v1112, %v1569
      %v1571 = vlaneseq
      %v1572 = vshrl.u32 %v1571, 7
      %v1573 = vsub.s32 0, %v1572
      %v1574 = vrot.slane %v1113, %v1573
      %v1575 = vlaneseq
      %v1576 = vshrl.u32 %v1575, 7
      %v1577 = vsub.s32 0, %v1576
      %v1578 = vrot.slane %v1114, %v1577
      %v1579 = vlaneseq
      %v1580 = vshrl.u32 %v1579, 7
      %v1581 = vsub.s32 0, %v1580
      %v1582 = vrot.slane %v1115, %v1581
      %v1583 = vlaneseq
      %v1584 = vshrl.u32 %v1583, 7
      %v1585 = vsub.s32 0, %v1584
      %v1586 = vrot.slane %v1116, %v1585
      %v1587 = vlaneseq
      %v1588 = vshrl.u32 %v1587, 7
      %v1589 = vsub.s32 0, %v1588
      %v1590 = vrot.slane %v1117, %v1589
      %v1591 = vlaneseq
      %v1592 = vshrl.u32 %v1591, 7
      %v1593 = vsub.s32 0, %v1592
      %v1594 = vrot.slane %v1118, %v1593
      %v1595 = vlaneseq
      %v1596 = vshrl.u32 %v1595, 7
      %v1597 = vsub.s32 0, %v1596
      %v1598 = vrot.slane %v1119, %v1597
      %v1599 = vlaneseq
      %v1600 = vshrl.u32 %v1599, 7
      %v1601 = vsub.s32 0, %v1600
      %v1602 = vrot.slane %v1120, %v1601
      %v1603 = vlaneseq
      %v1604 = vshrl.u32 %v1603, 7
      %v1605 = vsub.s32 0, %v1604
      %v1606 = vrot.slane %v1121, %v1605
      %v1607 = vlaneseq
      %v1608 = vshrl.u32 %v1607, 7
      %v1609 = vsub.s32 0, %v1608
      %v1610 = vrot.slane %v1122, %v1609
      %v1611 = vlaneseq
      %v1612 = vshrl.u32 %v1611, 7
      %v1613 = vsub.s32 0, %v1612
      %v1614 = vrot.slane %v1123, %v1613
      %v1615 = vlaneseq
      %v1616 = vshrl.u32 %v1615, 7
      %v1617 = vsub.s32 0, %v1616
      %v1618 = vrot.slane %v1124, %v1617
      %v1619 = vlaneseq
      %v1620 = vshrl.u32 %v1619, 7
      %v1621 = vsub.s32 0, %v1620
      %v1622 = vrot.slane %v1125, %v1621
      %v1623 = vlaneseq
      %v1624 = vshrl.u32 %v1623, 7
      %v1625 = vsub.s32 0, %v1624
      %v1626 = vrot.slane %v1126, %v1625
      %v1627 = vlaneseq
      %v1628 = vshrl.u32 %v1627, 7
      %v1629 = vsub.s32 0, %v1628
      %v1630 = vrot.slane %v1127, %v1629
      %v1631 = vlaneseq
      %v1632 = vshrl.u32 %v1631, 7
      %v1633 = vsub.s32 0, %v1632
      %v1634 = vrot.slane %v1128, %v1633
      %v1635 = vlaneseq
      %v1636 = vshrl.u32 %v1635, 7
      %v1637 = vsub.s32 0, %v1636
      %v1638 = vrot.slane %v1129, %v1637
      %v1639 = vlaneseq
      %v1640 = vshrl.u32 %v1639, 7
      %v1641 = vsub.s32 0, %v1640
      %v1642 = vrot.slane %v1130, %v1641
      %v1644 = vpack.i.b16 %v1134, %v1134
      %v1646 = vlaneseq
      %v1647 = vshrl.u32 %v1646, 7
      %v1648 = vsub.s32 0, %v1647
      %v1649 = vrot.slane %v1644, %v1648
      %v1651 = vpack.i.b16 %v1138, %v1138
      %v1653 = vlaneseq
      %v1654 = vshrl.u32 %v1653, 7
      %v1655 = vsub.s32 0, %v1654
      %v1656 = vrot.slane %v1651, %v1655
      %v1658 = vpack.i.b16 %v1142, %v1142
      %v1660 = vlaneseq
      %v1661 = vshrl.u32 %v1660, 7
      %v1662 = vsub.s32 0, %v1661
      %v1663 = vrot.slane %v1658, %v1662
      %v1665 = vpack.i.b16 %v1146, %v1146
      %v1667 = vlaneseq
      %v1668 = vshrl.u32 %v1667, 7
      %v1669 = vsub.s32 0, %v1668
      %v1670 = vrot.slane %v1665, %v1669
      %v1672 = vpack.i.b16 %v1150, %v1150
      %v1674 = vlaneseq
      %v1675 = vshrl.u32 %v1674, 7
      %v1676 = vsub.s32 0, %v1675
      %v1677 = vrot.slane %v1672, %v1676
      %v1679 = vpack.i.b16 %v1154, %v1154
      %v1681 = vlaneseq
      %v1682 = vshrl.u32 %v1681, 7
      %v1683 = vsub.s32 0, %v1682
      %v1684 = vrot.slane %v1679, %v1683
      %v1686 = vpack.i.b16 %v1158, %v1158
      %v1688 = vlaneseq
      %v1689 = vshrl.u32 %v1688, 7
      %v1690 = vsub.s32 0, %v1689
      %v1691 = vrot.slane %v1686, %v1690
      %v1693 = vpack.i.b16 %v1162, %v1162
      %v1695 = vlaneseq
      %v1696 = vshrl.u32 %v1695, 7
      %v1697 = vsub.s32 0, %v1696
      %v1698 = vrot.slane %v1693, %v1697
      %v1700 = vpack.i.b16 %v1166, %v1166
      %v1702 = vlaneseq
      %v1703 = vshrl.u32 %v1702, 7
      %v1704 = vsub.s32 0, %v1703
      %v1705 = vrot.slane %v1700, %v1704
      %v1707 = vpack.i.b16 %v1170, %v1170
      %v1709 = vlaneseq
      %v1710 = vshrl.u32 %v1709, 7
      %v1711 = vsub.s32 0, %v1710
      %v1712 = vrot.slane %v1707, %v1711
      %v1714 = vpack.i.b16 %v1174, %v1174
      %v1716 = vlaneseq
      %v1717 = vshrl.u32 %v1716, 7
      %v1718 = vsub.s32 0, %v1717
      %v1719 = vrot.slane %v1714, %v1718
      %v1721 = vpack.i.b16 %v1178, %v1178
      %v1723 = vlaneseq
      %v1724 = vshrl.u32 %v1723, 7
      %v1725 = vsub.s32 0, %v1724
      %v1726 = vrot.slane %v1721, %v1725
      %v1728 = vpack.i.b16 %v1182, %v1182
      %v1730 = vlaneseq
      %v1731 = vshrl.u32 %v1730, 7
      %v1732 = vsub.s32 0, %v1731
      %v1733 = vrot.slane %v1728, %v1732
      %v1735 = vpack.i.b16 %v1186, %v1186
      %v1737 = vlaneseq
      %v1738 = vshrl.u32 %v1737, 7
      %v1739 = vsub.s32 0, %v1738
      %v1740 = vrot.slane %v1735, %v1739
      %v1742 = vpack.i.b16 %v1190, %v1190
      %v1744 = vlaneseq
      %v1745 = vshrl.u32 %v1744, 7
      %v1746 = vsub.s32 0, %v1745
      %v1747 = vrot.slane %v1742, %v1746
      %v1749 = vpack.i.b16 %v1194, %v1194
      %v1751 = vlaneseq
      %v1752 = vshrl.u32 %v1751, 7
      %v1753 = vsub.s32 0, %v1752
      %v1754 = vrot.slane %v1749, %v1753
      %v1756 = vpack.i.b16 %v1198, %v1198
      %v1758 = vlaneseq
      %v1759 = vshrl.u32 %v1758, 7
      %v1760 = vsub.s32 0, %v1759
      %v1761 = vrot.slane %v1756, %v1760
      %v1763 = vpack.i.b16 %v1202, %v1202
      %v1765 = vlaneseq
      %v1766 = vshrl.u32 %v1765, 7
      %v1767 = vsub.s32 0, %v1766
      %v1768 = vrot.slane %v1763, %v1767
      %v1770 = vpack.i.b16 %v1206, %v1206
      %v1772 = vlaneseq
      %v1773 = vshrl.u32 %v1772, 7
      %v1774 = vsub.s32 0, %v1773
      %v1775 = vrot.slane %v1770, %v1774
      %v1777 = vpack.i.b16 %v1210, %v1210
      %v1779 = vlaneseq
      %v1780 = vshrl.u32 %v1779, 7
      %v1781 = vsub.s32 0, %v1780
      %v1782 = vrot.slane %v1777, %v1781
      %v1784 = vpack.i.b16 %v1214, %v1214
      %v1786 = vlaneseq
      %v1787 = vshrl.u32 %v1786, 7
      %v1788 = vsub.s32 0, %v1787
      %v1789 = vrot.slane %v1784, %v1788
      %v1791 = vpack.i.b16 %v1218, %v1218
      %v1793 = vlaneseq
      %v1794 = vshrl.u32 %v1793, 7
      %v1795 = vsub.s32 0, %v1794
      %v1796 = vrot.slane %v1791, %v1795
      %v1798 = vpack.i.b16 %v1222, %v1222
      %v1800 = vlaneseq
      %v1801 = vshrl.u32 %v1800, 7
      %v1802 = vsub.s32 0, %v1801
      %v1803 = vrot.slane %v1798, %v1802
      %v1805 = vpack.i.b16 %v1226, %v1226
      %v1807 = vlaneseq
      %v1808 = vshrl.u32 %v1807, 7
      %v1809 = vsub.s32 0, %v1808
      %v1810 = vrot.slane %v1805, %v1809
      %v1812 = vpack.i.b16 %v1230, %v1230
      %v1814 = vlaneseq
      %v1815 = vshrl.u32 %v1814, 7
      %v1816 = vsub.s32 0, %v1815
      %v1817 = vrot.slane %v1812, %v1816
      %v1819 = vpack.i.b16 %v1234, %v1234
      %v1821 = vlaneseq
      %v1822 = vshrl.u32 %v1821, 7
      %v1823 = vsub.s32 0, %v1822
      %v1824 = vrot.slane %v1819, %v1823
      %v1826 = vpack.i.b16 %v1238, %v1238
      %v1828 = vlaneseq
      %v1829 = vshrl.u32 %v1828, 7
      %v1830 = vsub.s32 0, %v1829
      %v1831 = vrot.slane %v1826, %v1830
      %v1833 = vpack.i.b16 %v1242, %v1242
      %v1835 = vlaneseq
      %v1836 = vshrl.u32 %v1835, 7
      %v1837 = vsub.s32 0, %v1836
      %v1838 = vrot.slane %v1833, %v1837
      %v1840 = vpack.i.b16 %v1246, %v1246
      %v1842 = vlaneseq
      %v1843 = vshrl.u32 %v1842, 7
      %v1844 = vsub.s32 0, %v1843
      %v1845 = vrot.slane %v1840, %v1844
      %v1847 = vpack.i.b16 %v1250, %v1250
      %v1849 = vlaneseq
      %v1850 = vshrl.u32 %v1849, 7
      %v1851 = vsub.s32 0, %v1850
      %v1852 = vrot.slane %v1847, %v1851
      %v1854 = vpack.i.b16 %v1254, %v1254
      %v1856 = vlaneseq
      %v1857 = vshrl.u32 %v1856, 7
      %v1858 = vsub.s32 0, %v1857
      %v1859 = vrot.slane %v1854, %v1858
      %v1861 = vpack.i.b16 %v1258, %v1258
      %v1863 = vlaneseq
      %v1864 = vshrl.u32 %v1863, 7
      %v1865 = vsub.s32 0, %v1864
      %v1866 = vrot.slane %v1861, %v1865
      %v1868 = vpack.i.b16 %v1262, %v1262
      %v1870 = vlaneseq
      %v1871 = vshrl.u32 %v1870, 7
      %v1872 = vsub.s32 0, %v1871
      %v1873 = vrot.slane %v1868, %v1872
      %v1875 = vpack.i.b16 %v1266, %v1266
      %v1877 = vlaneseq
      %v1878 = vshrl.u32 %v1877, 7
      %v1879 = vsub.s32 0, %v1878
      %v1880 = vrot.slane %v1875, %v1879
      %v1882 = vpack.i.b16 %v1270, %v1270
      %v1884 = vlaneseq
      %v1885 = vshrl.u32 %v1884, 7
      %v1886 = vsub.s32 0, %v1885
      %v1887 = vrot.slane %v1882, %v1886
      %v1889 = vpack.i.b16 %v1274, %v1274
      %v1891 = vlaneseq
      %v1892 = vshrl.u32 %v1891, 7
      %v1893 = vsub.s32 0, %v1892
      %v1894 = vrot.slane %v1889, %v1893
      %v1896 = vpack.i.b16 %v1278, %v1278
      %v1898 = vlaneseq
      %v1899 = vshrl.u32 %v1898, 7
      %v1900 = vsub.s32 0, %v1899
      %v1901 = vrot.slane %v1896, %v1900
      %v1903 = vpack.i.b16 %v1282, %v1282
      %v1905 = vlaneseq
      %v1906 = vshrl.u32 %v1905, 7
      %v1907 = vsub.s32 0, %v1906
      %v1908 = vrot.slane %v1903, %v1907
      %v1910 = vpack.i.b16 %v1286, %v1286
      %v1912 = vlaneseq
      %v1913 = vshrl.u32 %v1912, 7
      %v1914 = vsub.s32 0, %v1913
      %v1915 = vrot.slane %v1910, %v1914
      %v1917 = vpack.i.b16 %v1290, %v1290
      %v1919 = vlaneseq
      %v1920 = vshrl.u32 %v1919, 7
      %v1921 = vsub.s32 0, %v1920
      %v1922 = vrot.slane %v1917, %v1921
      %v1924 = vpack.i.b16 %v1294, %v1294
      %v1926 = vlaneseq
      %v1927 = vshrl.u32 %v1926, 7
      %v1928 = vsub.s32 0, %v1927
      %v1929 = vrot.slane %v1924, %v1928
      %v1931 = vpack.i.b16 %v1298, %v1298
      %v1933 = vlaneseq
      %v1934 = vshrl.u32 %v1933, 7
      %v1935 = vsub.s32 0, %v1934
      %v1936 = vrot.slane %v1931, %v1935
      %v1938 = vpack.i.b16 %v1302, %v1302
      %v1940 = vlaneseq
      %v1941 = vshrl.u32 %v1940, 7
      %v1942 = vsub.s32 0, %v1941
      %v1943 = vrot.slane %v1938, %v1942
      %v1945 = vpack.i.b16 %v1306, %v1306
      %v1947 = vlaneseq
      %v1948 = vshrl.u32 %v1947, 7
      %v1949 = vsub.s32 0, %v1948
      %v1950 = vrot.slane %v1945, %v1949
      %v1952 = vpack.i.b16 %v1310, %v1310
      %v1954 = vlaneseq
      %v1955 = vshrl.u32 %v1954, 7
      %v1956 = vsub.s32 0, %v1955
      %v1957 = vrot.slane %v1952, %v1956
      %v1959 = vpack.i.b16 %v1314, %v1314
      %v1961 = vlaneseq
      %v1962 = vshrl.u32 %v1961, 7
      %v1963 = vsub.s32 0, %v1962
      %v1964 = vrot.slane %v1959, %v1963
      %v1966 = vpack.i.b16 %v1318, %v1318
      %v1968 = vlaneseq
      %v1969 = vshrl.u32 %v1968, 7
      %v1970 = vsub.s32 0, %v1969
      %v1971 = vrot.slane %v1966, %v1970
      %v1973 = vpack.i.b16 %v1322, %v1322
      %v1975 = vlaneseq
      %v1976 = vshrl.u32 %v1975, 7
      %v1977 = vsub.s32 0, %v1976
      %v1978 = vrot.slane %v1973, %v1977
      %v1980 = vpack.i.b16 %v1326, %v1326
      %v1982 = vlaneseq
      %v1983 = vshrl.u32 %v1982, 7
      %v1984 = vsub.s32 0, %v1983
      %v1985 = vrot.slane %v1980, %v1984
      %v1987 = vpack.i.b16 %v1330, %v1330
      %v1989 = vlaneseq
      %v1990 = vshrl.u32 %v1989, 7
      %v1991 = vsub.s32 0, %v1990
      %v1992 = vrot.slane %v1987, %v1991
      %v1994 = vpack.i.b16 %v1334, %v1334
      %v1996 = vlaneseq
      %v1997 = vshrl.u32 %v1996, 7
      %v1998 = vsub.s32 0, %v1997
      %v1999 = vrot.slane %v1994, %v1998
      %v2001 = vpack.i.b16 %v1338, %v1338
      %v2003 = vlaneseq
      %v2004 = vshrl.u32 %v2003, 7
      %v2005 = vsub.s32 0, %v2004
      %v2006 = vrot.slane %v2001, %v2005
      %v2008 = vpack.i.b16 %v1342, %v1342
      %v2010 = vlaneseq
      %v2011 = vshrl.u32 %v2010, 7
      %v2012 = vsub.s32 0, %v2011
      %v2013 = vrot.slane %v2008, %v2012
      %v2015 = vpack.i.b16 %v1346, %v1346
      %v2017 = vlaneseq
      %v2018 = vshrl.u32 %v2017, 7
      %v2019 = vsub.s32 0, %v2018
      %v2020 = vrot.slane %v2015, %v2019
      %v2022 = vpack.i.b16 %v1350, %v1350
      %v2024 = vlaneseq
      %v2025 = vshrl.u32 %v2024, 7
      %v2026 = vsub.s32 0, %v2025
      %v2027 = vrot.slane %v2022, %v2026
      %v2029 = vpack.i.b16 %v1354, %v1354
      %v2031 = vlaneseq
      %v2032 = vshrl.u32 %v2031, 7
      %v2033 = vsub.s32 0, %v2032
      %v2034 = vrot.slane %v2029, %v2033
      %v2036 = vpack.i.b16 %v1358, %v1358
      %v2038 = vlaneseq
      %v2039 = vshrl.u32 %v2038, 7
      %v2040 = vsub.s32 0, %v2039
      %v2041 = vrot.slane %v2036, %v2040
      %v2043 = vpack.i.b16 %v1362, %v1362
      %v2045 = vlaneseq
      %v2046 = vshrl.u32 %v2045, 7
      %v2047 = vsub.s32 0, %v2046
      %v2048 = vrot.slane %v2043, %v2047
      %v2050 = vpack.i.b16 %v1366, %v1366
      %v2052 = vlaneseq
      %v2053 = vshrl.u32 %v2052, 7
      %v2054 = vsub.s32 0, %v2053
      %v2055 = vrot.slane %v2050, %v2054
      %v2057 = vpack.i.b16 %v1370, %v1370
      %v2059 = vlaneseq
      %v2060 = vshrl.u32 %v2059, 7
      %v2061 = vsub.s32 0, %v2060
      %v2062 = vrot.slane %v2057, %v2061
      %v2064 = vpack.i.b16 %v1374, %v1374
      %v2066 = vlaneseq
      %v2067 = vshrl.u32 %v2066, 7
      %v2068 = vsub.s32 0, %v2067
      %v2069 = vrot.slane %v2064, %v2068
      %v2071 = vpack.i.b16 %v1378, %v1378
      %v2073 = vlaneseq
      %v2074 = vshrl.u32 %v2073, 7
      %v2075 = vsub.s32 0, %v2074
      %v2076 = vrot.slane %v2071, %v2075
      %v2078 = vpack.i.b16 %v1382, %v1382
      %v2080 = vlaneseq
      %v2081 = vshrl.u32 %v2080, 7
      %v2082 = vsub.s32 0, %v2081
      %v2083 = vrot.slane %v2078, %v2082
      %v2085 = vpack.i.b16 %v1386, %v1386
      %v2087 = vlaneseq
      %v2088 = vshrl.u32 %v2087, 7
      %v2089 = vsub.s32 0, %v2088
      %v2090 = vrot.slane %v2085, %v2089
      %v2092 = vpack.i.b16 %v1390, %v1390
      %v2094 = vlaneseq
      %v2095 = vshrl.u32 %v2094, 7
      %v2096 = vsub.s32 0, %v2095
      %v2097 = vrot.slane %v2092, %v2096
      %v2099 = vpack.i.b16 %v1394, %v1394
      %v2101 = vlaneseq
      %v2102 = vshrl.u32 %v2101, 7
      %v2103 = vsub.s32 0, %v2102
      %v2104 = vrot.slane %v2099, %v2103
      %v2106 = vpack.i.b16 %v1398, %v1398
      %v2108 = vlaneseq
      %v2109 = vshrl.u32 %v2108, 7
      %v2110 = vsub.s32 0, %v2109
      %v2111 = vrot.slane %v2106, %v2110
      %v2113 = vpack.i.b16 %v1402, %v1402
      %v2115 = vlaneseq
      %v2116 = vshrl.u32 %v2115, 7
      %v2117 = vsub.s32 0, %v2116
      %v2118 = vrot.slane %v2113, %v2117
      %v2120 = vpack.i.b16 %v1406, %v1406
      %v2122 = vlaneseq
      %v2123 = vshrl.u32 %v2122, 7
      %v2124 = vsub.s32 0, %v2123
      %v2125 = vrot.slane %v2120, %v2124
      %v2127 = vpack.i.b16 %v1410, %v1410
      %v2129 = vlaneseq
      %v2130 = vshrl.u32 %v2129, 7
      %v2131 = vsub.s32 0, %v2130
      %v2132 = vrot.slane %v2127, %v2131
      %v2134 = vpack.i.b16 %v1414, %v1414
      %v2136 = vlaneseq
      %v2137 = vshrl.u32 %v2136, 7
      %v2138 = vsub.s32 0, %v2137
      %v2139 = vrot.slane %v2134, %v2138
      %v2141 = vpack.i.b16 %v1418, %v1418
      %v2143 = vlaneseq
      %v2144 = vshrl.u32 %v2143, 7
      %v2145 = vsub.s32 0, %v2144
      %v2146 = vrot.slane %v2141, %v2145
      %v2148 = vpack.i.b16 %v1422, %v1422
      %v2150 = vlaneseq
      %v2151 = vshrl.u32 %v2150, 7
      %v2152 = vsub.s32 0, %v2151
      %v2153 = vrot.slane %v2148, %v2152
      %v2155 = vpack.i.b16 %v1426, %v1426
      %v2157 = vlaneseq
      %v2158 = vshrl.u32 %v2157, 7
      %v2159 = vsub.s32 0, %v2158
      %v2160 = vrot.slane %v2155, %v2159
      %v2162 = vpack.i.b16 %v1430, %v1430
      %v2164 = vlaneseq
      %v2165 = vshrl.u32 %v2164, 7
      %v2166 = vsub.s32 0, %v2165
      %v2167 = vrot.slane %v2162, %v2166
      %v2169 = vpack.i.b16 %v1434, %v1434
      %v2171 = vlaneseq
      %v2172 = vshrl.u32 %v2171, 7
      %v2173 = vsub.s32 0, %v2172
      %v2174 = vrot.slane %v2169, %v2173
      %v2176 = vpack.i.b16 %v1438, %v1438
      %v2178 = vlaneseq
      %v2179 = vshrl.u32 %v2178, 7
      %v2180 = vsub.s32 0, %v2179
      %v2181 = vrot.slane %v2176, %v2180
      %v2183 = vpack.i.b16 %v1442, %v1442
      %v2185 = vlaneseq
      %v2186 = vshrl.u32 %v2185, 7
      %v2187 = vsub.s32 0, %v2186
      %v2188 = vrot.slane %v2183, %v2187
      %v2190 = vpack.i.b16 %v1446, %v1446
      %v2192 = vlaneseq
      %v2193 = vshrl.u32 %v2192, 7
      %v2194 = vsub.s32 0, %v2193
      %v2195 = vrot.slane %v2190, %v2194
      %v2197 = vpack.i.b16 %v1450, %v1450
      %v2199 = vlaneseq
      %v2200 = vshrl.u32 %v2199, 7
      %v2201 = vsub.s32 0, %v2200
      %v2202 = vrot.slane %v2197, %v2201
      %v2204 = vpack.i.b16 %v1454, %v1454
      %v2206 = vlaneseq
      %v2207 = vshrl.u32 %v2206, 7
      %v2208 = vsub.s32 0, %v2207
      %v2209 = vrot.slane %v2204, %v2208
      %v2211 = vpack.i.b16 %v1458, %v1458
      %v2213 = vlaneseq
      %v2214 = vshrl.u32 %v2213, 7
      %v2215 = vsub.s32 0, %v2214
      %v2216 = vrot.slane %v2211, %v2215
      %v2218 = vpack.i.b16 %v1462, %v1462
      %v2220 = vlaneseq
      %v2221 = vshrl.u32 %v2220, 7
      %v2222 = vsub.s32 0, %v2221
      %v2223 = vrot.slane %v2218, %v2222
      %v2225 = vpack.i.b16 %v1466, %v1466
      %v2227 = vlaneseq
      %v2228 = vshrl.u32 %v2227, 7
      %v2229 = vsub.s32 0, %v2228
      %v2230 = vrot.slane %v2225, %v2229
      %v2232 = vpack.i.b16 %v1470, %v1470
      %v2234 = vlaneseq
      %v2235 = vshrl.u32 %v2234, 7
      %v2236 = vsub.s32 0, %v2235
      %v2237 = vrot.slane %v2232, %v2236
      %v2239 = vpack.i.b16 %v1474, %v1474
      %v2241 = vlaneseq
      %v2242 = vshrl.u32 %v2241, 7
      %v2243 = vsub.s32 0, %v2242
      %v2244 = vrot.slane %v2239, %v2243
      %v2246 = vpack.i.b16 %v1478, %v1478
      %v2248 = vlaneseq
      %v2249 = vshrl.u32 %v2248, 7
      %v2250 = vsub.s32 0, %v2249
      %v2251 = vrot.slane %v2246, %v2250
      %v2253 = vpack.i.b16 %v1482, %v1482
      %v2255 = vlaneseq
      %v2256 = vshrl.u32 %v2255, 7
      %v2257 = vsub.s32 0, %v2256
      %v2258 = vrot.slane %v2253, %v2257
      %v2260 = vpack.i.b16 %v1486, %v1486
      %v2262 = vlaneseq
      %v2263 = vshrl.u32 %v2262, 7
      %v2264 = vsub.s32 0, %v2263
      %v2265 = vrot.slane %v2260, %v2264
      %v2267 = vpack.i.b16 %v1490, %v1490
      %v2269 = vlaneseq
      %v2270 = vshrl.u32 %v2269, 7
      %v2271 = vsub.s32 0, %v2270
      %v2272 = vrot.slane %v2267, %v2271
      %v2274 = vpack.i.b16 %v1494, %v1494
      %v2276 = vlaneseq
      %v2277 = vshrl.u32 %v2276, 7
      %v2278 = vsub.s32 0, %v2277
      %v2279 = vrot.slane %v2274, %v2278
      %v2281 = vpack.i.b16 %v1498, %v1498
      %v2283 = vlaneseq
      %v2284 = vshrl.u32 %v2283, 7
      %v2285 = vsub.s32 0, %v2284
      %v2286 = vrot.slane %v2281, %v2285
      %v2288 = vpack.i.b16 %v1502, %v1502
      %v2290 = vlaneseq
      %v2291 = vshrl.u32 %v2290, 7
      %v2292 = vsub.s32 0, %v2291
      %v2293 = vrot.slane %v2288, %v2292
      %v2295 = vpack.i.b16 %v1506, %v1506
      %v2297 = vlaneseq
      %v2298 = vshrl.u32 %v2297, 7
      %v2299 = vsub.s32 0, %v2298
      %v2300 = vrot.slane %v2295, %v2299
      %v2302 = vpack.i.b16 %v1510, %v1510
      %v2304 = vlaneseq
      %v2305 = vshrl.u32 %v2304, 7
      %v2306 = vsub.s32 0, %v2305
      %v2307 = vrot.slane %v2302, %v2306
      %v2309 = vpack.i.b16 %v1514, %v1514
      %v2311 = vlaneseq
      %v2312 = vshrl.u32 %v2311, 7
      %v2313 = vsub.s32 0, %v2312
      %v2314 = vrot.slane %v2309, %v2313
      %v2316 = vpack.i.b16 %v1518, %v1518
      %v2318 = vlaneseq
      %v2319 = vshrl.u32 %v2318, 7
      %v2320 = vsub.s32 0, %v2319
      %v2321 = vrot.slane %v2316, %v2320
      %v2323 = vpack.i.b16 %v1522, %v1522
      %v2325 = vlaneseq
      %v2326 = vshrl.u32 %v2325, 7
      %v2327 = vsub.s32 0, %v2326
      %v2328 = vrot.slane %v2323, %v2327
      %v2330 = vpack.i.b16 %v1526, %v1526
      %v2332 = vlaneseq
      %v2333 = vshrl.u32 %v2332, 7
      %v2334 = vsub.s32 0, %v2333
      %v2335 = vrot.slane %v2330, %v2334
      %v2337 = vpack.i.b16 %v1530, %v1530
      %v2339 = vlaneseq
      %v2340 = vshrl.u32 %v2339, 7
      %v2341 = vsub.s32 0, %v2340
      %v2342 = vrot.slane %v2337, %v2341
      %v2344 = vpack.i.b16 %v1534, %v1534
      %v2346 = vlaneseq
      %v2347 = vshrl.u32 %v2346, 7
      %v2348 = vsub.s32 0, %v2347
      %v2349 = vrot.slane %v2344, %v2348
      %v2351 = vpack.i.b16 %v1538, %v1538
      %v2353 = vlaneseq
      %v2354 = vshrl.u32 %v2353, 7
      %v2355 = vsub.s32 0, %v2354
      %v2356 = vrot.slane %v2351, %v2355
      %v2358 = vpack.i.b16 %v1542, %v1542
      %v2360 = vlaneseq
      %v2361 = vshrl.u32 %v2360, 7
      %v2362 = vsub.s32 0, %v2361
      %v2363 = vrot.slane %v2358, %v2362
      %v2365 = vpack.i.b16 %v1546, %v1546
      %v2367 = vlaneseq
      %v2368 = vshrl.u32 %v2367, 7
      %v2369 = vsub.s32 0, %v2368
      %v2370 = vrot.slane %v2365, %v2369
      %v2372 = vpack.i.b16 %v1550, %v1550
      %v2374 = vlaneseq
      %v2375 = vshrl.u32 %v2374, 7
      %v2376 = vsub.s32 0, %v2375
      %v2377 = vrot.slane %v2372, %v2376
      %v2379 = vpack.i.b16 %v1554, %v1554
      %v2381 = vlaneseq
      %v2382 = vshrl.u32 %v2381, 7
      %v2383 = vsub.s32 0, %v2382
      %v2384 = vrot.slane %v2379, %v2383
      %v2386 = vpack.i.b16 %v1558, %v1558
      %v2388 = vlaneseq
      %v2389 = vshrl.u32 %v2388, 7
      %v2390 = vsub.s32 0, %v2389
      %v2391 = vrot.slane %v2386, %v2390
      %v2393 = vpack.i.b16 %v1562, %v1562
      %v2395 = vlaneseq
      %v2396 = vshrl.u32 %v2395, 7
      %v2397 = vsub.s32 0, %v2396
      %v2398 = vrot.slane %v2393, %v2397
      %v2400 = vpack.i.b16 %v1566, %v1566
      %v2402 = vlaneseq
      %v2403 = vshrl.u32 %v2402, 7
      %v2404 = vsub.s32 0, %v2403
      %v2405 = vrot.slane %v2400, %v2404
      %v2407 = vpack.i.b16 %v1570, %v1570
      %v2409 = vlaneseq
      %v2410 = vshrl.u32 %v2409, 7
      %v2411 = vsub.s32 0, %v2410
      %v2412 = vrot.slane %v2407, %v2411
      %v2414 = vpack.i.b16 %v1574, %v1574
      %v2416 = vlaneseq
      %v2417 = vshrl.u32 %v2416, 7
      %v2418 = vsub.s32 0, %v2417
      %v2419 = vrot.slane %v2414, %v2418
      %v2421 = vpack.i.b16 %v1578, %v1578
      %v2423 = vlaneseq
      %v2424 = vshrl.u32 %v2423, 7
      %v2425 = vsub.s32 0, %v2424
      %v2426 = vrot.slane %v2421, %v2425
      %v2428 = vpack.i.b16 %v1582, %v1582
      %v2430 = vlaneseq
      %v2431 = vshrl.u32 %v2430, 7
      %v2432 = vsub.s32 0, %v2431
      %v2433 = vrot.slane %v2428, %v2432
      %v2435 = vpack.i.b16 %v1586, %v1586
      %v2437 = vlaneseq
      %v2438 = vshrl.u32 %v2437, 7
      %v2439 = vsub.s32 0, %v2438
      %v2440 = vrot.slane %v2435, %v2439
      %v2442 = vpack.i.b16 %v1590, %v1590
      %v2444 = vlaneseq
      %v2445 = vshrl.u32 %v2444, 7
      %v2446 = vsub.s32 0, %v2445
      %v2447 = vrot.slane %v2442, %v2446
      %v2449 = vpack.i.b16 %v1594, %v1594
      %v2451 = vlaneseq
      %v2452 = vshrl.u32 %v2451, 7
      %v2453 = vsub.s32 0, %v2452
      %v2454 = vrot.slane %v2449, %v2453
      %v2456 = vpack.i.b16 %v1598, %v1598
      %v2458 = vlaneseq
      %v2459 = vshrl.u32 %v2458, 7
      %v2460 = vsub.s32 0, %v2459
      %v2461 = vrot.slane %v2456, %v2460
      %v2463 = vpack.i.b16 %v1602, %v1602
      %v2465 = vlaneseq
      %v2466 = vshrl.u32 %v2465, 7
      %v2467 = vsub.s32 0, %v2466
      %v2468 = vrot.slane %v2463, %v2467
      %v2470 = vpack.i.b16 %v1606, %v1606
      %v2472 = vlaneseq
      %v2473 = vshrl.u32 %v2472, 7
      %v2474 = vsub.s32 0, %v2473
      %v2475 = vrot.slane %v2470, %v2474
      %v2477 = vpack.i.b16 %v1610, %v1610
      %v2479 = vlaneseq
      %v2480 = vshrl.u32 %v2479, 7
      %v2481 = vsub.s32 0, %v2480
      %v2482 = vrot.slane %v2477, %v2481
      %v2484 = vpack.i.b16 %v1614, %v1614
      %v2486 = vlaneseq
      %v2487 = vshrl.u32 %v2486, 7
      %v2488 = vsub.s32 0, %v2487
      %v2489 = vrot.slane %v2484, %v2488
      %v2491 = vpack.i.b16 %v1618, %v1618
      %v2493 = vlaneseq
      %v2494 = vshrl.u32 %v2493, 7
      %v2495 = vsub.s32 0, %v2494
      %v2496 = vrot.slane %v2491, %v2495
      %v2498 = vpack.i.b16 %v1622, %v1622
      %v2500 = vlaneseq
      %v2501 = vshrl.u32 %v2500, 7
      %v2502 = vsub.s32 0, %v2501
      %v2503 = vrot.slane %v2498, %v2502
      %v2505 = vpack.i.b16 %v1626, %v1626
      %v2507 = vlaneseq
      %v2508 = vshrl.u32 %v2507, 7
      %v2509 = vsub.s32 0, %v2508
      %v2510 = vrot.slane %v2505, %v2509
      %v2512 = vpack.i.b16 %v1630, %v1630
      %v2514 = vlaneseq
      %v2515 = vshrl.u32 %v2514, 7
      %v2516 = vsub.s32 0, %v2515
      %v2517 = vrot.slane %v2512, %v2516
      %v2519 = vpack.i.b16 %v1634, %v1634
      %v2521 = vlaneseq
      %v2522 = vshrl.u32 %v2521, 7
      %v2523 = vsub.s32 0, %v2522
      %v2524 = vrot.slane %v2519, %v2523
      %v2526 = vpack.i.b16 %v1638, %v1638
      %v2528 = vlaneseq
      %v2529 = vshrl.u32 %v2528, 7
      %v2530 = vsub.s32 0, %v2529
      %v2531 = vrot.slane %v2526, %v2530
      %v2533 = vpack.i.b16 %v1642, %v1642
      %v2535 = vlaneseq
      %v2536 = vshrl.u32 %v2535, 7
      %v2537 = vsub.s32 0, %v2536
      %v2538 = vrot.slane %v2533, %v2537
      %v2541 = vunpack.c.l.b16 %v1001
      %v2542 = vunpack.c.l.b16 %v1002
      %v2543 = vpack.c.b16 %v2542, %v2541
      %v2545 = vadd.bf16 %v1649, %v2543
      %v2546 = vadd.bf16 %v1656, %v2543
      %v2547 = vadd.bf16 %v1663, %v2543
      %v2548 = vadd.bf16 %v1670, %v2543
      %v2549 = vadd.bf16 %v1677, %v2543
      %v2550 = vadd.bf16 %v1684, %v2543
      %v2551 = vadd.bf16 %v1691, %v2543
      %v2552 = vadd.bf16 %v1698, %v2543
      %v2553 = vadd.bf16 %v1705, %v2543
      %v2554 = vadd.bf16 %v1712, %v2543
      %v2555 = vadd.bf16 %v1719, %v2543
      %v2556 = vadd.bf16 %v1726, %v2543
      %v2557 = vadd.bf16 %v1733, %v2543
      %v2558 = vadd.bf16 %v1740, %v2543
      %v2559 = vadd.bf16 %v1747, %v2543
      %v2560 = vadd.bf16 %v1754, %v2543
      %v2561 = vadd.bf16 %v1761, %v2543
      %v2562 = vadd.bf16 %v1768, %v2543
      %v2563 = vadd.bf16 %v1775, %v2543
      %v2564 = vadd.bf16 %v1782, %v2543
      %v2565 = vadd.bf16 %v1789, %v2543
      %v2566 = vadd.bf16 %v1796, %v2543
      %v2567 = vadd.bf16 %v1803, %v2543
      %v2568 = vadd.bf16 %v1810, %v2543
      %v2569 = vadd.bf16 %v1817, %v2543
      %v2570 = vadd.bf16 %v1824, %v2543
      %v2571 = vadd.bf16 %v1831, %v2543
      %v2572 = vadd.bf16 %v1838, %v2543
      %v2573 = vadd.bf16 %v1845, %v2543
      %v2574 = vadd.bf16 %v1852, %v2543
      %v2575 = vadd.bf16 %v1859, %v2543
      %v2576 = vadd.bf16 %v1866, %v2543
      %v2577 = vadd.bf16 %v1873, %v2543
      %v2578 = vadd.bf16 %v1880, %v2543
      %v2579 = vadd.bf16 %v1887, %v2543
      %v2580 = vadd.bf16 %v1894, %v2543
      %v2581 = vadd.bf16 %v1901, %v2543
      %v2582 = vadd.bf16 %v1908, %v2543
      %v2583 = vadd.bf16 %v1915, %v2543
      %v2584 = vadd.bf16 %v1922, %v2543
      %v2585 = vadd.bf16 %v1929, %v2543
      %v2586 = vadd.bf16 %v1936, %v2543
      %v2587 = vadd.bf16 %v1943, %v2543
      %v2588 = vadd.bf16 %v1950, %v2543
      %v2589 = vadd.bf16 %v1957, %v2543
      %v2590 = vadd.bf16 %v1964, %v2543
      %v2591 = vadd.bf16 %v1971, %v2543
      %v2592 = vadd.bf16 %v1978, %v2543
      %v2593 = vadd.bf16 %v1985, %v2543
      %v2594 = vadd.bf16 %v1992, %v2543
      %v2595 = vadd.bf16 %v1999, %v2543
      %v2596 = vadd.bf16 %v2006, %v2543
      %v2597 = vadd.bf16 %v2013, %v2543
      %v2598 = vadd.bf16 %v2020, %v2543
      %v2599 = vadd.bf16 %v2027, %v2543
      %v2600 = vadd.bf16 %v2034, %v2543
      %v2601 = vadd.bf16 %v2041, %v2543
      %v2602 = vadd.bf16 %v2048, %v2543
      %v2603 = vadd.bf16 %v2055, %v2543
      %v2604 = vadd.bf16 %v2062, %v2543
      %v2605 = vadd.bf16 %v2069, %v2543
      %v2606 = vadd.bf16 %v2076, %v2543
      %v2607 = vadd.bf16 %v2083, %v2543
      %v2608 = vadd.bf16 %v2090, %v2543
      %v2609 = vadd.bf16 %v2097, %v2543
      %v2610 = vadd.bf16 %v2104, %v2543
      %v2611 = vadd.bf16 %v2111, %v2543
      %v2612 = vadd.bf16 %v2118, %v2543
      %v2613 = vadd.bf16 %v2125, %v2543
      %v2614 = vadd.bf16 %v2132, %v2543
      %v2615 = vadd.bf16 %v2139, %v2543
      %v2616 = vadd.bf16 %v2146, %v2543
      %v2617 = vadd.bf16 %v2153, %v2543
      %v2618 = vadd.bf16 %v2160, %v2543
      %v2619 = vadd.bf16 %v2167, %v2543
      %v2620 = vadd.bf16 %v2174, %v2543
      %v2621 = vadd.bf16 %v2181, %v2543
      %v2622 = vadd.bf16 %v2188, %v2543
      %v2623 = vadd.bf16 %v2195, %v2543
      %v2624 = vadd.bf16 %v2202, %v2543
      %v2625 = vadd.bf16 %v2209, %v2543
      %v2626 = vadd.bf16 %v2216, %v2543
      %v2627 = vadd.bf16 %v2223, %v2543
      %v2628 = vadd.bf16 %v2230, %v2543
      %v2629 = vadd.bf16 %v2237, %v2543
      %v2630 = vadd.bf16 %v2244, %v2543
      %v2631 = vadd.bf16 %v2251, %v2543
      %v2632 = vadd.bf16 %v2258, %v2543
      %v2633 = vadd.bf16 %v2265, %v2543
      %v2634 = vadd.bf16 %v2272, %v2543
      %v2635 = vadd.bf16 %v2279, %v2543
      %v2636 = vadd.bf16 %v2286, %v2543
      %v2637 = vadd.bf16 %v2293, %v2543
      %v2638 = vadd.bf16 %v2300, %v2543
      %v2639 = vadd.bf16 %v2307, %v2543
      %v2640 = vadd.bf16 %v2314, %v2543
      %v2641 = vadd.bf16 %v2321, %v2543
      %v2642 = vadd.bf16 %v2328, %v2543
      %v2643 = vadd.bf16 %v2335, %v2543
      %v2644 = vadd.bf16 %v2342, %v2543
      %v2645 = vadd.bf16 %v2349, %v2543
      %v2646 = vadd.bf16 %v2356, %v2543
      %v2647 = vadd.bf16 %v2363, %v2543
      %v2648 = vadd.bf16 %v2370, %v2543
      %v2649 = vadd.bf16 %v2377, %v2543
      %v2650 = vadd.bf16 %v2384, %v2543
      %v2651 = vadd.bf16 %v2391, %v2543
      %v2652 = vadd.bf16 %v2398, %v2543
      %v2653 = vadd.bf16 %v2405, %v2543
      %v2654 = vadd.bf16 %v2412, %v2543
      %v2655 = vadd.bf16 %v2419, %v2543
      %v2656 = vadd.bf16 %v2426, %v2543
      %v2657 = vadd.bf16 %v2433, %v2543
      %v2658 = vadd.bf16 %v2440, %v2543
      %v2659 = vadd.bf16 %v2447, %v2543
      %v2660 = vadd.bf16 %v2454, %v2543
      %v2661 = vadd.bf16 %v2461, %v2543
      %v2662 = vadd.bf16 %v2468, %v2543
      %v2663 = vadd.bf16 %v2475, %v2543
      %v2664 = vadd.bf16 %v2482, %v2543
      %v2665 = vadd.bf16 %v2489, %v2543
      %v2666 = vadd.bf16 %v2496, %v2543
      %v2667 = vadd.bf16 %v2503, %v2543
      %v2668 = vadd.bf16 %v2510, %v2543
      %v2669 = vadd.bf16 %v2517, %v2543
      %v2670 = vadd.bf16 %v2524, %v2543
      %v2671 = vadd.bf16 %v2531, %v2543
      %v2672 = vadd.bf16 %v2538, %v2543
      %v2673 = vmax.bf16 %v2545, 0
      %v2674 = vmax.bf16 %v2546, 0
      %v2675 = vmax.bf16 %v2547, 0
      %v2676 = vmax.bf16 %v2548, 0
      %v2677 = vmax.bf16 %v2549, 0
      %v2678 = vmax.bf16 %v2550, 0
      %v2679 = vmax.bf16 %v2551, 0
      %v2680 = vmax.bf16 %v2552, 0
      %v2681 = vmax.bf16 %v2553, 0
      %v2682 = vmax.bf16 %v2554, 0
      %v2683 = vmax.bf16 %v2555, 0
      %v2684 = vmax.bf16 %v2556, 0
      %v2685 = vmax.bf16 %v2557, 0
      %v2686 = vmax.bf16 %v2558, 0
      %v2687 = vmax.bf16 %v2559, 0
      %v2688 = vmax.bf16 %v2560, 0
      %v2689 = vmax.bf16 %v2561, 0
      %v2690 = vmax.bf16 %v2562, 0
      %v2691 = vmax.bf16 %v2563, 0
      %v2692 = vmax.bf16 %v2564, 0
      %v2693 = vmax.bf16 %v2565, 0
      %v2694 = vmax.bf16 %v2566, 0
      %v2695 = vmax.bf16 %v2567, 0
      %v2696 = vmax.bf16 %v2568, 0
      %v2697 = vmax.bf16 %v2569, 0
      %v2698 = vmax.bf16 %v2570, 0
      %v2699 = vmax.bf16 %v2571, 0
      %v2700 = vmax.bf16 %v2572, 0
      %v2701 = vmax.bf16 %v2573, 0
      %v2702 = vmax.bf16 %v2574, 0
      %v2703 = vmax.bf16 %v2575, 0
      %v2704 = vmax.bf16 %v2576, 0
      %v2705 = vmax.bf16 %v2577, 0
      %v2706 = vmax.bf16 %v2578, 0
      %v2707 = vmax.bf16 %v2579, 0
      %v2708 = vmax.bf16 %v2580, 0
      %v2709 = vmax.bf16 %v2581, 0
      %v2710 = vmax.bf16 %v2582, 0
      %v2711 = vmax.bf16 %v2583, 0
      %v2712 = vmax.bf16 %v2584, 0
      %v2713 = vmax.bf16 %v2585, 0
      %v2714 = vmax.bf16 %v2586, 0
      %v2715 = vmax.bf16 %v2587, 0
      %v2716 = vmax.bf16 %v2588, 0
      %v2717 = vmax.bf16 %v2589, 0
      %v2718 = vmax.bf16 %v2590, 0
      %v2719 = vmax.bf16 %v2591, 0
      %v2720 = vmax.bf16 %v2592, 0
      %v2721 = vmax.bf16 %v2593, 0
      %v2722 = vmax.bf16 %v2594, 0
      %v2723 = vmax.bf16 %v2595, 0
      %v2724 = vmax.bf16 %v2596, 0
      %v2725 = vmax.bf16 %v2597, 0
      %v2726 = vmax.bf16 %v2598, 0
      %v2727 = vmax.bf16 %v2599, 0
      %v2728 = vmax.bf16 %v2600, 0
      %v2729 = vmax.bf16 %v2601, 0
      %v2730 = vmax.bf16 %v2602, 0
      %v2731 = vmax.bf16 %v2603, 0
      %v2732 = vmax.bf16 %v2604, 0
      %v2733 = vmax.bf16 %v2605, 0
      %v2734 = vmax.bf16 %v2606, 0
      %v2735 = vmax.bf16 %v2607, 0
      %v2736 = vmax.bf16 %v2608, 0
      %v2737 = vmax.bf16 %v2609, 0
      %v2738 = vmax.bf16 %v2610, 0
      %v2739 = vmax.bf16 %v2611, 0
      %v2740 = vmax.bf16 %v2612, 0
      %v2741 = vmax.bf16 %v2613, 0
      %v2742 = vmax.bf16 %v2614, 0
      %v2743 = vmax.bf16 %v2615, 0
      %v2744 = vmax.bf16 %v2616, 0
      %v2745 = vmax.bf16 %v2617, 0
      %v2746 = vmax.bf16 %v2618, 0
      %v2747 = vmax.bf16 %v2619, 0
      %v2748 = vmax.bf16 %v2620, 0
      %v2749 = vmax.bf16 %v2621, 0
      %v2750 = vmax.bf16 %v2622, 0
      %v2751 = vmax.bf16 %v2623, 0
      %v2752 = vmax.bf16 %v2624, 0
      %v2753 = vmax.bf16 %v2625, 0
      %v2754 = vmax.bf16 %v2626, 0
      %v2755 = vmax.bf16 %v2627, 0
      %v2756 = vmax.bf16 %v2628, 0
      %v2757 = vmax.bf16 %v2629, 0
      %v2758 = vmax.bf16 %v2630, 0
      %v2759 = vmax.bf16 %v2631, 0
      %v2760 = vmax.bf16 %v2632, 0
      %v2761 = vmax.bf16 %v2633, 0
      %v2762 = vmax.bf16 %v2634, 0
      %v2763 = vmax.bf16 %v2635, 0
      %v2764 = vmax.bf16 %v2636, 0
      %v2765 = vmax.bf16 %v2637, 0
      %v2766 = vmax.bf16 %v2638, 0
      %v2767 = vmax.bf16 %v2639, 0
      %v2768 = vmax.bf16 %v2640, 0
      %v2769 = vmax.bf16 %v2641, 0
      %v2770 = vmax.bf16 %v2642, 0
      %v2771 = vmax.bf16 %v2643, 0
      %v2772 = vmax.bf16 %v2644, 0
      %v2773 = vmax.bf16 %v2645, 0
      %v2774 = vmax.bf16 %v2646, 0
      %v2775 = vmax.bf16 %v2647, 0
      %v2776 = vmax.bf16 %v2648, 0
      %v2777 = vmax.bf16 %v2649, 0
      %v2778 = vmax.bf16 %v2650, 0
      %v2779 = vmax.bf16 %v2651, 0
      %v2780 = vmax.bf16 %v2652, 0
      %v2781 = vmax.bf16 %v2653, 0
      %v2782 = vmax.bf16 %v2654, 0
      %v2783 = vmax.bf16 %v2655, 0
      %v2784 = vmax.bf16 %v2656, 0
      %v2785 = vmax.bf16 %v2657, 0
      %v2786 = vmax.bf16 %v2658, 0
      %v2787 = vmax.bf16 %v2659, 0
      %v2788 = vmax.bf16 %v2660, 0
      %v2789 = vmax.bf16 %v2661, 0
      %v2790 = vmax.bf16 %v2662, 0
      %v2791 = vmax.bf16 %v2663, 0
      %v2792 = vmax.bf16 %v2664, 0
      %v2793 = vmax.bf16 %v2665, 0
      %v2794 = vmax.bf16 %v2666, 0
      %v2795 = vmax.bf16 %v2667, 0
      %v2796 = vmax.bf16 %v2668, 0
      %v2797 = vmax.bf16 %v2669, 0
      %v2798 = vmax.bf16 %v2670, 0
      %v2799 = vmax.bf16 %v2671, 0
      %v2800 = vmax.bf16 %v2672, 0
      %v2801 = vld [vmem:[%s3] sm:$0xf]
      %v2802 = vld [vmem:[%s3 + $0x4] sm:$0xf]
      %v2803 = vld [vmem:[%s3 + $0x8] sm:$0xf]
      %v2804 = vld [vmem:[%s3 + $0xc] sm:$0xf]
      %v2805 = vld [vmem:[%s3 + $0x10] sm:$0xf]
      %v2806 = vld [vmem:[%s3 + $0x14] sm:$0xf]
      %v2807 = vld [vmem:[%s3 + $0x18] sm:$0xf]
      %v2808 = vld [vmem:[%s3 + $0x1c] sm:$0xf]
      %v2809 = vld [vmem:[%s3 + $0x20] sm:$0xf]
      %v2810 = vld [vmem:[%s3 + $0x24] sm:$0xf]
      %v2811 = vld [vmem:[%s3 + $0x28] sm:$0xf]
      %v2812 = vld [vmem:[%s3 + $0x2c] sm:$0xf]
      %v2813 = vld [vmem:[%s3 + $0x30] sm:$0xf]
      %v2814 = vld [vmem:[%s3 + $0x34] sm:$0xf]
      %v2815 = vld [vmem:[%s3 + $0x38] sm:$0xf]
      %v2816 = vld [vmem:[%s3 + $0x3c] sm:$0xf]
      %v2817 = vld [vmem:[%s4] sm:$0x1]
      %v2819 = vlaneseq
      %v2820 = vshrl.u32 %v2819, 7
      %v2821 = vsub.s32 0, %v2820
      %v2822 = vrot.slane %v2817, %v2821
      %v2840 = vunpack.c.l.b16 %v2801
      %v2841 = vunpack.c.l.b16 %v2802
      %v2842 = vunpack.c.l.b16 %v2803
      %v2843 = vunpack.c.l.b16 %v2804
      %v2844 = vunpack.c.l.b16 %v2805
      %v2845 = vunpack.c.l.b16 %v2806
      %v2846 = vunpack.c.l.b16 %v2807
      %v2847 = vunpack.c.l.b16 %v2808
      %v2848 = vunpack.c.l.b16 %v2809
      %v2849 = vunpack.c.l.b16 %v2810
      %v2850 = vunpack.c.l.b16 %v2811
      %v2851 = vunpack.c.l.b16 %v2812
      %v2852 = vunpack.c.l.b16 %v2813
      %v2853 = vunpack.c.l.b16 %v2814
      %v2854 = vunpack.c.l.b16 %v2815
      %v2855 = vunpack.c.l.b16 %v2816
      %v2856 = vpack.c.b16 %v2841, %v2840
      %v2857 = vpack.c.b16 %v2843, %v2842
      %v2858 = vpack.c.b16 %v2845, %v2844
      %v2859 = vpack.c.b16 %v2847, %v2846
      %v2860 = vpack.c.b16 %v2849, %v2848
      %v2861 = vpack.c.b16 %v2851, %v2850
      %v2862 = vpack.c.b16 %v2853, %v2852
      %v2863 = vpack.c.b16 %v2855, %v2854
      %2872 = vmatprep.subr.bf16.mxu0 0
      %2873 = vmatpush1.bf16.msra.mxu0 %v2863
      %2874 = vmatprep.subr.bf16.mxu0 0
      %2875 = vmatpush1.bf16.msra.mxu0 %v2862
      %2876 = vmatprep.subr.bf16.mxu0 0
      %2877 = vmatpush1.bf16.msra.mxu0 %v2861
      %2878 = vmatprep.subr.bf16.mxu0 0
      %2879 = vmatpush1.bf16.msra.mxu0 %v2860
      %2880 = vmatprep.subr.bf16.mxu0 0
      %2881 = vmatpush1.bf16.msra.mxu0 %v2859
      %2882 = vmatprep.subr.bf16.mxu0 0
      %2883 = vmatpush1.bf16.msra.mxu0 %v2858
      %2884 = vmatprep.subr.bf16.mxu0 0
      %2885 = vmatpush1.bf16.msra.mxu0 %v2857
      %2886 = vmatprep.subr.bf16.mxu0 0
      %2887 = vmatpush1.bf16.msra.mxu0 %v2856
      %2888 = vmatprep.subr.bf16.mxu0 0
      %2889 = vmatpush2.bf16.msra.mxu0 0
      %2890 = vmatprep.subr.bf16.mxu0 0
      %2891 = vmatpush2.bf16.msra.mxu0 0
      %2892 = vmatprep.subr.bf16.mxu0 0
      %2893 = vmatpush2.bf16.msra.mxu0 0
      %2894 = vmatprep.subr.bf16.mxu0 0
      %2895 = vmatpush2.bf16.msra.mxu0 0
      %2896 = vmatprep.subr.bf16.mxu0 0
      %2897 = vmatpush2.bf16.msra.mxu0 0
      %2898 = vmatprep.subr.bf16.mxu0 0
      %2899 = vmatpush2.bf16.msra.mxu0 0
      %2900 = vmatprep.subr.bf16.mxu0 0
      %2901 = vmatpush2.bf16.msra.mxu0 0
      %2902 = vmatprep.subr.bf16.mxu0 0
      %2903 = vmatpush2.bf16.msra.mxu0 0
      %2904 = vmatprep.mubr.bf16.mxu0 0
      %2905 = vmatmul.mubr.bf16.gmra.mxu0 %v2673
      %v2906 = vpop.f32.mrf.mxu0
      %v2907 = vadd.f32 %v2822, %v2906
      %v2908 = vpop.f32.mrf.mxu0
      %v2909 = vpop.f32.mrf.mxu0
      %v2910 = vadd.f32 %v2822, %v2909
      %v2911 = vpop.f32.mrf.mxu0
      %2912 = vmatprep.mubr.bf16.mxu0 0
      %2913 = vmatmul.mubr.bf16.gmra.mxu0 %v2674
      %v2914 = vpop.f32.mrf.mxu0
      %v2915 = vadd.f32 %v2822, %v2914
      %v2916 = vpop.f32.mrf.mxu0
      %v2917 = vpop.f32.mrf.mxu0
      %v2918 = vadd.f32 %v2822, %v2917
      %v2919 = vpop.f32.mrf.mxu0
      %2920 = vmatprep.mubr.bf16.mxu0 0
      %2921 = vmatmul.mubr.bf16.gmra.mxu0 %v2675
      %v2922 = vpop.f32.mrf.mxu0
      %v2923 = vadd.f32 %v2822, %v2922
      %v2924 = vpop.f32.mrf.mxu0
      %v2925 = vpop.f32.mrf.mxu0
      %v2926 = vadd.f32 %v2822, %v2925
      %v2927 = vpop.f32.mrf.mxu0
      %2928 = vmatprep.mubr.bf16.mxu0 0
      %2929 = vmatmul.mubr.bf16.gmra.mxu0 %v2676
      %v2930 = vpop.f32.mrf.mxu0
      %v2931 = vadd.f32 %v2822, %v2930
      %v2932 = vpop.f32.mrf.mxu0
      %v2933 = vpop.f32.mrf.mxu0
      %v2934 = vadd.f32 %v2822, %v2933
      %v2935 = vpop.f32.mrf.mxu0
      %2936 = vmatprep.mubr.bf16.mxu0 0
      %2937 = vmatmul.mubr.bf16.gmra.mxu0 %v2677
      %v2938 = vpop.f32.mrf.mxu0
      %v2939 = vadd.f32 %v2822, %v2938
      %v2940 = vpop.f32.mrf.mxu0
      %v2941 = vpop.f32.mrf.mxu0
      %v2942 = vadd.f32 %v2822, %v2941
      %v2943 = vpop.f32.mrf.mxu0
      %2944 = vmatprep.mubr.bf16.mxu0 0
      %2945 = vmatmul.mubr.bf16.gmra.mxu0 %v2678
      %v2946 = vpop.f32.mrf.mxu0
      %v2947 = vadd.f32 %v2822, %v2946
      %v2948 = vpop.f32.mrf.mxu0
      %v2949 = vpop.f32.mrf.mxu0
      %v2950 = vadd.f32 %v2822, %v2949
      %v2951 = vpop.f32.mrf.mxu0
      %2952 = vmatprep.mubr.bf16.mxu0 0
      %2953 = vmatmul.mubr.bf16.gmra.mxu0 %v2679
      %v2954 = vpop.f32.mrf.mxu0
      %v2955 = vadd.f32 %v2822, %v2954
      %v2956 = vpop.f32.mrf.mxu0
      %v2957 = vpop.f32.mrf.mxu0
      %v2958 = vadd.f32 %v2822, %v2957
      %v2959 = vpop.f32.mrf.mxu0
      %2960 = vmatprep.mubr.bf16.mxu0 0
      %2961 = vmatmul.mubr.bf16.gmra.mxu0 %v2680
      %v2962 = vpop.f32.mrf.mxu0
      %v2963 = vadd.f32 %v2822, %v2962
      %v2964 = vpop.f32.mrf.mxu0
      %v2965 = vpop.f32.mrf.mxu0
      %v2966 = vadd.f32 %v2822, %v2965
      %v2967 = vpop.f32.mrf.mxu0
      %2968 = vmatprep.mubr.bf16.mxu0 0
      %2969 = vmatmul.mubr.bf16.gmra.mxu0 %v2681
      %v2970 = vpop.f32.mrf.mxu0
      %v2971 = vadd.f32 %v2822, %v2970
      %v2972 = vpop.f32.mrf.mxu0
      %v2973 = vpop.f32.mrf.mxu0
      %v2974 = vadd.f32 %v2822, %v2973
      %v2975 = vpop.f32.mrf.mxu0
      %2976 = vmatprep.mubr.bf16.mxu0 0
      %2977 = vmatmul.mubr.bf16.gmra.mxu0 %v2682
      %v2978 = vpop.f32.mrf.mxu0
      %v2979 = vadd.f32 %v2822, %v2978
      %v2980 = vpop.f32.mrf.mxu0
      %v2981 = vpop.f32.mrf.mxu0
      %v2982 = vadd.f32 %v2822, %v2981
      %v2983 = vpop.f32.mrf.mxu0
      %2984 = vmatprep.mubr.bf16.mxu0 0
      %2985 = vmatmul.mubr.bf16.gmra.mxu0 %v2683
      %v2986 = vpop.f32.mrf.mxu0
      %v2987 = vadd.f32 %v2822, %v2986
      %v2988 = vpop.f32.mrf.mxu0
      %v2989 = vpop.f32.mrf.mxu0
      %v2990 = vadd.f32 %v2822, %v2989
      %v2991 = vpop.f32.mrf.mxu0
      %2992 = vmatprep.mubr.bf16.mxu0 0
      %2993 = vmatmul.mubr.bf16.gmra.mxu0 %v2684
      %v2994 = vpop.f32.mrf.mxu0
      %v2995 = vadd.f32 %v2822, %v2994
      %v2996 = vpop.f32.mrf.mxu0
      %v2997 = vpop.f32.mrf.mxu0
      %v2998 = vadd.f32 %v2822, %v2997
      %v2999 = vpop.f32.mrf.mxu0
      %3000 = vmatprep.mubr.bf16.mxu0 0
      %3001 = vmatmul.mubr.bf16.gmra.mxu0 %v2685
      %v3002 = vpop.f32.mrf.mxu0
      %v3003 = vadd.f32 %v2822, %v3002
      %v3004 = vpop.f32.mrf.mxu0
      %v3005 = vpop.f32.mrf.mxu0
      %v3006 = vadd.f32 %v2822, %v3005
      %v3007 = vpop.f32.mrf.mxu0
      %3008 = vmatprep.mubr.bf16.mxu0 0
      %3009 = vmatmul.mubr.bf16.gmra.mxu0 %v2686
      %v3010 = vpop.f32.mrf.mxu0
      %v3011 = vadd.f32 %v2822, %v3010
      %v3012 = vpop.f32.mrf.mxu0
      %v3013 = vpop.f32.mrf.mxu0
      %v3014 = vadd.f32 %v2822, %v3013
      %v3015 = vpop.f32.mrf.mxu0
      %3016 = vmatprep.mubr.bf16.mxu0 0
      %3017 = vmatmul.mubr.bf16.gmra.mxu0 %v2687
      %v3018 = vpop.f32.mrf.mxu0
      %v3019 = vadd.f32 %v2822, %v3018
      %v3020 = vpop.f32.mrf.mxu0
      %v3021 = vpop.f32.mrf.mxu0
      %v3022 = vadd.f32 %v2822, %v3021
      %v3023 = vpop.f32.mrf.mxu0
      %3024 = vmatprep.mubr.bf16.mxu0 0
      %3025 = vmatmul.mubr.bf16.gmra.mxu0 %v2688
      %v3026 = vpop.f32.mrf.mxu0
      %v3027 = vadd.f32 %v2822, %v3026
      %v3028 = vpop.f32.mrf.mxu0
      %v3029 = vpop.f32.mrf.mxu0
      %v3030 = vadd.f32 %v2822, %v3029
      %v3031 = vpop.f32.mrf.mxu0
      %3032 = vmatprep.mubr.bf16.mxu0 0
      %3033 = vmatmul.mubr.bf16.gmra.mxu0 %v2689
      %v3034 = vpop.f32.mrf.mxu0
      %v3035 = vadd.f32 %v2822, %v3034
      %v3036 = vpop.f32.mrf.mxu0
      %v3037 = vpop.f32.mrf.mxu0
      %v3038 = vadd.f32 %v2822, %v3037
      %v3039 = vpop.f32.mrf.mxu0
      %3040 = vmatprep.mubr.bf16.mxu0 0
      %3041 = vmatmul.mubr.bf16.gmra.mxu0 %v2690
      %v3042 = vpop.f32.mrf.mxu0
      %v3043 = vadd.f32 %v2822, %v3042
      %v3044 = vpop.f32.mrf.mxu0
      %v3045 = vpop.f32.mrf.mxu0
      %v3046 = vadd.f32 %v2822, %v3045
      %v3047 = vpop.f32.mrf.mxu0
      %3048 = vmatprep.mubr.bf16.mxu0 0
      %3049 = vmatmul.mubr.bf16.gmra.mxu0 %v2691
      %v3050 = vpop.f32.mrf.mxu0
      %v3051 = vadd.f32 %v2822, %v3050
      %v3052 = vpop.f32.mrf.mxu0
      %v3053 = vpop.f32.mrf.mxu0
      %v3054 = vadd.f32 %v2822, %v3053
      %v3055 = vpop.f32.mrf.mxu0
      %3056 = vmatprep.mubr.bf16.mxu0 0
      %3057 = vmatmul.mubr.bf16.gmra.mxu0 %v2692
      %v3058 = vpop.f32.mrf.mxu0
      %v3059 = vadd.f32 %v2822, %v3058
      %v3060 = vpop.f32.mrf.mxu0
      %v3061 = vpop.f32.mrf.mxu0
      %v3062 = vadd.f32 %v2822, %v3061
      %v3063 = vpop.f32.mrf.mxu0
      %3064 = vmatprep.mubr.bf16.mxu0 0
      %3065 = vmatmul.mubr.bf16.gmra.mxu0 %v2693
      %v3066 = vpop.f32.mrf.mxu0
      %v3067 = vadd.f32 %v2822, %v3066
      %v3068 = vpop.f32.mrf.mxu0
      %v3069 = vpop.f32.mrf.mxu0
      %v3070 = vadd.f32 %v2822, %v3069
      %v3071 = vpop.f32.mrf.mxu0
      %3072 = vmatprep.mubr.bf16.mxu0 0
      %3073 = vmatmul.mubr.bf16.gmra.mxu0 %v2694
      %v3074 = vpop.f32.mrf.mxu0
      %v3075 = vadd.f32 %v2822, %v3074
      %v3076 = vpop.f32.mrf.mxu0
      %v3077 = vpop.f32.mrf.mxu0
      %v3078 = vadd.f32 %v2822, %v3077
      %v3079 = vpop.f32.mrf.mxu0
      %3080 = vmatprep.mubr.bf16.mxu0 0
      %3081 = vmatmul.mubr.bf16.gmra.mxu0 %v2695
      %v3082 = vpop.f32.mrf.mxu0
      %v3083 = vadd.f32 %v2822, %v3082
      %v3084 = vpop.f32.mrf.mxu0
      %v3085 = vpop.f32.mrf.mxu0
      %v3086 = vadd.f32 %v2822, %v3085
      %v3087 = vpop.f32.mrf.mxu0
      %3088 = vmatprep.mubr.bf16.mxu0 0
      %3089 = vmatmul.mubr.bf16.gmra.mxu0 %v2696
      %v3090 = vpop.f32.mrf.mxu0
      %v3091 = vadd.f32 %v2822, %v3090
      %v3092 = vpop.f32.mrf.mxu0
      %v3093 = vpop.f32.mrf.mxu0
      %v3094 = vadd.f32 %v2822, %v3093
      %v3095 = vpop.f32.mrf.mxu0
      %3096 = vmatprep.mubr.bf16.mxu0 0
      %3097 = vmatmul.mubr.bf16.gmra.mxu0 %v2697
      %v3098 = vpop.f32.mrf.mxu0
      %v3099 = vadd.f32 %v2822, %v3098
      %v3100 = vpop.f32.mrf.mxu0
      %v3101 = vpop.f32.mrf.mxu0
      %v3102 = vadd.f32 %v2822, %v3101
      %v3103 = vpop.f32.mrf.mxu0
      %3104 = vmatprep.mubr.bf16.mxu0 0
      %3105 = vmatmul.mubr.bf16.gmra.mxu0 %v2698
      %v3106 = vpop.f32.mrf.mxu0
      %v3107 = vadd.f32 %v2822, %v3106
      %v3108 = vpop.f32.mrf.mxu0
      %v3109 = vpop.f32.mrf.mxu0
      %v3110 = vadd.f32 %v2822, %v3109
      %v3111 = vpop.f32.mrf.mxu0
      %3112 = vmatprep.mubr.bf16.mxu0 0
      %3113 = vmatmul.mubr.bf16.gmra.mxu0 %v2699
      %v3114 = vpop.f32.mrf.mxu0
      %v3115 = vadd.f32 %v2822, %v3114
      %v3116 = vpop.f32.mrf.mxu0
      %v3117 = vpop.f32.mrf.mxu0
      %v3118 = vadd.f32 %v2822, %v3117
      %v3119 = vpop.f32.mrf.mxu0
      %3120 = vmatprep.mubr.bf16.mxu0 0
      %3121 = vmatmul.mubr.bf16.gmra.mxu0 %v2700
      %v3122 = vpop.f32.mrf.mxu0
      %v3123 = vadd.f32 %v2822, %v3122
      %v3124 = vpop.f32.mrf.mxu0
      %v3125 = vpop.f32.mrf.mxu0
      %v3126 = vadd.f32 %v2822, %v3125
      %v3127 = vpop.f32.mrf.mxu0
      %3128 = vmatprep.mubr.bf16.mxu0 0
      %3129 = vmatmul.mubr.bf16.gmra.mxu0 %v2701
      %v3130 = vpop.f32.mrf.mxu0
      %v3131 = vadd.f32 %v2822, %v3130
      %v3132 = vpop.f32.mrf.mxu0
      %v3133 = vpop.f32.mrf.mxu0
      %v3134 = vadd.f32 %v2822, %v3133
      %v3135 = vpop.f32.mrf.mxu0
      %3136 = vmatprep.mubr.bf16.mxu0 0
      %3137 = vmatmul.mubr.bf16.gmra.mxu0 %v2702
      %v3138 = vpop.f32.mrf.mxu0
      %v3139 = vadd.f32 %v2822, %v3138
      %v3140 = vpop.f32.mrf.mxu0
      %v3141 = vpop.f32.mrf.mxu0
      %v3142 = vadd.f32 %v2822, %v3141
      %v3143 = vpop.f32.mrf.mxu0
      %3144 = vmatprep.mubr.bf16.mxu0 0
      %3145 = vmatmul.mubr.bf16.gmra.mxu0 %v2703
      %v3146 = vpop.f32.mrf.mxu0
      %v3147 = vadd.f32 %v2822, %v3146
      %v3148 = vpop.f32.mrf.mxu0
      %v3149 = vpop.f32.mrf.mxu0
      %v3150 = vadd.f32 %v2822, %v3149
      %v3151 = vpop.f32.mrf.mxu0
      %3152 = vmatprep.mubr.bf16.mxu0 0
      %3153 = vmatmul.mubr.bf16.gmra.mxu0 %v2704
      %v3154 = vpop.f32.mrf.mxu0
      %v3155 = vadd.f32 %v2822, %v3154
      %v3156 = vpop.f32.mrf.mxu0
      %v3157 = vpop.f32.mrf.mxu0
      %v3158 = vadd.f32 %v2822, %v3157
      %v3159 = vpop.f32.mrf.mxu0
      %3160 = vmatprep.mubr.bf16.mxu0 0
      %3161 = vmatmul.mubr.bf16.gmra.mxu0 %v2705
      %v3162 = vpop.f32.mrf.mxu0
      %v3163 = vadd.f32 %v2822, %v3162
      %v3164 = vpop.f32.mrf.mxu0
      %v3165 = vpop.f32.mrf.mxu0
      %v3166 = vadd.f32 %v2822, %v3165
      %v3167 = vpop.f32.mrf.mxu0
      %3168 = vmatprep.mubr.bf16.mxu0 0
      %3169 = vmatmul.mubr.bf16.gmra.mxu0 %v2706
      %v3170 = vpop.f32.mrf.mxu0
      %v3171 = vadd.f32 %v2822, %v3170
      %v3172 = vpop.f32.mrf.mxu0
      %v3173 = vpop.f32.mrf.mxu0
      %v3174 = vadd.f32 %v2822, %v3173
      %v3175 = vpop.f32.mrf.mxu0
      %3176 = vmatprep.mubr.bf16.mxu0 0
      %3177 = vmatmul.mubr.bf16.gmra.mxu0 %v2707
      %v3178 = vpop.f32.mrf.mxu0
      %v3179 = vadd.f32 %v2822, %v3178
      %v3180 = vpop.f32.mrf.mxu0
      %v3181 = vpop.f32.mrf.mxu0
      %v3182 = vadd.f32 %v2822, %v3181
      %v3183 = vpop.f32.mrf.mxu0
      %3184 = vmatprep.mubr.bf16.mxu0 0
      %3185 = vmatmul.mubr.bf16.gmra.mxu0 %v2708
      %v3186 = vpop.f32.mrf.mxu0
      %v3187 = vadd.f32 %v2822, %v3186
      %v3188 = vpop.f32.mrf.mxu0
      %v3189 = vpop.f32.mrf.mxu0
      %v3190 = vadd.f32 %v2822, %v3189
      %v3191 = vpop.f32.mrf.mxu0
      %3192 = vmatprep.mubr.bf16.mxu0 0
      %3193 = vmatmul.mubr.bf16.gmra.mxu0 %v2709
      %v3194 = vpop.f32.mrf.mxu0
      %v3195 = vadd.f32 %v2822, %v3194
      %v3196 = vpop.f32.mrf.mxu0
      %v3197 = vpop.f32.mrf.mxu0
      %v3198 = vadd.f32 %v2822, %v3197
      %v3199 = vpop.f32.mrf.mxu0
      %3200 = vmatprep.mubr.bf16.mxu0 0
      %3201 = vmatmul.mubr.bf16.gmra.mxu0 %v2710
      %v3202 = vpop.f32.mrf.mxu0
      %v3203 = vadd.f32 %v2822, %v3202
      %v3204 = vpop.f32.mrf.mxu0
      %v3205 = vpop.f32.mrf.mxu0
      %v3206 = vadd.f32 %v2822, %v3205
      %v3207 = vpop.f32.mrf.mxu0
      %3208 = vmatprep.mubr.bf16.mxu0 0
      %3209 = vmatmul.mubr.bf16.gmra.mxu0 %v2711
      %v3210 = vpop.f32.mrf.mxu0
      %v3211 = vadd.f32 %v2822, %v3210
      %v3212 = vpop.f32.mrf.mxu0
      %v3213 = vpop.f32.mrf.mxu0
      %v3214 = vadd.f32 %v2822, %v3213
      %v3215 = vpop.f32.mrf.mxu0
      %3216 = vmatprep.mubr.bf16.mxu0 0
      %3217 = vmatmul.mubr.bf16.gmra.mxu0 %v2712
      %v3218 = vpop.f32.mrf.mxu0
      %v3219 = vadd.f32 %v2822, %v3218
      %v3220 = vpop.f32.mrf.mxu0
      %v3221 = vpop.f32.mrf.mxu0
      %v3222 = vadd.f32 %v2822, %v3221
      %v3223 = vpop.f32.mrf.mxu0
      %3224 = vmatprep.mubr.bf16.mxu0 0
      %3225 = vmatmul.mubr.bf16.gmra.mxu0 %v2713
      %v3226 = vpop.f32.mrf.mxu0
      %v3227 = vadd.f32 %v2822, %v3226
      %v3228 = vpop.f32.mrf.mxu0
      %v3229 = vpop.f32.mrf.mxu0
      %v3230 = vadd.f32 %v2822, %v3229
      %v3231 = vpop.f32.mrf.mxu0
      %3232 = vmatprep.mubr.bf16.mxu0 0
      %3233 = vmatmul.mubr.bf16.gmra.mxu0 %v2714
      %v3234 = vpop.f32.mrf.mxu0
      %v3235 = vadd.f32 %v2822, %v3234
      %v3236 = vpop.f32.mrf.mxu0
      %v3237 = vpop.f32.mrf.mxu0
      %v3238 = vadd.f32 %v2822, %v3237
      %v3239 = vpop.f32.mrf.mxu0
      %3240 = vmatprep.mubr.bf16.mxu0 0
      %3241 = vmatmul.mubr.bf16.gmra.mxu0 %v2715
      %v3242 = vpop.f32.mrf.mxu0
      %v3243 = vadd.f32 %v2822, %v3242
      %v3244 = vpop.f32.mrf.mxu0
      %v3245 = vpop.f32.mrf.mxu0
      %v3246 = vadd.f32 %v2822, %v3245
      %v3247 = vpop.f32.mrf.mxu0
      %3248 = vmatprep.mubr.bf16.mxu0 0
      %3249 = vmatmul.mubr.bf16.gmra.mxu0 %v2716
      %v3250 = vpop.f32.mrf.mxu0
      %v3251 = vadd.f32 %v2822, %v3250
      %v3252 = vpop.f32.mrf.mxu0
      %v3253 = vpop.f32.mrf.mxu0
      %v3254 = vadd.f32 %v2822, %v3253
      %v3255 = vpop.f32.mrf.mxu0
      %3256 = vmatprep.mubr.bf16.mxu0 0
      %3257 = vmatmul.mubr.bf16.gmra.mxu0 %v2717
      %v3258 = vpop.f32.mrf.mxu0
      %v3259 = vadd.f32 %v2822, %v3258
      %v3260 = vpop.f32.mrf.mxu0
      %v3261 = vpop.f32.mrf.mxu0
      %v3262 = vadd.f32 %v2822, %v3261
      %v3263 = vpop.f32.mrf.mxu0
      %3264 = vmatprep.mubr.bf16.mxu0 0
      %3265 = vmatmul.mubr.bf16.gmra.mxu0 %v2718
      %v3266 = vpop.f32.mrf.mxu0
      %v3267 = vadd.f32 %v2822, %v3266
      %v3268 = vpop.f32.mrf.mxu0
      %v3269 = vpop.f32.mrf.mxu0
      %v3270 = vadd.f32 %v2822, %v3269
      %v3271 = vpop.f32.mrf.mxu0
      %3272 = vmatprep.mubr.bf16.mxu0 0
      %3273 = vmatmul.mubr.bf16.gmra.mxu0 %v2719
      %v3274 = vpop.f32.mrf.mxu0
      %v3275 = vadd.f32 %v2822, %v3274
      %v3276 = vpop.f32.mrf.mxu0
      %v3277 = vpop.f32.mrf.mxu0
      %v3278 = vadd.f32 %v2822, %v3277
      %v3279 = vpop.f32.mrf.mxu0
      %3280 = vmatprep.mubr.bf16.mxu0 0
      %3281 = vmatmul.mubr.bf16.gmra.mxu0 %v2720
      %v3282 = vpop.f32.mrf.mxu0
      %v3283 = vadd.f32 %v2822, %v3282
      %v3284 = vpop.f32.mrf.mxu0
      %v3285 = vpop.f32.mrf.mxu0
      %v3286 = vadd.f32 %v2822, %v3285
      %v3287 = vpop.f32.mrf.mxu0
      %3288 = vmatprep.mubr.bf16.mxu0 0
      %3289 = vmatmul.mubr.bf16.gmra.mxu0 %v2721
      %v3290 = vpop.f32.mrf.mxu0
      %v3291 = vadd.f32 %v2822, %v3290
      %v3292 = vpop.f32.mrf.mxu0
      %v3293 = vpop.f32.mrf.mxu0
      %v3294 = vadd.f32 %v2822, %v3293
      %v3295 = vpop.f32.mrf.mxu0
      %3296 = vmatprep.mubr.bf16.mxu0 0
      %3297 = vmatmul.mubr.bf16.gmra.mxu0 %v2722
      %v3298 = vpop.f32.mrf.mxu0
      %v3299 = vadd.f32 %v2822, %v3298
      %v3300 = vpop.f32.mrf.mxu0
      %v3301 = vpop.f32.mrf.mxu0
      %v3302 = vadd.f32 %v2822, %v3301
      %v3303 = vpop.f32.mrf.mxu0
      %3304 = vmatprep.mubr.bf16.mxu0 0
      %3305 = vmatmul.mubr.bf16.gmra.mxu0 %v2723
      %v3306 = vpop.f32.mrf.mxu0
      %v3307 = vadd.f32 %v2822, %v3306
      %v3308 = vpop.f32.mrf.mxu0
      %v3309 = vpop.f32.mrf.mxu0
      %v3310 = vadd.f32 %v2822, %v3309
      %v3311 = vpop.f32.mrf.mxu0
      %3312 = vmatprep.mubr.bf16.mxu0 0
      %3313 = vmatmul.mubr.bf16.gmra.mxu0 %v2724
      %v3314 = vpop.f32.mrf.mxu0
      %v3315 = vadd.f32 %v2822, %v3314
      %v3316 = vpop.f32.mrf.mxu0
      %v3317 = vpop.f32.mrf.mxu0
      %v3318 = vadd.f32 %v2822, %v3317
      %v3319 = vpop.f32.mrf.mxu0
      %3320 = vmatprep.mubr.bf16.mxu0 0
      %3321 = vmatmul.mubr.bf16.gmra.mxu0 %v2725
      %v3322 = vpop.f32.mrf.mxu0
      %v3323 = vadd.f32 %v2822, %v3322
      %v3324 = vpop.f32.mrf.mxu0
      %v3325 = vpop.f32.mrf.mxu0
      %v3326 = vadd.f32 %v2822, %v3325
      %v3327 = vpop.f32.mrf.mxu0
      %3328 = vmatprep.mubr.bf16.mxu0 0
      %3329 = vmatmul.mubr.bf16.gmra.mxu0 %v2726
      %v3330 = vpop.f32.mrf.mxu0
      %v3331 = vadd.f32 %v2822, %v3330
      %v3332 = vpop.f32.mrf.mxu0
      %v3333 = vpop.f32.mrf.mxu0
      %v3334 = vadd.f32 %v2822, %v3333
      %v3335 = vpop.f32.mrf.mxu0
      %3336 = vmatprep.mubr.bf16.mxu0 0
      %3337 = vmatmul.mubr.bf16.gmra.mxu0 %v2727
      %v3338 = vpop.f32.mrf.mxu0
      %v3339 = vadd.f32 %v2822, %v3338
      %v3340 = vpop.f32.mrf.mxu0
      %v3341 = vpop.f32.mrf.mxu0
      %v3342 = vadd.f32 %v2822, %v3341
      %v3343 = vpop.f32.mrf.mxu0
      %3344 = vmatprep.mubr.bf16.mxu0 0
      %3345 = vmatmul.mubr.bf16.gmra.mxu0 %v2728
      %v3346 = vpop.f32.mrf.mxu0
      %v3347 = vadd.f32 %v2822, %v3346
      %v3348 = vpop.f32.mrf.mxu0
      %v3349 = vpop.f32.mrf.mxu0
      %v3350 = vadd.f32 %v2822, %v3349
      %v3351 = vpop.f32.mrf.mxu0
      %3352 = vmatprep.mubr.bf16.mxu0 0
      %3353 = vmatmul.mubr.bf16.gmra.mxu0 %v2729
      %v3354 = vpop.f32.mrf.mxu0
      %v3355 = vadd.f32 %v2822, %v3354
      %v3356 = vpop.f32.mrf.mxu0
      %v3357 = vpop.f32.mrf.mxu0
      %v3358 = vadd.f32 %v2822, %v3357
      %v3359 = vpop.f32.mrf.mxu0
      %3360 = vmatprep.mubr.bf16.mxu0 0
      %3361 = vmatmul.mubr.bf16.gmra.mxu0 %v2730
      %v3362 = vpop.f32.mrf.mxu0
      %v3363 = vadd.f32 %v2822, %v3362
      %v3364 = vpop.f32.mrf.mxu0
      %v3365 = vpop.f32.mrf.mxu0
      %v3366 = vadd.f32 %v2822, %v3365
      %v3367 = vpop.f32.mrf.mxu0
      %3368 = vmatprep.mubr.bf16.mxu0 0
      %3369 = vmatmul.mubr.bf16.gmra.mxu0 %v2731
      %v3370 = vpop.f32.mrf.mxu0
      %v3371 = vadd.f32 %v2822, %v3370
      %v3372 = vpop.f32.mrf.mxu0
      %v3373 = vpop.f32.mrf.mxu0
      %v3374 = vadd.f32 %v2822, %v3373
      %v3375 = vpop.f32.mrf.mxu0
      %3376 = vmatprep.mubr.bf16.mxu0 0
      %3377 = vmatmul.mubr.bf16.gmra.mxu0 %v2732
      %v3378 = vpop.f32.mrf.mxu0
      %v3379 = vadd.f32 %v2822, %v3378
      %v3380 = vpop.f32.mrf.mxu0
      %v3381 = vpop.f32.mrf.mxu0
      %v3382 = vadd.f32 %v2822, %v3381
      %v3383 = vpop.f32.mrf.mxu0
      %3384 = vmatprep.mubr.bf16.mxu0 0
      %3385 = vmatmul.mubr.bf16.gmra.mxu0 %v2733
      %v3386 = vpop.f32.mrf.mxu0
      %v3387 = vadd.f32 %v2822, %v3386
      %v3388 = vpop.f32.mrf.mxu0
      %v3389 = vpop.f32.mrf.mxu0
      %v3390 = vadd.f32 %v2822, %v3389
      %v3391 = vpop.f32.mrf.mxu0
      %3392 = vmatprep.mubr.bf16.mxu0 0
      %3393 = vmatmul.mubr.bf16.gmra.mxu0 %v2734
      %v3394 = vpop.f32.mrf.mxu0
      %v3395 = vadd.f32 %v2822, %v3394
      %v3396 = vpop.f32.mrf.mxu0
      %v3397 = vpop.f32.mrf.mxu0
      %v3398 = vadd.f32 %v2822, %v3397
      %v3399 = vpop.f32.mrf.mxu0
      %3400 = vmatprep.mubr.bf16.mxu0 0
      %3401 = vmatmul.mubr.bf16.gmra.mxu0 %v2735
      %v3402 = vpop.f32.mrf.mxu0
      %v3403 = vadd.f32 %v2822, %v3402
      %v3404 = vpop.f32.mrf.mxu0
      %v3405 = vpop.f32.mrf.mxu0
      %v3406 = vadd.f32 %v2822, %v3405
      %v3407 = vpop.f32.mrf.mxu0
      %3408 = vmatprep.mubr.bf16.mxu0 0
      %3409 = vmatmul.mubr.bf16.gmra.mxu0 %v2736
      %v3410 = vpop.f32.mrf.mxu0
      %v3411 = vadd.f32 %v2822, %v3410
      %v3412 = vpop.f32.mrf.mxu0
      %v3413 = vpop.f32.mrf.mxu0
      %v3414 = vadd.f32 %v2822, %v3413
      %v3415 = vpop.f32.mrf.mxu0
      %3416 = vmatprep.mubr.bf16.mxu0 0
      %3417 = vmatmul.mubr.bf16.gmra.mxu0 %v2737
      %v3418 = vpop.f32.mrf.mxu0
      %v3419 = vadd.f32 %v2822, %v3418
      %v3420 = vpop.f32.mrf.mxu0
      %v3421 = vpop.f32.mrf.mxu0
      %v3422 = vadd.f32 %v2822, %v3421
      %v3423 = vpop.f32.mrf.mxu0
      %3424 = vmatprep.mubr.bf16.mxu0 0
      %3425 = vmatmul.mubr.bf16.gmra.mxu0 %v2738
      %v3426 = vpop.f32.mrf.mxu0
      %v3427 = vadd.f32 %v2822, %v3426
      %v3428 = vpop.f32.mrf.mxu0
      %v3429 = vpop.f32.mrf.mxu0
      %v3430 = vadd.f32 %v2822, %v3429
      %v3431 = vpop.f32.mrf.mxu0
      %3432 = vmatprep.mubr.bf16.mxu0 0
      %3433 = vmatmul.mubr.bf16.gmra.mxu0 %v2739
      %v3434 = vpop.f32.mrf.mxu0
      %v3435 = vadd.f32 %v2822, %v3434
      %v3436 = vpop.f32.mrf.mxu0
      %v3437 = vpop.f32.mrf.mxu0
      %v3438 = vadd.f32 %v2822, %v3437
      %v3439 = vpop.f32.mrf.mxu0
      %3440 = vmatprep.mubr.bf16.mxu0 0
      %3441 = vmatmul.mubr.bf16.gmra.mxu0 %v2740
      %v3442 = vpop.f32.mrf.mxu0
      %v3443 = vadd.f32 %v2822, %v3442
      %v3444 = vpop.f32.mrf.mxu0
      %v3445 = vpop.f32.mrf.mxu0
      %v3446 = vadd.f32 %v2822, %v3445
      %v3447 = vpop.f32.mrf.mxu0
      %3448 = vmatprep.mubr.bf16.mxu0 0
      %3449 = vmatmul.mubr.bf16.gmra.mxu0 %v2741
      %v3450 = vpop.f32.mrf.mxu0
      %v3451 = vadd.f32 %v2822, %v3450
      %v3452 = vpop.f32.mrf.mxu0
      %v3453 = vpop.f32.mrf.mxu0
      %v3454 = vadd.f32 %v2822, %v3453
      %v3455 = vpop.f32.mrf.mxu0
      %3456 = vmatprep.mubr.bf16.mxu0 0
      %3457 = vmatmul.mubr.bf16.gmra.mxu0 %v2742
      %v3458 = vpop.f32.mrf.mxu0
      %v3459 = vadd.f32 %v2822, %v3458
      %v3460 = vpop.f32.mrf.mxu0
      %v3461 = vpop.f32.mrf.mxu0
      %v3462 = vadd.f32 %v2822, %v3461
      %v3463 = vpop.f32.mrf.mxu0
      %3464 = vmatprep.mubr.bf16.mxu0 0
      %3465 = vmatmul.mubr.bf16.gmra.mxu0 %v2743
      %v3466 = vpop.f32.mrf.mxu0
      %v3467 = vadd.f32 %v2822, %v3466
      %v3468 = vpop.f32.mrf.mxu0
      %v3469 = vpop.f32.mrf.mxu0
      %v3470 = vadd.f32 %v2822, %v3469
      %v3471 = vpop.f32.mrf.mxu0
      %3472 = vmatprep.mubr.bf16.mxu0 0
      %3473 = vmatmul.mubr.bf16.gmra.mxu0 %v2744
      %v3474 = vpop.f32.mrf.mxu0
      %v3475 = vadd.f32 %v2822, %v3474
      %v3476 = vpop.f32.mrf.mxu0
      %v3477 = vpop.f32.mrf.mxu0
      %v3478 = vadd.f32 %v2822, %v3477
      %v3479 = vpop.f32.mrf.mxu0
      %3480 = vmatprep.mubr.bf16.mxu0 0
      %3481 = vmatmul.mubr.bf16.gmra.mxu0 %v2745
      %v3482 = vpop.f32.mrf.mxu0
      %v3483 = vadd.f32 %v2822, %v3482
      %v3484 = vpop.f32.mrf.mxu0
      %v3485 = vpop.f32.mrf.mxu0
      %v3486 = vadd.f32 %v2822, %v3485
      %v3487 = vpop.f32.mrf.mxu0
      %3488 = vmatprep.mubr.bf16.mxu0 0
      %3489 = vmatmul.mubr.bf16.gmra.mxu0 %v2746
      %v3490 = vpop.f32.mrf.mxu0
      %v3491 = vadd.f32 %v2822, %v3490
      %v3492 = vpop.f32.mrf.mxu0
      %v3493 = vpop.f32.mrf.mxu0
      %v3494 = vadd.f32 %v2822, %v3493
      %v3495 = vpop.f32.mrf.mxu0
      %3496 = vmatprep.mubr.bf16.mxu0 0
      %3497 = vmatmul.mubr.bf16.gmra.mxu0 %v2747
      %v3498 = vpop.f32.mrf.mxu0
      %v3499 = vadd.f32 %v2822, %v3498
      %v3500 = vpop.f32.mrf.mxu0
      %v3501 = vpop.f32.mrf.mxu0
      %v3502 = vadd.f32 %v2822, %v3501
      %v3503 = vpop.f32.mrf.mxu0
      %3504 = vmatprep.mubr.bf16.mxu0 0
      %3505 = vmatmul.mubr.bf16.gmra.mxu0 %v2748
      %v3506 = vpop.f32.mrf.mxu0
      %v3507 = vadd.f32 %v2822, %v3506
      %v3508 = vpop.f32.mrf.mxu0
      %v3509 = vpop.f32.mrf.mxu0
      %v3510 = vadd.f32 %v2822, %v3509
      %v3511 = vpop.f32.mrf.mxu0
      %3512 = vmatprep.mubr.bf16.mxu0 0
      %3513 = vmatmul.mubr.bf16.gmra.mxu0 %v2749
      %v3514 = vpop.f32.mrf.mxu0
      %v3515 = vadd.f32 %v2822, %v3514
      %v3516 = vpop.f32.mrf.mxu0
      %v3517 = vpop.f32.mrf.mxu0
      %v3518 = vadd.f32 %v2822, %v3517
      %v3519 = vpop.f32.mrf.mxu0
      %3520 = vmatprep.mubr.bf16.mxu0 0
      %3521 = vmatmul.mubr.bf16.gmra.mxu0 %v2750
      %v3522 = vpop.f32.mrf.mxu0
      %v3523 = vadd.f32 %v2822, %v3522
      %v3524 = vpop.f32.mrf.mxu0
      %v3525 = vpop.f32.mrf.mxu0
      %v3526 = vadd.f32 %v2822, %v3525
      %v3527 = vpop.f32.mrf.mxu0
      %3528 = vmatprep.mubr.bf16.mxu0 0
      %3529 = vmatmul.mubr.bf16.gmra.mxu0 %v2751
      %v3530 = vpop.f32.mrf.mxu0
      %v3531 = vadd.f32 %v2822, %v3530
      %v3532 = vpop.f32.mrf.mxu0
      %v3533 = vpop.f32.mrf.mxu0
      %v3534 = vadd.f32 %v2822, %v3533
      %v3535 = vpop.f32.mrf.mxu0
      %3536 = vmatprep.mubr.bf16.mxu0 0
      %3537 = vmatmul.mubr.bf16.gmra.mxu0 %v2752
      %v3538 = vpop.f32.mrf.mxu0
      %v3539 = vadd.f32 %v2822, %v3538
      %v3540 = vpop.f32.mrf.mxu0
      %v3541 = vpop.f32.mrf.mxu0
      %v3542 = vadd.f32 %v2822, %v3541
      %v3543 = vpop.f32.mrf.mxu0
      %3544 = vmatprep.mubr.bf16.mxu0 0
      %3545 = vmatmul.mubr.bf16.gmra.mxu0 %v2753
      %v3546 = vpop.f32.mrf.mxu0
      %v3547 = vadd.f32 %v2822, %v3546
      %v3548 = vpop.f32.mrf.mxu0
      %v3549 = vpop.f32.mrf.mxu0
      %v3550 = vadd.f32 %v2822, %v3549
      %v3551 = vpop.f32.mrf.mxu0
      %3552 = vmatprep.mubr.bf16.mxu0 0
      %3553 = vmatmul.mubr.bf16.gmra.mxu0 %v2754
      %v3554 = vpop.f32.mrf.mxu0
      %v3555 = vadd.f32 %v2822, %v3554
      %v3556 = vpop.f32.mrf.mxu0
      %v3557 = vpop.f32.mrf.mxu0
      %v3558 = vadd.f32 %v2822, %v3557
      %v3559 = vpop.f32.mrf.mxu0
      %3560 = vmatprep.mubr.bf16.mxu0 0
      %3561 = vmatmul.mubr.bf16.gmra.mxu0 %v2755
      %v3562 = vpop.f32.mrf.mxu0
      %v3563 = vadd.f32 %v2822, %v3562
      %v3564 = vpop.f32.mrf.mxu0
      %v3565 = vpop.f32.mrf.mxu0
      %v3566 = vadd.f32 %v2822, %v3565
      %v3567 = vpop.f32.mrf.mxu0
      %3568 = vmatprep.mubr.bf16.mxu0 0
      %3569 = vmatmul.mubr.bf16.gmra.mxu0 %v2756
      %v3570 = vpop.f32.mrf.mxu0
      %v3571 = vadd.f32 %v2822, %v3570
      %v3572 = vpop.f32.mrf.mxu0
      %v3573 = vpop.f32.mrf.mxu0
      %v3574 = vadd.f32 %v2822, %v3573
      %v3575 = vpop.f32.mrf.mxu0
      %3576 = vmatprep.mubr.bf16.mxu0 0
      %3577 = vmatmul.mubr.bf16.gmra.mxu0 %v2757
      %v3578 = vpop.f32.mrf.mxu0
      %v3579 = vadd.f32 %v2822, %v3578
      %v3580 = vpop.f32.mrf.mxu0
      %v3581 = vpop.f32.mrf.mxu0
      %v3582 = vadd.f32 %v2822, %v3581
      %v3583 = vpop.f32.mrf.mxu0
      %3584 = vmatprep.mubr.bf16.mxu0 0
      %3585 = vmatmul.mubr.bf16.gmra.mxu0 %v2758
      %v3586 = vpop.f32.mrf.mxu0
      %v3587 = vadd.f32 %v2822, %v3586
      %v3588 = vpop.f32.mrf.mxu0
      %v3589 = vpop.f32.mrf.mxu0
      %v3590 = vadd.f32 %v2822, %v3589
      %v3591 = vpop.f32.mrf.mxu0
      %3592 = vmatprep.mubr.bf16.mxu0 0
      %3593 = vmatmul.mubr.bf16.gmra.mxu0 %v2759
      %v3594 = vpop.f32.mrf.mxu0
      %v3595 = vadd.f32 %v2822, %v3594
      %v3596 = vpop.f32.mrf.mxu0
      %v3597 = vpop.f32.mrf.mxu0
      %v3598 = vadd.f32 %v2822, %v3597
      %v3599 = vpop.f32.mrf.mxu0
      %3600 = vmatprep.mubr.bf16.mxu0 0
      %3601 = vmatmul.mubr.bf16.gmra.mxu0 %v2760
      %v3602 = vpop.f32.mrf.mxu0
      %v3603 = vadd.f32 %v2822, %v3602
      %v3604 = vpop.f32.mrf.mxu0
      %v3605 = vpop.f32.mrf.mxu0
      %v3606 = vadd.f32 %v2822, %v3605
      %v3607 = vpop.f32.mrf.mxu0
      %3608 = vmatprep.mubr.bf16.mxu0 0
      %3609 = vmatmul.mubr.bf16.gmra.mxu0 %v2761
      %v3610 = vpop.f32.mrf.mxu0
      %v3611 = vadd.f32 %v2822, %v3610
      %v3612 = vpop.f32.mrf.mxu0
      %v3613 = vpop.f32.mrf.mxu0
      %v3614 = vadd.f32 %v2822, %v3613
      %v3615 = vpop.f32.mrf.mxu0
      %3616 = vmatprep.mubr.bf16.mxu0 0
      %3617 = vmatmul.mubr.bf16.gmra.mxu0 %v2762
      %v3618 = vpop.f32.mrf.mxu0
      %v3619 = vadd.f32 %v2822, %v3618
      %v3620 = vpop.f32.mrf.mxu0
      %v3621 = vpop.f32.mrf.mxu0
      %v3622 = vadd.f32 %v2822, %v3621
      %v3623 = vpop.f32.mrf.mxu0
      %3624 = vmatprep.mubr.bf16.mxu0 0
      %3625 = vmatmul.mubr.bf16.gmra.mxu0 %v2763
      %v3626 = vpop.f32.mrf.mxu0
      %v3627 = vadd.f32 %v2822, %v3626
      %v3628 = vpop.f32.mrf.mxu0
      %v3629 = vpop.f32.mrf.mxu0
      %v3630 = vadd.f32 %v2822, %v3629
      %v3631 = vpop.f32.mrf.mxu0
      %3632 = vmatprep.mubr.bf16.mxu0 0
      %3633 = vmatmul.mubr.bf16.gmra.mxu0 %v2764
      %v3634 = vpop.f32.mrf.mxu0
      %v3635 = vadd.f32 %v2822, %v3634
      %v3636 = vpop.f32.mrf.mxu0
      %v3637 = vpop.f32.mrf.mxu0
      %v3638 = vadd.f32 %v2822, %v3637
      %v3639 = vpop.f32.mrf.mxu0
      %3640 = vmatprep.mubr.bf16.mxu0 0
      %3641 = vmatmul.mubr.bf16.gmra.mxu0 %v2765
      %v3642 = vpop.f32.mrf.mxu0
      %v3643 = vadd.f32 %v2822, %v3642
      %v3644 = vpop.f32.mrf.mxu0
      %v3645 = vpop.f32.mrf.mxu0
      %v3646 = vadd.f32 %v2822, %v3645
      %v3647 = vpop.f32.mrf.mxu0
      %3648 = vmatprep.mubr.bf16.mxu0 0
      %3649 = vmatmul.mubr.bf16.gmra.mxu0 %v2766
      %v3650 = vpop.f32.mrf.mxu0
      %v3651 = vadd.f32 %v2822, %v3650
      %v3652 = vpop.f32.mrf.mxu0
      %v3653 = vpop.f32.mrf.mxu0
      %v3654 = vadd.f32 %v2822, %v3653
      %v3655 = vpop.f32.mrf.mxu0
      %3656 = vmatprep.mubr.bf16.mxu0 0
      %3657 = vmatmul.mubr.bf16.gmra.mxu0 %v2767
      %v3658 = vpop.f32.mrf.mxu0
      %v3659 = vadd.f32 %v2822, %v3658
      %v3660 = vpop.f32.mrf.mxu0
      %v3661 = vpop.f32.mrf.mxu0
      %v3662 = vadd.f32 %v2822, %v3661
      %v3663 = vpop.f32.mrf.mxu0
      %3664 = vmatprep.mubr.bf16.mxu0 0
      %3665 = vmatmul.mubr.bf16.gmra.mxu0 %v2768
      %v3666 = vpop.f32.mrf.mxu0
      %v3667 = vadd.f32 %v2822, %v3666
      %v3668 = vpop.f32.mrf.mxu0
      %v3669 = vpop.f32.mrf.mxu0
      %v3670 = vadd.f32 %v2822, %v3669
      %v3671 = vpop.f32.mrf.mxu0
      %3672 = vmatprep.mubr.bf16.mxu0 0
      %3673 = vmatmul.mubr.bf16.gmra.mxu0 %v2769
      %v3674 = vpop.f32.mrf.mxu0
      %v3675 = vadd.f32 %v2822, %v3674
      %v3676 = vpop.f32.mrf.mxu0
      %v3677 = vpop.f32.mrf.mxu0
      %v3678 = vadd.f32 %v2822, %v3677
      %v3679 = vpop.f32.mrf.mxu0
      %3680 = vmatprep.mubr.bf16.mxu0 0
      %3681 = vmatmul.mubr.bf16.gmra.mxu0 %v2770
      %v3682 = vpop.f32.mrf.mxu0
      %v3683 = vadd.f32 %v2822, %v3682
      %v3684 = vpop.f32.mrf.mxu0
      %v3685 = vpop.f32.mrf.mxu0
      %v3686 = vadd.f32 %v2822, %v3685
      %v3687 = vpop.f32.mrf.mxu0
      %3688 = vmatprep.mubr.bf16.mxu0 0
      %3689 = vmatmul.mubr.bf16.gmra.mxu0 %v2771
      %v3690 = vpop.f32.mrf.mxu0
      %v3691 = vadd.f32 %v2822, %v3690
      %v3692 = vpop.f32.mrf.mxu0
      %v3693 = vpop.f32.mrf.mxu0
      %v3694 = vadd.f32 %v2822, %v3693
      %v3695 = vpop.f32.mrf.mxu0
      %3696 = vmatprep.mubr.bf16.mxu0 0
      %3697 = vmatmul.mubr.bf16.gmra.mxu0 %v2772
      %v3698 = vpop.f32.mrf.mxu0
      %v3699 = vadd.f32 %v2822, %v3698
      %v3700 = vpop.f32.mrf.mxu0
      %v3701 = vpop.f32.mrf.mxu0
      %v3702 = vadd.f32 %v2822, %v3701
      %v3703 = vpop.f32.mrf.mxu0
      %3704 = vmatprep.mubr.bf16.mxu0 0
      %3705 = vmatmul.mubr.bf16.gmra.mxu0 %v2773
      %v3706 = vpop.f32.mrf.mxu0
      %v3707 = vadd.f32 %v2822, %v3706
      %v3708 = vpop.f32.mrf.mxu0
      %v3709 = vpop.f32.mrf.mxu0
      %v3710 = vadd.f32 %v2822, %v3709
      %v3711 = vpop.f32.mrf.mxu0
      %3712 = vmatprep.mubr.bf16.mxu0 0
      %3713 = vmatmul.mubr.bf16.gmra.mxu0 %v2774
      %v3714 = vpop.f32.mrf.mxu0
      %v3715 = vadd.f32 %v2822, %v3714
      %v3716 = vpop.f32.mrf.mxu0
      %v3717 = vpop.f32.mrf.mxu0
      %v3718 = vadd.f32 %v2822, %v3717
      %v3719 = vpop.f32.mrf.mxu0
      %3720 = vmatprep.mubr.bf16.mxu0 0
      %3721 = vmatmul.mubr.bf16.gmra.mxu0 %v2775
      %v3722 = vpop.f32.mrf.mxu0
      %v3723 = vadd.f32 %v2822, %v3722
      %v3724 = vpop.f32.mrf.mxu0
      %v3725 = vpop.f32.mrf.mxu0
      %v3726 = vadd.f32 %v2822, %v3725
      %v3727 = vpop.f32.mrf.mxu0
      %3728 = vmatprep.mubr.bf16.mxu0 0
      %3729 = vmatmul.mubr.bf16.gmra.mxu0 %v2776
      %v3730 = vpop.f32.mrf.mxu0
      %v3731 = vadd.f32 %v2822, %v3730
      %v3732 = vpop.f32.mrf.mxu0
      %v3733 = vpop.f32.mrf.mxu0
      %v3734 = vadd.f32 %v2822, %v3733
      %v3735 = vpop.f32.mrf.mxu0
      %3736 = vmatprep.mubr.bf16.mxu0 0
      %3737 = vmatmul.mubr.bf16.gmra.mxu0 %v2777
      %v3738 = vpop.f32.mrf.mxu0
      %v3739 = vadd.f32 %v2822, %v3738
      %v3740 = vpop.f32.mrf.mxu0
      %v3741 = vpop.f32.mrf.mxu0
      %v3742 = vadd.f32 %v2822, %v3741
      %v3743 = vpop.f32.mrf.mxu0
      %3744 = vmatprep.mubr.bf16.mxu0 0
      %3745 = vmatmul.mubr.bf16.gmra.mxu0 %v2778
      %v3746 = vpop.f32.mrf.mxu0
      %v3747 = vadd.f32 %v2822, %v3746
      %v3748 = vpop.f32.mrf.mxu0
      %v3749 = vpop.f32.mrf.mxu0
      %v3750 = vadd.f32 %v2822, %v3749
      %v3751 = vpop.f32.mrf.mxu0
      %3752 = vmatprep.mubr.bf16.mxu0 0
      %3753 = vmatmul.mubr.bf16.gmra.mxu0 %v2779
      %v3754 = vpop.f32.mrf.mxu0
      %v3755 = vadd.f32 %v2822, %v3754
      %v3756 = vpop.f32.mrf.mxu0
      %v3757 = vpop.f32.mrf.mxu0
      %v3758 = vadd.f32 %v2822, %v3757
      %v3759 = vpop.f32.mrf.mxu0
      %3760 = vmatprep.mubr.bf16.mxu0 0
      %3761 = vmatmul.mubr.bf16.gmra.mxu0 %v2780
      %v3762 = vpop.f32.mrf.mxu0
      %v3763 = vadd.f32 %v2822, %v3762
      %v3764 = vpop.f32.mrf.mxu0
      %v3765 = vpop.f32.mrf.mxu0
      %v3766 = vadd.f32 %v2822, %v3765
      %v3767 = vpop.f32.mrf.mxu0
      %3768 = vmatprep.mubr.bf16.mxu0 0
      %3769 = vmatmul.mubr.bf16.gmra.mxu0 %v2781
      %v3770 = vpop.f32.mrf.mxu0
      %v3771 = vadd.f32 %v2822, %v3770
      %v3772 = vpop.f32.mrf.mxu0
      %v3773 = vpop.f32.mrf.mxu0
      %v3774 = vadd.f32 %v2822, %v3773
      %v3775 = vpop.f32.mrf.mxu0
      %3776 = vmatprep.mubr.bf16.mxu0 0
      %3777 = vmatmul.mubr.bf16.gmra.mxu0 %v2782
      %v3778 = vpop.f32.mrf.mxu0
      %v3779 = vadd.f32 %v2822, %v3778
      %v3780 = vpop.f32.mrf.mxu0
      %v3781 = vpop.f32.mrf.mxu0
      %v3782 = vadd.f32 %v2822, %v3781
      %v3783 = vpop.f32.mrf.mxu0
      %3784 = vmatprep.mubr.bf16.mxu0 0
      %3785 = vmatmul.mubr.bf16.gmra.mxu0 %v2783
      %v3786 = vpop.f32.mrf.mxu0
      %v3787 = vadd.f32 %v2822, %v3786
      %v3788 = vpop.f32.mrf.mxu0
      %v3789 = vpop.f32.mrf.mxu0
      %v3790 = vadd.f32 %v2822, %v3789
      %v3791 = vpop.f32.mrf.mxu0
      %3792 = vmatprep.mubr.bf16.mxu0 0
      %3793 = vmatmul.mubr.bf16.gmra.mxu0 %v2784
      %v3794 = vpop.f32.mrf.mxu0
      %v3795 = vadd.f32 %v2822, %v3794
      %v3796 = vpop.f32.mrf.mxu0
      %v3797 = vpop.f32.mrf.mxu0
      %v3798 = vadd.f32 %v2822, %v3797
      %v3799 = vpop.f32.mrf.mxu0
      %3800 = vmatprep.mubr.bf16.mxu0 0
      %3801 = vmatmul.mubr.bf16.gmra.mxu0 %v2785
      %v3802 = vpop.f32.mrf.mxu0
      %v3803 = vadd.f32 %v2822, %v3802
      %v3804 = vpop.f32.mrf.mxu0
      %v3805 = vpop.f32.mrf.mxu0
      %v3806 = vadd.f32 %v2822, %v3805
      %v3807 = vpop.f32.mrf.mxu0
      %3808 = vmatprep.mubr.bf16.mxu0 0
      %3809 = vmatmul.mubr.bf16.gmra.mxu0 %v2786
      %v3810 = vpop.f32.mrf.mxu0
      %v3811 = vadd.f32 %v2822, %v3810
      %v3812 = vpop.f32.mrf.mxu0
      %v3813 = vpop.f32.mrf.mxu0
      %v3814 = vadd.f32 %v2822, %v3813
      %v3815 = vpop.f32.mrf.mxu0
      %3816 = vmatprep.mubr.bf16.mxu0 0
      %3817 = vmatmul.mubr.bf16.gmra.mxu0 %v2787
      %v3818 = vpop.f32.mrf.mxu0
      %v3819 = vadd.f32 %v2822, %v3818
      %v3820 = vpop.f32.mrf.mxu0
      %v3821 = vpop.f32.mrf.mxu0
      %v3822 = vadd.f32 %v2822, %v3821
      %v3823 = vpop.f32.mrf.mxu0
      %3824 = vmatprep.mubr.bf16.mxu0 0
      %3825 = vmatmul.mubr.bf16.gmra.mxu0 %v2788
      %v3826 = vpop.f32.mrf.mxu0
      %v3827 = vadd.f32 %v2822, %v3826
      %v3828 = vpop.f32.mrf.mxu0
      %v3829 = vpop.f32.mrf.mxu0
      %v3830 = vadd.f32 %v2822, %v3829
      %v3831 = vpop.f32.mrf.mxu0
      %3832 = vmatprep.mubr.bf16.mxu0 0
      %3833 = vmatmul.mubr.bf16.gmra.mxu0 %v2789
      %v3834 = vpop.f32.mrf.mxu0
      %v3835 = vadd.f32 %v2822, %v3834
      %v3836 = vpop.f32.mrf.mxu0
      %v3837 = vpop.f32.mrf.mxu0
      %v3838 = vadd.f32 %v2822, %v3837
      %v3839 = vpop.f32.mrf.mxu0
      %3840 = vmatprep.mubr.bf16.mxu0 0
      %3841 = vmatmul.mubr.bf16.gmra.mxu0 %v2790
      %v3842 = vpop.f32.mrf.mxu0
      %v3843 = vadd.f32 %v2822, %v3842
      %v3844 = vpop.f32.mrf.mxu0
      %v3845 = vpop.f32.mrf.mxu0
      %v3846 = vadd.f32 %v2822, %v3845
      %v3847 = vpop.f32.mrf.mxu0
      %3848 = vmatprep.mubr.bf16.mxu0 0
      %3849 = vmatmul.mubr.bf16.gmra.mxu0 %v2791
      %v3850 = vpop.f32.mrf.mxu0
      %v3851 = vadd.f32 %v2822, %v3850
      %v3852 = vpop.f32.mrf.mxu0
      %v3853 = vpop.f32.mrf.mxu0
      %v3854 = vadd.f32 %v2822, %v3853
      %v3855 = vpop.f32.mrf.mxu0
      %3856 = vmatprep.mubr.bf16.mxu0 0
      %3857 = vmatmul.mubr.bf16.gmra.mxu0 %v2792
      %v3858 = vpop.f32.mrf.mxu0
      %v3859 = vadd.f32 %v2822, %v3858
      %v3860 = vpop.f32.mrf.mxu0
      %v3861 = vpop.f32.mrf.mxu0
      %v3862 = vadd.f32 %v2822, %v3861
      %v3863 = vpop.f32.mrf.mxu0
      %3864 = vmatprep.mubr.bf16.mxu0 0
      %3865 = vmatmul.mubr.bf16.gmra.mxu0 %v2793
      %v3866 = vpop.f32.mrf.mxu0
      %v3867 = vadd.f32 %v2822, %v3866
      %v3868 = vpop.f32.mrf.mxu0
      %v3869 = vpop.f32.mrf.mxu0
      %v3870 = vadd.f32 %v2822, %v3869
      %v3871 = vpop.f32.mrf.mxu0
      %3872 = vmatprep.mubr.bf16.mxu0 0
      %3873 = vmatmul.mubr.bf16.gmra.mxu0 %v2794
      %v3874 = vpop.f32.mrf.mxu0
      %v3875 = vadd.f32 %v2822, %v3874
      %v3876 = vpop.f32.mrf.mxu0
      %v3877 = vpop.f32.mrf.mxu0
      %v3878 = vadd.f32 %v2822, %v3877
      %v3879 = vpop.f32.mrf.mxu0
      %3880 = vmatprep.mubr.bf16.mxu0 0
      %3881 = vmatmul.mubr.bf16.gmra.mxu0 %v2795
      %v3882 = vpop.f32.mrf.mxu0
      %v3883 = vadd.f32 %v2822, %v3882
      %v3884 = vpop.f32.mrf.mxu0
      %v3885 = vpop.f32.mrf.mxu0
      %v3886 = vadd.f32 %v2822, %v3885
      %v3887 = vpop.f32.mrf.mxu0
      %3888 = vmatprep.mubr.bf16.mxu0 0
      %3889 = vmatmul.mubr.bf16.gmra.mxu0 %v2796
      %v3890 = vpop.f32.mrf.mxu0
      %v3891 = vadd.f32 %v2822, %v3890
      %v3892 = vpop.f32.mrf.mxu0
      %v3893 = vpop.f32.mrf.mxu0
      %v3894 = vadd.f32 %v2822, %v3893
      %v3895 = vpop.f32.mrf.mxu0
      %3896 = vmatprep.mubr.bf16.mxu0 0
      %3897 = vmatmul.mubr.bf16.gmra.mxu0 %v2797
      %v3898 = vpop.f32.mrf.mxu0
      %v3899 = vadd.f32 %v2822, %v3898
      %v3900 = vpop.f32.mrf.mxu0
      %v3901 = vpop.f32.mrf.mxu0
      %v3902 = vadd.f32 %v2822, %v3901
      %v3903 = vpop.f32.mrf.mxu0
      %3904 = vmatprep.mubr.bf16.mxu0 0
      %3905 = vmatmul.mubr.bf16.gmra.mxu0 %v2798
      %v3906 = vpop.f32.mrf.mxu0
      %v3907 = vadd.f32 %v2822, %v3906
      %v3908 = vpop.f32.mrf.mxu0
      %v3909 = vpop.f32.mrf.mxu0
      %v3910 = vadd.f32 %v2822, %v3909
      %v3911 = vpop.f32.mrf.mxu0
      %3912 = vmatprep.mubr.bf16.mxu0 0
      %3913 = vmatmul.mubr.bf16.gmra.mxu0 %v2799
      %v3914 = vpop.f32.mrf.mxu0
      %v3915 = vadd.f32 %v2822, %v3914
      %v3916 = vpop.f32.mrf.mxu0
      %v3917 = vpop.f32.mrf.mxu0
      %v3918 = vadd.f32 %v2822, %v3917
      %v3919 = vpop.f32.mrf.mxu0
      %3920 = vmatprep.mubr.bf16.mxu0 0
      %3921 = vmatmul.mubr.bf16.gmra.mxu0 %v2800
      %v3922 = vpop.f32.mrf.mxu0
      %v3923 = vadd.f32 %v2822, %v3922
      %v3924 = vpop.f32.mrf.mxu0
      %v3925 = vpop.f32.mrf.mxu0
      %v3926 = vadd.f32 %v2822, %v3925
      %v3927 = vpop.f32.mrf.mxu0
      %3928 = vdwg.mxu0
      %v3929 = vmul.f32 %v2907, 0.5
      %v3930 = vmul.f32 %v2910, 0.5
      %v3931 = vmul.f32 %v2915, 0.5
      %v3932 = vmul.f32 %v2918, 0.5
      %v3933 = vmul.f32 %v2923, 0.5
      %v3934 = vmul.f32 %v2926, 0.5
      %v3935 = vmul.f32 %v2931, 0.5
      %v3936 = vmul.f32 %v2934, 0.5
      %v3937 = vmul.f32 %v2939, 0.5
      %v3938 = vmul.f32 %v2942, 0.5
      %v3939 = vmul.f32 %v2947, 0.5
      %v3940 = vmul.f32 %v2950, 0.5
      %v3941 = vmul.f32 %v2955, 0.5
      %v3942 = vmul.f32 %v2958, 0.5
      %v3943 = vmul.f32 %v2963, 0.5
      %v3944 = vmul.f32 %v2966, 0.5
      %v3945 = vmul.f32 %v2971, 0.5
      %v3946 = vmul.f32 %v2974, 0.5
      %v3947 = vmul.f32 %v2979, 0.5
      %v3948 = vmul.f32 %v2982, 0.5
      %v3949 = vmul.f32 %v2987, 0.5
      %v3950 = vmul.f32 %v2990, 0.5
      %v3951 = vmul.f32 %v2995, 0.5
      %v3952 = vmul.f32 %v2998, 0.5
      %v3953 = vmul.f32 %v3003, 0.5
      %v3954 = vmul.f32 %v3006, 0.5
      %v3955 = vmul.f32 %v3011, 0.5
      %v3956 = vmul.f32 %v3014, 0.5
      %v3957 = vmul.f32 %v3019, 0.5
      %v3958 = vmul.f32 %v3022, 0.5
      %v3959 = vmul.f32 %v3027, 0.5
      %v3960 = vmul.f32 %v3030, 0.5
      %v3961 = vmul.f32 %v3035, 0.5
      %v3962 = vmul.f32 %v3038, 0.5
      %v3963 = vmul.f32 %v3043, 0.5
      %v3964 = vmul.f32 %v3046, 0.5
      %v3965 = vmul.f32 %v3051, 0.5
      %v3966 = vmul.f32 %v3054, 0.5
      %v3967 = vmul.f32 %v3059, 0.5
      %v3968 = vmul.f32 %v3062, 0.5
      %v3969 = vmul.f32 %v3067, 0.5
      %v3970 = vmul.f32 %v3070, 0.5
      %v3971 = vmul.f32 %v3075, 0.5
      %v3972 = vmul.f32 %v3078, 0.5
      %v3973 = vmul.f32 %v3083, 0.5
      %v3974 = vmul.f32 %v3086, 0.5
      %v3975 = vmul.f32 %v3091, 0.5
      %v3976 = vmul.f32 %v3094, 0.5
      %v3977 = vmul.f32 %v3099, 0.5
      %v3978 = vmul.f32 %v3102, 0.5
      %v3979 = vmul.f32 %v3107, 0.5
      %v3980 = vmul.f32 %v3110, 0.5
      %v3981 = vmul.f32 %v3115, 0.5
      %v3982 = vmul.f32 %v3118, 0.5
      %v3983 = vmul.f32 %v3123, 0.5
      %v3984 = vmul.f32 %v3126, 0.5
      %v3985 = vmul.f32 %v3131, 0.5
      %v3986 = vmul.f32 %v3134, 0.5
      %v3987 = vmul.f32 %v3139, 0.5
      %v3988 = vmul.f32 %v3142, 0.5
      %v3989 = vmul.f32 %v3147, 0.5
      %v3990 = vmul.f32 %v3150, 0.5
      %v3991 = vmul.f32 %v3155, 0.5
      %v3992 = vmul.f32 %v3158, 0.5
      %v3993 = vmul.f32 %v3163, 0.5
      %v3994 = vmul.f32 %v3166, 0.5
      %v3995 = vmul.f32 %v3171, 0.5
      %v3996 = vmul.f32 %v3174, 0.5
      %v3997 = vmul.f32 %v3179, 0.5
      %v3998 = vmul.f32 %v3182, 0.5
      %v3999 = vmul.f32 %v3187, 0.5
      %v4000 = vmul.f32 %v3190, 0.5
      %v4001 = vmul.f32 %v3195, 0.5
      %v4002 = vmul.f32 %v3198, 0.5
      %v4003 = vmul.f32 %v3203, 0.5
      %v4004 = vmul.f32 %v3206, 0.5
      %v4005 = vmul.f32 %v3211, 0.5
      %v4006 = vmul.f32 %v3214, 0.5
      %v4007 = vmul.f32 %v3219, 0.5
      %v4008 = vmul.f32 %v3222, 0.5
      %v4009 = vmul.f32 %v3227, 0.5
      %v4010 = vmul.f32 %v3230, 0.5
      %v4011 = vmul.f32 %v3235, 0.5
      %v4012 = vmul.f32 %v3238, 0.5
      %v4013 = vmul.f32 %v3243, 0.5
      %v4014 = vmul.f32 %v3246, 0.5
      %v4015 = vmul.f32 %v3251, 0.5
      %v4016 = vmul.f32 %v3254, 0.5
      %v4017 = vmul.f32 %v3259, 0.5
      %v4018 = vmul.f32 %v3262, 0.5
      %v4019 = vmul.f32 %v3267, 0.5
      %v4020 = vmul.f32 %v3270, 0.5
      %v4021 = vmul.f32 %v3275, 0.5
      %v4022 = vmul.f32 %v3278, 0.5
      %v4023 = vmul.f32 %v3283, 0.5
      %v4024 = vmul.f32 %v3286, 0.5
      %v4025 = vmul.f32 %v3291, 0.5
      %v4026 = vmul.f32 %v3294, 0.5
      %v4027 = vmul.f32 %v3299, 0.5
      %v4028 = vmul.f32 %v3302, 0.5
      %v4029 = vmul.f32 %v3307, 0.5
      %v4030 = vmul.f32 %v3310, 0.5
      %v4031 = vmul.f32 %v3315, 0.5
      %v4032 = vmul.f32 %v3318, 0.5
      %v4033 = vmul.f32 %v3323, 0.5
      %v4034 = vmul.f32 %v3326, 0.5
      %v4035 = vmul.f32 %v3331, 0.5
      %v4036 = vmul.f32 %v3334, 0.5
      %v4037 = vmul.f32 %v3339, 0.5
      %v4038 = vmul.f32 %v3342, 0.5
      %v4039 = vmul.f32 %v3347, 0.5
      %v4040 = vmul.f32 %v3350, 0.5
      %v4041 = vmul.f32 %v3355, 0.5
      %v4042 = vmul.f32 %v3358, 0.5
      %v4043 = vmul.f32 %v3363, 0.5
      %v4044 = vmul.f32 %v3366, 0.5
      %v4045 = vmul.f32 %v3371, 0.5
      %v4046 = vmul.f32 %v3374, 0.5
      %v4047 = vmul.f32 %v3379, 0.5
      %v4048 = vmul.f32 %v3382, 0.5
      %v4049 = vmul.f32 %v3387, 0.5
      %v4050 = vmul.f32 %v3390, 0.5
      %v4051 = vmul.f32 %v3395, 0.5
      %v4052 = vmul.f32 %v3398, 0.5
      %v4053 = vmul.f32 %v3403, 0.5
      %v4054 = vmul.f32 %v3406, 0.5
      %v4055 = vmul.f32 %v3411, 0.5
      %v4056 = vmul.f32 %v3414, 0.5
      %v4057 = vmul.f32 %v3419, 0.5
      %v4058 = vmul.f32 %v3422, 0.5
      %v4059 = vmul.f32 %v3427, 0.5
      %v4060 = vmul.f32 %v3430, 0.5
      %v4061 = vmul.f32 %v3435, 0.5
      %v4062 = vmul.f32 %v3438, 0.5
      %v4063 = vmul.f32 %v3443, 0.5
      %v4064 = vmul.f32 %v3446, 0.5
      %v4065 = vmul.f32 %v3451, 0.5
      %v4066 = vmul.f32 %v3454, 0.5
      %v4067 = vmul.f32 %v3459, 0.5
      %v4068 = vmul.f32 %v3462, 0.5
      %v4069 = vmul.f32 %v3467, 0.5
      %v4070 = vmul.f32 %v3470, 0.5
      %v4071 = vmul.f32 %v3475, 0.5
      %v4072 = vmul.f32 %v3478, 0.5
      %v4073 = vmul.f32 %v3483, 0.5
      %v4074 = vmul.f32 %v3486, 0.5
      %v4075 = vmul.f32 %v3491, 0.5
      %v4076 = vmul.f32 %v3494, 0.5
      %v4077 = vmul.f32 %v3499, 0.5
      %v4078 = vmul.f32 %v3502, 0.5
      %v4079 = vmul.f32 %v3507, 0.5
      %v4080 = vmul.f32 %v3510, 0.5
      %v4081 = vmul.f32 %v3515, 0.5
      %v4082 = vmul.f32 %v3518, 0.5
      %v4083 = vmul.f32 %v3523, 0.5
      %v4084 = vmul.f32 %v3526, 0.5
      %v4085 = vmul.f32 %v3531, 0.5
      %v4086 = vmul.f32 %v3534, 0.5
      %v4087 = vmul.f32 %v3539, 0.5
      %v4088 = vmul.f32 %v3542, 0.5
      %v4089 = vmul.f32 %v3547, 0.5
      %v4090 = vmul.f32 %v3550, 0.5
      %v4091 = vmul.f32 %v3555, 0.5
      %v4092 = vmul.f32 %v3558, 0.5
      %v4093 = vmul.f32 %v3563, 0.5
      %v4094 = vmul.f32 %v3566, 0.5
      %v4095 = vmul.f32 %v3571, 0.5
      %v4096 = vmul.f32 %v3574, 0.5
      %v4097 = vmul.f32 %v3579, 0.5
      %v4098 = vmul.f32 %v3582, 0.5
      %v4099 = vmul.f32 %v3587, 0.5
      %v4100 = vmul.f32 %v3590, 0.5
      %v4101 = vmul.f32 %v3595, 0.5
      %v4102 = vmul.f32 %v3598, 0.5
      %v4103 = vmul.f32 %v3603, 0.5
      %v4104 = vmul.f32 %v3606, 0.5
      %v4105 = vmul.f32 %v3611, 0.5
      %v4106 = vmul.f32 %v3614, 0.5
      %v4107 = vmul.f32 %v3619, 0.5
      %v4108 = vmul.f32 %v3622, 0.5
      %v4109 = vmul.f32 %v3627, 0.5
      %v4110 = vmul.f32 %v3630, 0.5
      %v4111 = vmul.f32 %v3635, 0.5
      %v4112 = vmul.f32 %v3638, 0.5
      %v4113 = vmul.f32 %v3643, 0.5
      %v4114 = vmul.f32 %v3646, 0.5
      %v4115 = vmul.f32 %v3651, 0.5
      %v4116 = vmul.f32 %v3654, 0.5
      %v4117 = vmul.f32 %v3659, 0.5
      %v4118 = vmul.f32 %v3662, 0.5
      %v4119 = vmul.f32 %v3667, 0.5
      %v4120 = vmul.f32 %v3670, 0.5
      %v4121 = vmul.f32 %v3675, 0.5
      %v4122 = vmul.f32 %v3678, 0.5
      %v4123 = vmul.f32 %v3683, 0.5
      %v4124 = vmul.f32 %v3686, 0.5
      %v4125 = vmul.f32 %v3691, 0.5
      %v4126 = vmul.f32 %v3694, 0.5
      %v4127 = vmul.f32 %v3699, 0.5
      %v4128 = vmul.f32 %v3702, 0.5
      %v4129 = vmul.f32 %v3707, 0.5
      %v4130 = vmul.f32 %v3710, 0.5
      %v4131 = vmul.f32 %v3715, 0.5
      %v4132 = vmul.f32 %v3718, 0.5
      %v4133 = vmul.f32 %v3723, 0.5
      %v4134 = vmul.f32 %v3726, 0.5
      %v4135 = vmul.f32 %v3731, 0.5
      %v4136 = vmul.f32 %v3734, 0.5
      %v4137 = vmul.f32 %v3739, 0.5
      %v4138 = vmul.f32 %v3742, 0.5
      %v4139 = vmul.f32 %v3747, 0.5
      %v4140 = vmul.f32 %v3750, 0.5
      %v4141 = vmul.f32 %v3755, 0.5
      %v4142 = vmul.f32 %v3758, 0.5
      %v4143 = vmul.f32 %v3763, 0.5
      %v4144 = vmul.f32 %v3766, 0.5
      %v4145 = vmul.f32 %v3771, 0.5
      %v4146 = vmul.f32 %v3774, 0.5
      %v4147 = vmul.f32 %v3779, 0.5
      %v4148 = vmul.f32 %v3782, 0.5
      %v4149 = vmul.f32 %v3787, 0.5
      %v4150 = vmul.f32 %v3790, 0.5
      %v4151 = vmul.f32 %v3795, 0.5
      %v4152 = vmul.f32 %v3798, 0.5
      %v4153 = vmul.f32 %v3803, 0.5
      %v4154 = vmul.f32 %v3806, 0.5
      %v4155 = vmul.f32 %v3811, 0.5
      %v4156 = vmul.f32 %v3814, 0.5
      %v4157 = vmul.f32 %v3819, 0.5
      %v4158 = vmul.f32 %v3822, 0.5
      %v4159 = vmul.f32 %v3827, 0.5
      %v4160 = vmul.f32 %v3830, 0.5
      %v4161 = vmul.f32 %v3835, 0.5
      %v4162 = vmul.f32 %v3838, 0.5
      %v4163 = vmul.f32 %v3843, 0.5
      %v4164 = vmul.f32 %v3846, 0.5
      %v4165 = vmul.f32 %v3851, 0.5
      %v4166 = vmul.f32 %v3854, 0.5
      %v4167 = vmul.f32 %v3859, 0.5
      %v4168 = vmul.f32 %v3862, 0.5
      %v4169 = vmul.f32 %v3867, 0.5
      %v4170 = vmul.f32 %v3870, 0.5
      %v4171 = vmul.f32 %v3875, 0.5
      %v4172 = vmul.f32 %v3878, 0.5
      %v4173 = vmul.f32 %v3883, 0.5
      %v4174 = vmul.f32 %v3886, 0.5
      %v4175 = vmul.f32 %v3891, 0.5
      %v4176 = vmul.f32 %v3894, 0.5
      %v4177 = vmul.f32 %v3899, 0.5
      %v4178 = vmul.f32 %v3902, 0.5
      %v4179 = vmul.f32 %v3907, 0.5
      %v4180 = vmul.f32 %v3910, 0.5
      %v4181 = vmul.f32 %v3915, 0.5
      %v4182 = vmul.f32 %v3918, 0.5
      %v4183 = vmul.f32 %v3923, 0.5
      %v4184 = vmul.f32 %v3926, 0.5
      %v4185 = vtanh.pop %v3929
      %v4186 = vtanh.pop %v3930
      %v4187 = vtanh.pop %v3931
      %v4188 = vtanh.pop %v3932
      %v4189 = vtanh.pop %v3933
      %v4190 = vtanh.pop %v3934
      %v4191 = vtanh.pop %v3935
      %v4192 = vtanh.pop %v3936
      %v4193 = vtanh.pop %v3937
      %v4194 = vtanh.pop %v3938
      %v4195 = vtanh.pop %v3939
      %v4196 = vtanh.pop %v3940
      %v4197 = vtanh.pop %v3941
      %v4198 = vtanh.pop %v3942
      %v4199 = vtanh.pop %v3943
      %v4200 = vtanh.pop %v3944
      %v4201 = vtanh.pop %v3945
      %v4202 = vtanh.pop %v3946
      %v4203 = vtanh.pop %v3947
      %v4204 = vtanh.pop %v3948
      %v4205 = vtanh.pop %v3949
      %v4206 = vtanh.pop %v3950
      %v4207 = vtanh.pop %v3951
      %v4208 = vtanh.pop %v3952
      %v4209 = vtanh.pop %v3953
      %v4210 = vtanh.pop %v3954
      %v4211 = vtanh.pop %v3955
      %v4212 = vtanh.pop %v3956
      %v4213 = vtanh.pop %v3957
      %v4214 = vtanh.pop %v3958
      %v4215 = vtanh.pop %v3959
      %v4216 = vtanh.pop %v3960
      %v4217 = vtanh.pop %v3961
      %v4218 = vtanh.pop %v3962
      %v4219 = vtanh.pop %v3963
      %v4220 = vtanh.pop %v3964
      %v4221 = vtanh.pop %v3965
      %v4222 = vtanh.pop %v3966
      %v4223 = vtanh.pop %v3967
      %v4224 = vtanh.pop %v3968
      %v4225 = vtanh.pop %v3969
      %v4226 = vtanh.pop %v3970
      %v4227 = vtanh.pop %v3971
      %v4228 = vtanh.pop %v3972
      %v4229 = vtanh.pop %v3973
      %v4230 = vtanh.pop %v3974
      %v4231 = vtanh.pop %v3975
      %v4232 = vtanh.pop %v3976
      %v4233 = vtanh.pop %v3977
      %v4234 = vtanh.pop %v3978
      %v4235 = vtanh.pop %v3979
      %v4236 = vtanh.pop %v3980
      %v4237 = vtanh.pop %v3981
      %v4238 = vtanh.pop %v3982
      %v4239 = vtanh.pop %v3983
      %v4240 = vtanh.pop %v3984
      %v4241 = vtanh.pop %v3985
      %v4242 = vtanh.pop %v3986
      %v4243 = vtanh.pop %v3987
      %v4244 = vtanh.pop %v3988
      %v4245 = vtanh.pop %v3989
      %v4246 = vtanh.pop %v3990
      %v4247 = vtanh.pop %v3991
      %v4248 = vtanh.pop %v3992
      %v4249 = vtanh.pop %v3993
      %v4250 = vtanh.pop %v3994
      %v4251 = vtanh.pop %v3995
      %v4252 = vtanh.pop %v3996
      %v4253 = vtanh.pop %v3997
      %v4254 = vtanh.pop %v3998
      %v4255 = vtanh.pop %v3999
      %v4256 = vtanh.pop %v4000
      %v4257 = vtanh.pop %v4001
      %v4258 = vtanh.pop %v4002
      %v4259 = vtanh.pop %v4003
      %v4260 = vtanh.pop %v4004
      %v4261 = vtanh.pop %v4005
      %v4262 = vtanh.pop %v4006
      %v4263 = vtanh.pop %v4007
      %v4264 = vtanh.pop %v4008
      %v4265 = vtanh.pop %v4009
      %v4266 = vtanh.pop %v4010
      %v4267 = vtanh.pop %v4011
      %v4268 = vtanh.pop %v4012
      %v4269 = vtanh.pop %v4013
      %v4270 = vtanh.pop %v4014
      %v4271 = vtanh.pop %v4015
      %v4272 = vtanh.pop %v4016
      %v4273 = vtanh.pop %v4017
      %v4274 = vtanh.pop %v4018
      %v4275 = vtanh.pop %v4019
      %v4276 = vtanh.pop %v4020
      %v4277 = vtanh.pop %v4021
      %v4278 = vtanh.pop %v4022
      %v4279 = vtanh.pop %v4023
      %v4280 = vtanh.pop %v4024
      %v4281 = vtanh.pop %v4025
      %v4282 = vtanh.pop %v4026
      %v4283 = vtanh.pop %v4027
      %v4284 = vtanh.pop %v4028
      %v4285 = vtanh.pop %v4029
      %v4286 = vtanh.pop %v4030
      %v4287 = vtanh.pop %v4031
      %v4288 = vtanh.pop %v4032
      %v4289 = vtanh.pop %v4033
      %v4290 = vtanh.pop %v4034
      %v4291 = vtanh.pop %v4035
      %v4292 = vtanh.pop %v4036
      %v4293 = vtanh.pop %v4037
      %v4294 = vtanh.pop %v4038
      %v4295 = vtanh.pop %v4039
      %v4296 = vtanh.pop %v4040
      %v4297 = vtanh.pop %v4041
      %v4298 = vtanh.pop %v4042
      %v4299 = vtanh.pop %v4043
      %v4300 = vtanh.pop %v4044
      %v4301 = vtanh.pop %v4045
      %v4302 = vtanh.pop %v4046
      %v4303 = vtanh.pop %v4047
      %v4304 = vtanh.pop %v4048
      %v4305 = vtanh.pop %v4049
      %v4306 = vtanh.pop %v4050
      %v4307 = vtanh.pop %v4051
      %v4308 = vtanh.pop %v4052
      %v4309 = vtanh.pop %v4053
      %v4310 = vtanh.pop %v4054
      %v4311 = vtanh.pop %v4055
      %v4312 = vtanh.pop %v4056
      %v4313 = vtanh.pop %v4057
      %v4314 = vtanh.pop %v4058
      %v4315 = vtanh.pop %v4059
      %v4316 = vtanh.pop %v4060
      %v4317 = vtanh.pop %v4061
      %v4318 = vtanh.pop %v4062
      %v4319 = vtanh.pop %v4063
      %v4320 = vtanh.pop %v4064
      %v4321 = vtanh.pop %v4065
      %v4322 = vtanh.pop %v4066
      %v4323 = vtanh.pop %v4067
      %v4324 = vtanh.pop %v4068
      %v4325 = vtanh.pop %v4069
      %v4326 = vtanh.pop %v4070
      %v4327 = vtanh.pop %v4071
      %v4328 = vtanh.pop %v4072
      %v4329 = vtanh.pop %v4073
      %v4330 = vtanh.pop %v4074
      %v4331 = vtanh.pop %v4075
      %v4332 = vtanh.pop %v4076
      %v4333 = vtanh.pop %v4077
      %v4334 = vtanh.pop %v4078
      %v4335 = vtanh.pop %v4079
      %v4336 = vtanh.pop %v4080
      %v4337 = vtanh.pop %v4081
      %v4338 = vtanh.pop %v4082
      %v4339 = vtanh.pop %v4083
      %v4340 = vtanh.pop %v4084
      %v4341 = vtanh.pop %v4085
      %v4342 = vtanh.pop %v4086
      %v4343 = vtanh.pop %v4087
      %v4344 = vtanh.pop %v4088
      %v4345 = vtanh.pop %v4089
      %v4346 = vtanh.pop %v4090
      %v4347 = vtanh.pop %v4091
      %v4348 = vtanh.pop %v4092
      %v4349 = vtanh.pop %v4093
      %v4350 = vtanh.pop %v4094
      %v4351 = vtanh.pop %v4095
      %v4352 = vtanh.pop %v4096
      %v4353 = vtanh.pop %v4097
      %v4354 = vtanh.pop %v4098
      %v4355 = vtanh.pop %v4099
      %v4356 = vtanh.pop %v4100
      %v4357 = vtanh.pop %v4101
      %v4358 = vtanh.pop %v4102
      %v4359 = vtanh.pop %v4103
      %v4360 = vtanh.pop %v4104
      %v4361 = vtanh.pop %v4105
      %v4362 = vtanh.pop %v4106
      %v4363 = vtanh.pop %v4107
      %v4364 = vtanh.pop %v4108
      %v4365 = vtanh.pop %v4109
      %v4366 = vtanh.pop %v4110
      %v4367 = vtanh.pop %v4111
      %v4368 = vtanh.pop %v4112
      %v4369 = vtanh.pop %v4113
      %v4370 = vtanh.pop %v4114
      %v4371 = vtanh.pop %v4115
      %v4372 = vtanh.pop %v4116
      %v4373 = vtanh.pop %v4117
      %v4374 = vtanh.pop %v4118
      %v4375 = vtanh.pop %v4119
      %v4376 = vtanh.pop %v4120
      %v4377 = vtanh.pop %v4121
      %v4378 = vtanh.pop %v4122
      %v4379 = vtanh.pop %v4123
      %v4380 = vtanh.pop %v4124
      %v4381 = vtanh.pop %v4125
      %v4382 = vtanh.pop %v4126
      %v4383 = vtanh.pop %v4127
      %v4384 = vtanh.pop %v4128
      %v4385 = vtanh.pop %v4129
      %v4386 = vtanh.pop %v4130
      %v4387 = vtanh.pop %v4131
      %v4388 = vtanh.pop %v4132
      %v4389 = vtanh.pop %v4133
      %v4390 = vtanh.pop %v4134
      %v4391 = vtanh.pop %v4135
      %v4392 = vtanh.pop %v4136
      %v4393 = vtanh.pop %v4137
      %v4394 = vtanh.pop %v4138
      %v4395 = vtanh.pop %v4139
      %v4396 = vtanh.pop %v4140
      %v4397 = vtanh.pop %v4141
      %v4398 = vtanh.pop %v4142
      %v4399 = vtanh.pop %v4143
      %v4400 = vtanh.pop %v4144
      %v4401 = vtanh.pop %v4145
      %v4402 = vtanh.pop %v4146
      %v4403 = vtanh.pop %v4147
      %v4404 = vtanh.pop %v4148
      %v4405 = vtanh.pop %v4149
      %v4406 = vtanh.pop %v4150
      %v4407 = vtanh.pop %v4151
      %v4408 = vtanh.pop %v4152
      %v4409 = vtanh.pop %v4153
      %v4410 = vtanh.pop %v4154
      %v4411 = vtanh.pop %v4155
      %v4412 = vtanh.pop %v4156
      %v4413 = vtanh.pop %v4157
      %v4414 = vtanh.pop %v4158
      %v4415 = vtanh.pop %v4159
      %v4416 = vtanh.pop %v4160
      %v4417 = vtanh.pop %v4161
      %v4418 = vtanh.pop %v4162
      %v4419 = vtanh.pop %v4163
      %v4420 = vtanh.pop %v4164
      %v4421 = vtanh.pop %v4165
      %v4422 = vtanh.pop %v4166
      %v4423 = vtanh.pop %v4167
      %v4424 = vtanh.pop %v4168
      %v4425 = vtanh.pop %v4169
      %v4426 = vtanh.pop %v4170
      %v4427 = vtanh.pop %v4171
      %v4428 = vtanh.pop %v4172
      %v4429 = vtanh.pop %v4173
      %v4430 = vtanh.pop %v4174
      %v4431 = vtanh.pop %v4175
      %v4432 = vtanh.pop %v4176
      %v4433 = vtanh.pop %v4177
      %v4434 = vtanh.pop %v4178
      %v4435 = vtanh.pop %v4179
      %v4436 = vtanh.pop %v4180
      %v4437 = vtanh.pop %v4181
      %v4438 = vtanh.pop %v4182
      %v4439 = vtanh.pop %v4183
      %v4440 = vtanh.pop %v4184
      %v4441 = vadd.f32 %v4185, 1.0
      %v4442 = vadd.f32 %v4186, 1.0
      %v4443 = vadd.f32 %v4187, 1.0
      %v4444 = vadd.f32 %v4188, 1.0
      %v4445 = vadd.f32 %v4189, 1.0
      %v4446 = vadd.f32 %v4190, 1.0
      %v4447 = vadd.f32 %v4191, 1.0
      %v4448 = vadd.f32 %v4192, 1.0
      %v4449 = vadd.f32 %v4193, 1.0
      %v4450 = vadd.f32 %v4194, 1.0
      %v4451 = vadd.f32 %v4195, 1.0
      %v4452 = vadd.f32 %v4196, 1.0
      %v4453 = vadd.f32 %v4197, 1.0
      %v4454 = vadd.f32 %v4198, 1.0
      %v4455 = vadd.f32 %v4199, 1.0
      %v4456 = vadd.f32 %v4200, 1.0
      %v4457 = vadd.f32 %v4201, 1.0
      %v4458 = vadd.f32 %v4202, 1.0
      %v4459 = vadd.f32 %v4203, 1.0
      %v4460 = vadd.f32 %v4204, 1.0
      %v4461 = vadd.f32 %v4205, 1.0
      %v4462 = vadd.f32 %v4206, 1.0
      %v4463 = vadd.f32 %v4207, 1.0
      %v4464 = vadd.f32 %v4208, 1.0
      %v4465 = vadd.f32 %v4209, 1.0
      %v4466 = vadd.f32 %v4210, 1.0
      %v4467 = vadd.f32 %v4211, 1.0
      %v4468 = vadd.f32 %v4212, 1.0
      %v4469 = vadd.f32 %v4213, 1.0
      %v4470 = vadd.f32 %v4214, 1.0
      %v4471 = vadd.f32 %v4215, 1.0
      %v4472 = vadd.f32 %v4216, 1.0
      %v4473 = vadd.f32 %v4217, 1.0
      %v4474 = vadd.f32 %v4218, 1.0
      %v4475 = vadd.f32 %v4219, 1.0
      %v4476 = vadd.f32 %v4220, 1.0
      %v4477 = vadd.f32 %v4221, 1.0
      %v4478 = vadd.f32 %v4222, 1.0
      %v4479 = vadd.f32 %v4223, 1.0
      %v4480 = vadd.f32 %v4224, 1.0
      %v4481 = vadd.f32 %v4225, 1.0
      %v4482 = vadd.f32 %v4226, 1.0
      %v4483 = vadd.f32 %v4227, 1.0
      %v4484 = vadd.f32 %v4228, 1.0
      %v4485 = vadd.f32 %v4229, 1.0
      %v4486 = vadd.f32 %v4230, 1.0
      %v4487 = vadd.f32 %v4231, 1.0
      %v4488 = vadd.f32 %v4232, 1.0
      %v4489 = vadd.f32 %v4233, 1.0
      %v4490 = vadd.f32 %v4234, 1.0
      %v4491 = vadd.f32 %v4235, 1.0
      %v4492 = vadd.f32 %v4236, 1.0
      %v4493 = vadd.f32 %v4237, 1.0
      %v4494 = vadd.f32 %v4238, 1.0
      %v4495 = vadd.f32 %v4239, 1.0
      %v4496 = vadd.f32 %v4240, 1.0
      %v4497 = vadd.f32 %v4241, 1.0
      %v4498 = vadd.f32 %v4242, 1.0
      %v4499 = vadd.f32 %v4243, 1.0
      %v4500 = vadd.f32 %v4244, 1.0
      %v4501 = vadd.f32 %v4245, 1.0
      %v4502 = vadd.f32 %v4246, 1.0
      %v4503 = vadd.f32 %v4247, 1.0
      %v4504 = vadd.f32 %v4248, 1.0
      %v4505 = vadd.f32 %v4249, 1.0
      %v4506 = vadd.f32 %v4250, 1.0
      %v4507 = vadd.f32 %v4251, 1.0
      %v4508 = vadd.f32 %v4252, 1.0
      %v4509 = vadd.f32 %v4253, 1.0
      %v4510 = vadd.f32 %v4254, 1.0
      %v4511 = vadd.f32 %v4255, 1.0
      %v4512 = vadd.f32 %v4256, 1.0
      %v4513 = vadd.f32 %v4257, 1.0
      %v4514 = vadd.f32 %v4258, 1.0
      %v4515 = vadd.f32 %v4259, 1.0
      %v4516 = vadd.f32 %v4260, 1.0
      %v4517 = vadd.f32 %v4261, 1.0
      %v4518 = vadd.f32 %v4262, 1.0
      %v4519 = vadd.f32 %v4263, 1.0
      %v4520 = vadd.f32 %v4264, 1.0
      %v4521 = vadd.f32 %v4265, 1.0
      %v4522 = vadd.f32 %v4266, 1.0
      %v4523 = vadd.f32 %v4267, 1.0
      %v4524 = vadd.f32 %v4268, 1.0
      %v4525 = vadd.f32 %v4269, 1.0
      %v4526 = vadd.f32 %v4270, 1.0
      %v4527 = vadd.f32 %v4271, 1.0
      %v4528 = vadd.f32 %v4272, 1.0
      %v4529 = vadd.f32 %v4273, 1.0
      %v4530 = vadd.f32 %v4274, 1.0
      %v4531 = vadd.f32 %v4275, 1.0
      %v4532 = vadd.f32 %v4276, 1.0
      %v4533 = vadd.f32 %v4277, 1.0
      %v4534 = vadd.f32 %v4278, 1.0
      %v4535 = vadd.f32 %v4279, 1.0
      %v4536 = vadd.f32 %v4280, 1.0
      %v4537 = vadd.f32 %v4281, 1.0
      %v4538 = vadd.f32 %v4282, 1.0
      %v4539 = vadd.f32 %v4283, 1.0
      %v4540 = vadd.f32 %v4284, 1.0
      %v4541 = vadd.f32 %v4285, 1.0
      %v4542 = vadd.f32 %v4286, 1.0
      %v4543 = vadd.f32 %v4287, 1.0
      %v4544 = vadd.f32 %v4288, 1.0
      %v4545 = vadd.f32 %v4289, 1.0
      %v4546 = vadd.f32 %v4290, 1.0
      %v4547 = vadd.f32 %v4291, 1.0
      %v4548 = vadd.f32 %v4292, 1.0
      %v4549 = vadd.f32 %v4293, 1.0
      %v4550 = vadd.f32 %v4294, 1.0
      %v4551 = vadd.f32 %v4295, 1.0
      %v4552 = vadd.f32 %v4296, 1.0
      %v4553 = vadd.f32 %v4297, 1.0
      %v4554 = vadd.f32 %v4298, 1.0
      %v4555 = vadd.f32 %v4299, 1.0
      %v4556 = vadd.f32 %v4300, 1.0
      %v4557 = vadd.f32 %v4301, 1.0
      %v4558 = vadd.f32 %v4302, 1.0
      %v4559 = vadd.f32 %v4303, 1.0
      %v4560 = vadd.f32 %v4304, 1.0
      %v4561 = vadd.f32 %v4305, 1.0
      %v4562 = vadd.f32 %v4306, 1.0
      %v4563 = vadd.f32 %v4307, 1.0
      %v4564 = vadd.f32 %v4308, 1.0
      %v4565 = vadd.f32 %v4309, 1.0
      %v4566 = vadd.f32 %v4310, 1.0
      %v4567 = vadd.f32 %v4311, 1.0
      %v4568 = vadd.f32 %v4312, 1.0
      %v4569 = vadd.f32 %v4313, 1.0
      %v4570 = vadd.f32 %v4314, 1.0
      %v4571 = vadd.f32 %v4315, 1.0
      %v4572 = vadd.f32 %v4316, 1.0
      %v4573 = vadd.f32 %v4317, 1.0
      %v4574 = vadd.f32 %v4318, 1.0
      %v4575 = vadd.f32 %v4319, 1.0
      %v4576 = vadd.f32 %v4320, 1.0
      %v4577 = vadd.f32 %v4321, 1.0
      %v4578 = vadd.f32 %v4322, 1.0
      %v4579 = vadd.f32 %v4323, 1.0
      %v4580 = vadd.f32 %v4324, 1.0
      %v4581 = vadd.f32 %v4325, 1.0
      %v4582 = vadd.f32 %v4326, 1.0
      %v4583 = vadd.f32 %v4327, 1.0
      %v4584 = vadd.f32 %v4328, 1.0
      %v4585 = vadd.f32 %v4329, 1.0
      %v4586 = vadd.f32 %v4330, 1.0
      %v4587 = vadd.f32 %v4331, 1.0
      %v4588 = vadd.f32 %v4332, 1.0
      %v4589 = vadd.f32 %v4333, 1.0
      %v4590 = vadd.f32 %v4334, 1.0
      %v4591 = vadd.f32 %v4335, 1.0
      %v4592 = vadd.f32 %v4336, 1.0
      %v4593 = vadd.f32 %v4337, 1.0
      %v4594 = vadd.f32 %v4338, 1.0
      %v4595 = vadd.f32 %v4339, 1.0
      %v4596 = vadd.f32 %v4340, 1.0
      %v4597 = vadd.f32 %v4341, 1.0
      %v4598 = vadd.f32 %v4342, 1.0
      %v4599 = vadd.f32 %v4343, 1.0
      %v4600 = vadd.f32 %v4344, 1.0
      %v4601 = vadd.f32 %v4345, 1.0
      %v4602 = vadd.f32 %v4346, 1.0
      %v4603 = vadd.f32 %v4347, 1.0
      %v4604 = vadd.f32 %v4348, 1.0
      %v4605 = vadd.f32 %v4349, 1.0
      %v4606 = vadd.f32 %v4350, 1.0
      %v4607 = vadd.f32 %v4351, 1.0
      %v4608 = vadd.f32 %v4352, 1.0
      %v4609 = vadd.f32 %v4353, 1.0
      %v4610 = vadd.f32 %v4354, 1.0
      %v4611 = vadd.f32 %v4355, 1.0
      %v4612 = vadd.f32 %v4356, 1.0
      %v4613 = vadd.f32 %v4357, 1.0
      %v4614 = vadd.f32 %v4358, 1.0
      %v4615 = vadd.f32 %v4359, 1.0
      %v4616 = vadd.f32 %v4360, 1.0
      %v4617 = vadd.f32 %v4361, 1.0
      %v4618 = vadd.f32 %v4362, 1.0
      %v4619 = vadd.f32 %v4363, 1.0
      %v4620 = vadd.f32 %v4364, 1.0
      %v4621 = vadd.f32 %v4365, 1.0
      %v4622 = vadd.f32 %v4366, 1.0
      %v4623 = vadd.f32 %v4367, 1.0
      %v4624 = vadd.f32 %v4368, 1.0
      %v4625 = vadd.f32 %v4369, 1.0
      %v4626 = vadd.f32 %v4370, 1.0
      %v4627 = vadd.f32 %v4371, 1.0
      %v4628 = vadd.f32 %v4372, 1.0
      %v4629 = vadd.f32 %v4373, 1.0
      %v4630 = vadd.f32 %v4374, 1.0
      %v4631 = vadd.f32 %v4375, 1.0
      %v4632 = vadd.f32 %v4376, 1.0
      %v4633 = vadd.f32 %v4377, 1.0
      %v4634 = vadd.f32 %v4378, 1.0
      %v4635 = vadd.f32 %v4379, 1.0
      %v4636 = vadd.f32 %v4380, 1.0
      %v4637 = vadd.f32 %v4381, 1.0
      %v4638 = vadd.f32 %v4382, 1.0
      %v4639 = vadd.f32 %v4383, 1.0
      %v4640 = vadd.f32 %v4384, 1.0
      %v4641 = vadd.f32 %v4385, 1.0
      %v4642 = vadd.f32 %v4386, 1.0
      %v4643 = vadd.f32 %v4387, 1.0
      %v4644 = vadd.f32 %v4388, 1.0
      %v4645 = vadd.f32 %v4389, 1.0
      %v4646 = vadd.f32 %v4390, 1.0
      %v4647 = vadd.f32 %v4391, 1.0
      %v4648 = vadd.f32 %v4392, 1.0
      %v4649 = vadd.f32 %v4393, 1.0
      %v4650 = vadd.f32 %v4394, 1.0
      %v4651 = vadd.f32 %v4395, 1.0
      %v4652 = vadd.f32 %v4396, 1.0
      %v4653 = vadd.f32 %v4397, 1.0
      %v4654 = vadd.f32 %v4398, 1.0
      %v4655 = vadd.f32 %v4399, 1.0
      %v4656 = vadd.f32 %v4400, 1.0
      %v4657 = vadd.f32 %v4401, 1.0
      %v4658 = vadd.f32 %v4402, 1.0
      %v4659 = vadd.f32 %v4403, 1.0
      %v4660 = vadd.f32 %v4404, 1.0
      %v4661 = vadd.f32 %v4405, 1.0
      %v4662 = vadd.f32 %v4406, 1.0
      %v4663 = vadd.f32 %v4407, 1.0
      %v4664 = vadd.f32 %v4408, 1.0
      %v4665 = vadd.f32 %v4409, 1.0
      %v4666 = vadd.f32 %v4410, 1.0
      %v4667 = vadd.f32 %v4411, 1.0
      %v4668 = vadd.f32 %v4412, 1.0
      %v4669 = vadd.f32 %v4413, 1.0
      %v4670 = vadd.f32 %v4414, 1.0
      %v4671 = vadd.f32 %v4415, 1.0
      %v4672 = vadd.f32 %v4416, 1.0
      %v4673 = vadd.f32 %v4417, 1.0
      %v4674 = vadd.f32 %v4418, 1.0
      %v4675 = vadd.f32 %v4419, 1.0
      %v4676 = vadd.f32 %v4420, 1.0
      %v4677 = vadd.f32 %v4421, 1.0
      %v4678 = vadd.f32 %v4422, 1.0
      %v4679 = vadd.f32 %v4423, 1.0
      %v4680 = vadd.f32 %v4424, 1.0
      %v4681 = vadd.f32 %v4425, 1.0
      %v4682 = vadd.f32 %v4426, 1.0
      %v4683 = vadd.f32 %v4427, 1.0
      %v4684 = vadd.f32 %v4428, 1.0
      %v4685 = vadd.f32 %v4429, 1.0
      %v4686 = vadd.f32 %v4430, 1.0
      %v4687 = vadd.f32 %v4431, 1.0
      %v4688 = vadd.f32 %v4432, 1.0
      %v4689 = vadd.f32 %v4433, 1.0
      %v4690 = vadd.f32 %v4434, 1.0
      %v4691 = vadd.f32 %v4435, 1.0
      %v4692 = vadd.f32 %v4436, 1.0
      %v4693 = vadd.f32 %v4437, 1.0
      %v4694 = vadd.f32 %v4438, 1.0
      %v4695 = vadd.f32 %v4439, 1.0
      %v4696 = vadd.f32 %v4440, 1.0
      %v4697 = vmul.f32 %v4441, 0.5
      %v4698 = vmul.f32 %v4442, 0.5
      %v4699 = vmul.f32 %v4443, 0.5
      %v4700 = vmul.f32 %v4444, 0.5
      %v4701 = vmul.f32 %v4445, 0.5
      %v4702 = vmul.f32 %v4446, 0.5
      %v4703 = vmul.f32 %v4447, 0.5
      %v4704 = vmul.f32 %v4448, 0.5
      %v4705 = vmul.f32 %v4449, 0.5
      %v4706 = vmul.f32 %v4450, 0.5
      %v4707 = vmul.f32 %v4451, 0.5
      %v4708 = vmul.f32 %v4452, 0.5
      %v4709 = vmul.f32 %v4453, 0.5
      %v4710 = vmul.f32 %v4454, 0.5
      %v4711 = vmul.f32 %v4455, 0.5
      %v4712 = vmul.f32 %v4456, 0.5
      %v4713 = vmul.f32 %v4457, 0.5
      %v4714 = vmul.f32 %v4458, 0.5
      %v4715 = vmul.f32 %v4459, 0.5
      %v4716 = vmul.f32 %v4460, 0.5
      %v4717 = vmul.f32 %v4461, 0.5
      %v4718 = vmul.f32 %v4462, 0.5
      %v4719 = vmul.f32 %v4463, 0.5
      %v4720 = vmul.f32 %v4464, 0.5
      %v4721 = vmul.f32 %v4465, 0.5
      %v4722 = vmul.f32 %v4466, 0.5
      %v4723 = vmul.f32 %v4467, 0.5
      %v4724 = vmul.f32 %v4468, 0.5
      %v4725 = vmul.f32 %v4469, 0.5
      %v4726 = vmul.f32 %v4470, 0.5
      %v4727 = vmul.f32 %v4471, 0.5
      %v4728 = vmul.f32 %v4472, 0.5
      %v4729 = vmul.f32 %v4473, 0.5
      %v4730 = vmul.f32 %v4474, 0.5
      %v4731 = vmul.f32 %v4475, 0.5
      %v4732 = vmul.f32 %v4476, 0.5
      %v4733 = vmul.f32 %v4477, 0.5
      %v4734 = vmul.f32 %v4478, 0.5
      %v4735 = vmul.f32 %v4479, 0.5
      %v4736 = vmul.f32 %v4480, 0.5
      %v4737 = vmul.f32 %v4481, 0.5
      %v4738 = vmul.f32 %v4482, 0.5
      %v4739 = vmul.f32 %v4483, 0.5
      %v4740 = vmul.f32 %v4484, 0.5
      %v4741 = vmul.f32 %v4485, 0.5
      %v4742 = vmul.f32 %v4486, 0.5
      %v4743 = vmul.f32 %v4487, 0.5
      %v4744 = vmul.f32 %v4488, 0.5
      %v4745 = vmul.f32 %v4489, 0.5
      %v4746 = vmul.f32 %v4490, 0.5
      %v4747 = vmul.f32 %v4491, 0.5
      %v4748 = vmul.f32 %v4492, 0.5
      %v4749 = vmul.f32 %v4493, 0.5
      %v4750 = vmul.f32 %v4494, 0.5
      %v4751 = vmul.f32 %v4495, 0.5
      %v4752 = vmul.f32 %v4496, 0.5
      %v4753 = vmul.f32 %v4497, 0.5
      %v4754 = vmul.f32 %v4498, 0.5
      %v4755 = vmul.f32 %v4499, 0.5
      %v4756 = vmul.f32 %v4500, 0.5
      %v4757 = vmul.f32 %v4501, 0.5
      %v4758 = vmul.f32 %v4502, 0.5
      %v4759 = vmul.f32 %v4503, 0.5
      %v4760 = vmul.f32 %v4504, 0.5
      %v4761 = vmul.f32 %v4505, 0.5
      %v4762 = vmul.f32 %v4506, 0.5
      %v4763 = vmul.f32 %v4507, 0.5
      %v4764 = vmul.f32 %v4508, 0.5
      %v4765 = vmul.f32 %v4509, 0.5
      %v4766 = vmul.f32 %v4510, 0.5
      %v4767 = vmul.f32 %v4511, 0.5
      %v4768 = vmul.f32 %v4512, 0.5
      %v4769 = vmul.f32 %v4513, 0.5
      %v4770 = vmul.f32 %v4514, 0.5
      %v4771 = vmul.f32 %v4515, 0.5
      %v4772 = vmul.f32 %v4516, 0.5
      %v4773 = vmul.f32 %v4517, 0.5
      %v4774 = vmul.f32 %v4518, 0.5
      %v4775 = vmul.f32 %v4519, 0.5
      %v4776 = vmul.f32 %v4520, 0.5
      %v4777 = vmul.f32 %v4521, 0.5
      %v4778 = vmul.f32 %v4522, 0.5
      %v4779 = vmul.f32 %v4523, 0.5
      %v4780 = vmul.f32 %v4524, 0.5
      %v4781 = vmul.f32 %v4525, 0.5
      %v4782 = vmul.f32 %v4526, 0.5
      %v4783 = vmul.f32 %v4527, 0.5
      %v4784 = vmul.f32 %v4528, 0.5
      %v4785 = vmul.f32 %v4529, 0.5
      %v4786 = vmul.f32 %v4530, 0.5
      %v4787 = vmul.f32 %v4531, 0.5
      %v4788 = vmul.f32 %v4532, 0.5
      %v4789 = vmul.f32 %v4533, 0.5
      %v4790 = vmul.f32 %v4534, 0.5
      %v4791 = vmul.f32 %v4535, 0.5
      %v4792 = vmul.f32 %v4536, 0.5
      %v4793 = vmul.f32 %v4537, 0.5
      %v4794 = vmul.f32 %v4538, 0.5
      %v4795 = vmul.f32 %v4539, 0.5
      %v4796 = vmul.f32 %v4540, 0.5
      %v4797 = vmul.f32 %v4541, 0.5
      %v4798 = vmul.f32 %v4542, 0.5
      %v4799 = vmul.f32 %v4543, 0.5
      %v4800 = vmul.f32 %v4544, 0.5
      %v4801 = vmul.f32 %v4545, 0.5
      %v4802 = vmul.f32 %v4546, 0.5
      %v4803 = vmul.f32 %v4547, 0.5
      %v4804 = vmul.f32 %v4548, 0.5
      %v4805 = vmul.f32 %v4549, 0.5
      %v4806 = vmul.f32 %v4550, 0.5
      %v4807 = vmul.f32 %v4551, 0.5
      %v4808 = vmul.f32 %v4552, 0.5
      %v4809 = vmul.f32 %v4553, 0.5
      %v4810 = vmul.f32 %v4554, 0.5
      %v4811 = vmul.f32 %v4555, 0.5
      %v4812 = vmul.f32 %v4556, 0.5
      %v4813 = vmul.f32 %v4557, 0.5
      %v4814 = vmul.f32 %v4558, 0.5
      %v4815 = vmul.f32 %v4559, 0.5
      %v4816 = vmul.f32 %v4560, 0.5
      %v4817 = vmul.f32 %v4561, 0.5
      %v4818 = vmul.f32 %v4562, 0.5
      %v4819 = vmul.f32 %v4563, 0.5
      %v4820 = vmul.f32 %v4564, 0.5
      %v4821 = vmul.f32 %v4565, 0.5
      %v4822 = vmul.f32 %v4566, 0.5
      %v4823 = vmul.f32 %v4567, 0.5
      %v4824 = vmul.f32 %v4568, 0.5
      %v4825 = vmul.f32 %v4569, 0.5
      %v4826 = vmul.f32 %v4570, 0.5
      %v4827 = vmul.f32 %v4571, 0.5
      %v4828 = vmul.f32 %v4572, 0.5
      %v4829 = vmul.f32 %v4573, 0.5
      %v4830 = vmul.f32 %v4574, 0.5
      %v4831 = vmul.f32 %v4575, 0.5
      %v4832 = vmul.f32 %v4576, 0.5
      %v4833 = vmul.f32 %v4577, 0.5
      %v4834 = vmul.f32 %v4578, 0.5
      %v4835 = vmul.f32 %v4579, 0.5
      %v4836 = vmul.f32 %v4580, 0.5
      %v4837 = vmul.f32 %v4581, 0.5
      %v4838 = vmul.f32 %v4582, 0.5
      %v4839 = vmul.f32 %v4583, 0.5
      %v4840 = vmul.f32 %v4584, 0.5
      %v4841 = vmul.f32 %v4585, 0.5
      %v4842 = vmul.f32 %v4586, 0.5
      %v4843 = vmul.f32 %v4587, 0.5
      %v4844 = vmul.f32 %v4588, 0.5
      %v4845 = vmul.f32 %v4589, 0.5
      %v4846 = vmul.f32 %v4590, 0.5
      %v4847 = vmul.f32 %v4591, 0.5
      %v4848 = vmul.f32 %v4592, 0.5
      %v4849 = vmul.f32 %v4593, 0.5
      %v4850 = vmul.f32 %v4594, 0.5
      %v4851 = vmul.f32 %v4595, 0.5
      %v4852 = vmul.f32 %v4596, 0.5
      %v4853 = vmul.f32 %v4597, 0.5
      %v4854 = vmul.f32 %v4598, 0.5
      %v4855 = vmul.f32 %v4599, 0.5
      %v4856 = vmul.f32 %v4600, 0.5
      %v4857 = vmul.f32 %v4601, 0.5
      %v4858 = vmul.f32 %v4602, 0.5
      %v4859 = vmul.f32 %v4603, 0.5
      %v4860 = vmul.f32 %v4604, 0.5
      %v4861 = vmul.f32 %v4605, 0.5
      %v4862 = vmul.f32 %v4606, 0.5
      %v4863 = vmul.f32 %v4607, 0.5
      %v4864 = vmul.f32 %v4608, 0.5
      %v4865 = vmul.f32 %v4609, 0.5
      %v4866 = vmul.f32 %v4610, 0.5
      %v4867 = vmul.f32 %v4611, 0.5
      %v4868 = vmul.f32 %v4612, 0.5
      %v4869 = vmul.f32 %v4613, 0.5
      %v4870 = vmul.f32 %v4614, 0.5
      %v4871 = vmul.f32 %v4615, 0.5
      %v4872 = vmul.f32 %v4616, 0.5
      %v4873 = vmul.f32 %v4617, 0.5
      %v4874 = vmul.f32 %v4618, 0.5
      %v4875 = vmul.f32 %v4619, 0.5
      %v4876 = vmul.f32 %v4620, 0.5
      %v4877 = vmul.f32 %v4621, 0.5
      %v4878 = vmul.f32 %v4622, 0.5
      %v4879 = vmul.f32 %v4623, 0.5
      %v4880 = vmul.f32 %v4624, 0.5
      %v4881 = vmul.f32 %v4625, 0.5
      %v4882 = vmul.f32 %v4626, 0.5
      %v4883 = vmul.f32 %v4627, 0.5
      %v4884 = vmul.f32 %v4628, 0.5
      %v4885 = vmul.f32 %v4629, 0.5
      %v4886 = vmul.f32 %v4630, 0.5
      %v4887 = vmul.f32 %v4631, 0.5
      %v4888 = vmul.f32 %v4632, 0.5
      %v4889 = vmul.f32 %v4633, 0.5
      %v4890 = vmul.f32 %v4634, 0.5
      %v4891 = vmul.f32 %v4635, 0.5
      %v4892 = vmul.f32 %v4636, 0.5
      %v4893 = vmul.f32 %v4637, 0.5
      %v4894 = vmul.f32 %v4638, 0.5
      %v4895 = vmul.f32 %v4639, 0.5
      %v4896 = vmul.f32 %v4640, 0.5
      %v4897 = vmul.f32 %v4641, 0.5
      %v4898 = vmul.f32 %v4642, 0.5
      %v4899 = vmul.f32 %v4643, 0.5
      %v4900 = vmul.f32 %v4644, 0.5
      %v4901 = vmul.f32 %v4645, 0.5
      %v4902 = vmul.f32 %v4646, 0.5
      %v4903 = vmul.f32 %v4647, 0.5
      %v4904 = vmul.f32 %v4648, 0.5
      %v4905 = vmul.f32 %v4649, 0.5
      %v4906 = vmul.f32 %v4650, 0.5
      %v4907 = vmul.f32 %v4651, 0.5
      %v4908 = vmul.f32 %v4652, 0.5
      %v4909 = vmul.f32 %v4653, 0.5
      %v4910 = vmul.f32 %v4654, 0.5
      %v4911 = vmul.f32 %v4655, 0.5
      %v4912 = vmul.f32 %v4656, 0.5
      %v4913 = vmul.f32 %v4657, 0.5
      %v4914 = vmul.f32 %v4658, 0.5
      %v4915 = vmul.f32 %v4659, 0.5
      %v4916 = vmul.f32 %v4660, 0.5
      %v4917 = vmul.f32 %v4661, 0.5
      %v4918 = vmul.f32 %v4662, 0.5
      %v4919 = vmul.f32 %v4663, 0.5
      %v4920 = vmul.f32 %v4664, 0.5
      %v4921 = vmul.f32 %v4665, 0.5
      %v4922 = vmul.f32 %v4666, 0.5
      %v4923 = vmul.f32 %v4667, 0.5
      %v4924 = vmul.f32 %v4668, 0.5
      %v4925 = vmul.f32 %v4669, 0.5
      %v4926 = vmul.f32 %v4670, 0.5
      %v4927 = vmul.f32 %v4671, 0.5
      %v4928 = vmul.f32 %v4672, 0.5
      %v4929 = vmul.f32 %v4673, 0.5
      %v4930 = vmul.f32 %v4674, 0.5
      %v4931 = vmul.f32 %v4675, 0.5
      %v4932 = vmul.f32 %v4676, 0.5
      %v4933 = vmul.f32 %v4677, 0.5
      %v4934 = vmul.f32 %v4678, 0.5
      %v4935 = vmul.f32 %v4679, 0.5
      %v4936 = vmul.f32 %v4680, 0.5
      %v4937 = vmul.f32 %v4681, 0.5
      %v4938 = vmul.f32 %v4682, 0.5
      %v4939 = vmul.f32 %v4683, 0.5
      %v4940 = vmul.f32 %v4684, 0.5
      %v4941 = vmul.f32 %v4685, 0.5
      %v4942 = vmul.f32 %v4686, 0.5
      %v4943 = vmul.f32 %v4687, 0.5
      %v4944 = vmul.f32 %v4688, 0.5
      %v4945 = vmul.f32 %v4689, 0.5
      %v4946 = vmul.f32 %v4690, 0.5
      %v4947 = vmul.f32 %v4691, 0.5
      %v4948 = vmul.f32 %v4692, 0.5
      %v4949 = vmul.f32 %v4693, 0.5
      %v4950 = vmul.f32 %v4694, 0.5
      %v4951 = vmul.f32 %v4695, 0.5
      %v4952 = vmul.f32 %v4696, 0.5
      %vm4953 = vcmask 31744
      %v4954 = vsel %vm4953, %v4697, 0.0
      %4955 = vadd.xlane.f32.xlu0 %v4954
      %v4956 = vpop.xlane.xlu0 %4955
      %v4957 = vsel %vm4953, %v4698, 0.0
      %4958 = vadd.xlane.f32.xlu0 %v4957
      %v4959 = vpop.xlane.xlu0 %4958
      %v4960 = vsel %vm4953, %v4699, 0.0
      %4961 = vadd.xlane.f32.xlu0 %v4960
      %v4962 = vpop.xlane.xlu0 %4961
      %v4963 = vsel %vm4953, %v4700, 0.0
      %4964 = vadd.xlane.f32.xlu0 %v4963
      %v4965 = vpop.xlane.xlu0 %4964
      %v4966 = vsel %vm4953, %v4701, 0.0
      %4967 = vadd.xlane.f32.xlu0 %v4966
      %v4968 = vpop.xlane.xlu0 %4967
      %v4969 = vsel %vm4953, %v4702, 0.0
      %4970 = vadd.xlane.f32.xlu0 %v4969
      %v4971 = vpop.xlane.xlu0 %4970
      %v4972 = vsel %vm4953, %v4703, 0.0
      %4973 = vadd.xlane.f32.xlu0 %v4972
      %v4974 = vpop.xlane.xlu0 %4973
      %v4975 = vsel %vm4953, %v4704, 0.0
      %4976 = vadd.xlane.f32.xlu0 %v4975
      %v4977 = vpop.xlane.xlu0 %4976
      %v4978 = vsel %vm4953, %v4705, 0.0
      %4979 = vadd.xlane.f32.xlu0 %v4978
      %v4980 = vpop.xlane.xlu0 %4979
      %v4981 = vsel %vm4953, %v4706, 0.0
      %4982 = vadd.xlane.f32.xlu0 %v4981
      %v4983 = vpop.xlane.xlu0 %4982
      %v4984 = vsel %vm4953, %v4707, 0.0
      %4985 = vadd.xlane.f32.xlu0 %v4984
      %v4986 = vpop.xlane.xlu0 %4985
      %v4987 = vsel %vm4953, %v4708, 0.0
      %4988 = vadd.xlane.f32.xlu0 %v4987
      %v4989 = vpop.xlane.xlu0 %4988
      %v4990 = vsel %vm4953, %v4709, 0.0
      %4991 = vadd.xlane.f32.xlu0 %v4990
      %v4992 = vpop.xlane.xlu0 %4991
      %v4993 = vsel %vm4953, %v4710, 0.0
      %4994 = vadd.xlane.f32.xlu0 %v4993
      %v4995 = vpop.xlane.xlu0 %4994
      %v4996 = vsel %vm4953, %v4711, 0.0
      %4997 = vadd.xlane.f32.xlu0 %v4996
      %v4998 = vpop.xlane.xlu0 %4997
      %v4999 = vsel %vm4953, %v4712, 0.0
      %5000 = vadd.xlane.f32.xlu0 %v4999
      %v5001 = vpop.xlane.xlu0 %5000
      %v5002 = vsel %vm4953, %v4713, 0.0
      %5003 = vadd.xlane.f32.xlu0 %v5002
      %v5004 = vpop.xlane.xlu0 %5003
      %v5005 = vsel %vm4953, %v4714, 0.0
      %5006 = vadd.xlane.f32.xlu0 %v5005
      %v5007 = vpop.xlane.xlu0 %5006
      %v5008 = vsel %vm4953, %v4715, 0.0
      %5009 = vadd.xlane.f32.xlu0 %v5008
      %v5010 = vpop.xlane.xlu0 %5009
      %v5011 = vsel %vm4953, %v4716, 0.0
      %5012 = vadd.xlane.f32.xlu0 %v5011
      %v5013 = vpop.xlane.xlu0 %5012
      %v5014 = vsel %vm4953, %v4717, 0.0
      %5015 = vadd.xlane.f32.xlu0 %v5014
      %v5016 = vpop.xlane.xlu0 %5015
      %v5017 = vsel %vm4953, %v4718, 0.0
      %5018 = vadd.xlane.f32.xlu0 %v5017
      %v5019 = vpop.xlane.xlu0 %5018
      %v5020 = vsel %vm4953, %v4719, 0.0
      %5021 = vadd.xlane.f32.xlu0 %v5020
      %v5022 = vpop.xlane.xlu0 %5021
      %v5023 = vsel %vm4953, %v4720, 0.0
      %5024 = vadd.xlane.f32.xlu0 %v5023
      %v5025 = vpop.xlane.xlu0 %5024
      %v5026 = vsel %vm4953, %v4721, 0.0
      %5027 = vadd.xlane.f32.xlu0 %v5026
      %v5028 = vpop.xlane.xlu0 %5027
      %v5029 = vsel %vm4953, %v4722, 0.0
      %5030 = vadd.xlane.f32.xlu0 %v5029
      %v5031 = vpop.xlane.xlu0 %5030
      %v5032 = vsel %vm4953, %v4723, 0.0
      %5033 = vadd.xlane.f32.xlu0 %v5032
      %v5034 = vpop.xlane.xlu0 %5033
      %v5035 = vsel %vm4953, %v4724, 0.0
      %5036 = vadd.xlane.f32.xlu0 %v5035
      %v5037 = vpop.xlane.xlu0 %5036
      %v5038 = vsel %vm4953, %v4725, 0.0
      %5039 = vadd.xlane.f32.xlu0 %v5038
      %v5040 = vpop.xlane.xlu0 %5039
      %v5041 = vsel %vm4953, %v4726, 0.0
      %5042 = vadd.xlane.f32.xlu0 %v5041
      %v5043 = vpop.xlane.xlu0 %5042
      %v5044 = vsel %vm4953, %v4727, 0.0
      %5045 = vadd.xlane.f32.xlu0 %v5044
      %v5046 = vpop.xlane.xlu0 %5045
      %v5047 = vsel %vm4953, %v4728, 0.0
      %5048 = vadd.xlane.f32.xlu0 %v5047
      %v5049 = vpop.xlane.xlu0 %5048
      %v5050 = vsel %vm4953, %v4729, 0.0
      %5051 = vadd.xlane.f32.xlu0 %v5050
      %v5052 = vpop.xlane.xlu0 %5051
      %v5053 = vsel %vm4953, %v4730, 0.0
      %5054 = vadd.xlane.f32.xlu0 %v5053
      %v5055 = vpop.xlane.xlu0 %5054
      %v5056 = vsel %vm4953, %v4731, 0.0
      %5057 = vadd.xlane.f32.xlu0 %v5056
      %v5058 = vpop.xlane.xlu0 %5057
      %v5059 = vsel %vm4953, %v4732, 0.0
      %5060 = vadd.xlane.f32.xlu0 %v5059
      %v5061 = vpop.xlane.xlu0 %5060
      %v5062 = vsel %vm4953, %v4733, 0.0
      %5063 = vadd.xlane.f32.xlu0 %v5062
      %v5064 = vpop.xlane.xlu0 %5063
      %v5065 = vsel %vm4953, %v4734, 0.0
      %5066 = vadd.xlane.f32.xlu0 %v5065
      %v5067 = vpop.xlane.xlu0 %5066
      %v5068 = vsel %vm4953, %v4735, 0.0
      %5069 = vadd.xlane.f32.xlu0 %v5068
      %v5070 = vpop.xlane.xlu0 %5069
      %v5071 = vsel %vm4953, %v4736, 0.0
      %5072 = vadd.xlane.f32.xlu0 %v5071
      %v5073 = vpop.xlane.xlu0 %5072
      %v5074 = vsel %vm4953, %v4737, 0.0
      %5075 = vadd.xlane.f32.xlu0 %v5074
      %v5076 = vpop.xlane.xlu0 %5075
      %v5077 = vsel %vm4953, %v4738, 0.0
      %5078 = vadd.xlane.f32.xlu0 %v5077
      %v5079 = vpop.xlane.xlu0 %5078
      %v5080 = vsel %vm4953, %v4739, 0.0
      %5081 = vadd.xlane.f32.xlu0 %v5080
      %v5082 = vpop.xlane.xlu0 %5081
      %v5083 = vsel %vm4953, %v4740, 0.0
      %5084 = vadd.xlane.f32.xlu0 %v5083
      %v5085 = vpop.xlane.xlu0 %5084
      %v5086 = vsel %vm4953, %v4741, 0.0
      %5087 = vadd.xlane.f32.xlu0 %v5086
      %v5088 = vpop.xlane.xlu0 %5087
      %v5089 = vsel %vm4953, %v4742, 0.0
      %5090 = vadd.xlane.f32.xlu0 %v5089
      %v5091 = vpop.xlane.xlu0 %5090
      %v5092 = vsel %vm4953, %v4743, 0.0
      %5093 = vadd.xlane.f32.xlu0 %v5092
      %v5094 = vpop.xlane.xlu0 %5093
      %v5095 = vsel %vm4953, %v4744, 0.0
      %5096 = vadd.xlane.f32.xlu0 %v5095
      %v5097 = vpop.xlane.xlu0 %5096
      %v5098 = vsel %vm4953, %v4745, 0.0
      %5099 = vadd.xlane.f32.xlu0 %v5098
      %v5100 = vpop.xlane.xlu0 %5099
      %v5101 = vsel %vm4953, %v4746, 0.0
      %5102 = vadd.xlane.f32.xlu0 %v5101
      %v5103 = vpop.xlane.xlu0 %5102
      %v5104 = vsel %vm4953, %v4747, 0.0
      %5105 = vadd.xlane.f32.xlu0 %v5104
      %v5106 = vpop.xlane.xlu0 %5105
      %v5107 = vsel %vm4953, %v4748, 0.0
      %5108 = vadd.xlane.f32.xlu0 %v5107
      %v5109 = vpop.xlane.xlu0 %5108
      %v5110 = vsel %vm4953, %v4749, 0.0
      %5111 = vadd.xlane.f32.xlu0 %v5110
      %v5112 = vpop.xlane.xlu0 %5111
      %v5113 = vsel %vm4953, %v4750, 0.0
      %5114 = vadd.xlane.f32.xlu0 %v5113
      %v5115 = vpop.xlane.xlu0 %5114
      %v5116 = vsel %vm4953, %v4751, 0.0
      %5117 = vadd.xlane.f32.xlu0 %v5116
      %v5118 = vpop.xlane.xlu0 %5117
      %v5119 = vsel %vm4953, %v4752, 0.0
      %5120 = vadd.xlane.f32.xlu0 %v5119
      %v5121 = vpop.xlane.xlu0 %5120
      %v5122 = vsel %vm4953, %v4753, 0.0
      %5123 = vadd.xlane.f32.xlu0 %v5122
      %v5124 = vpop.xlane.xlu0 %5123
      %v5125 = vsel %vm4953, %v4754, 0.0
      %5126 = vadd.xlane.f32.xlu0 %v5125
      %v5127 = vpop.xlane.xlu0 %5126
      %v5128 = vsel %vm4953, %v4755, 0.0
      %5129 = vadd.xlane.f32.xlu0 %v5128
      %v5130 = vpop.xlane.xlu0 %5129
      %v5131 = vsel %vm4953, %v4756, 0.0
      %5132 = vadd.xlane.f32.xlu0 %v5131
      %v5133 = vpop.xlane.xlu0 %5132
      %v5134 = vsel %vm4953, %v4757, 0.0
      %5135 = vadd.xlane.f32.xlu0 %v5134
      %v5136 = vpop.xlane.xlu0 %5135
      %v5137 = vsel %vm4953, %v4758, 0.0
      %5138 = vadd.xlane.f32.xlu0 %v5137
      %v5139 = vpop.xlane.xlu0 %5138
      %v5140 = vsel %vm4953, %v4759, 0.0
      %5141 = vadd.xlane.f32.xlu0 %v5140
      %v5142 = vpop.xlane.xlu0 %5141
      %v5143 = vsel %vm4953, %v4760, 0.0
      %5144 = vadd.xlane.f32.xlu0 %v5143
      %v5145 = vpop.xlane.xlu0 %5144
      %v5146 = vsel %vm4953, %v4761, 0.0
      %5147 = vadd.xlane.f32.xlu0 %v5146
      %v5148 = vpop.xlane.xlu0 %5147
      %v5149 = vsel %vm4953, %v4762, 0.0
      %5150 = vadd.xlane.f32.xlu0 %v5149
      %v5151 = vpop.xlane.xlu0 %5150
      %v5152 = vsel %vm4953, %v4763, 0.0
      %5153 = vadd.xlane.f32.xlu0 %v5152
      %v5154 = vpop.xlane.xlu0 %5153
      %v5155 = vsel %vm4953, %v4764, 0.0
      %5156 = vadd.xlane.f32.xlu0 %v5155
      %v5157 = vpop.xlane.xlu0 %5156
      %v5158 = vsel %vm4953, %v4765, 0.0
      %5159 = vadd.xlane.f32.xlu0 %v5158
      %v5160 = vpop.xlane.xlu0 %5159
      %v5161 = vsel %vm4953, %v4766, 0.0
      %5162 = vadd.xlane.f32.xlu0 %v5161
      %v5163 = vpop.xlane.xlu0 %5162
      %v5164 = vsel %vm4953, %v4767, 0.0
      %5165 = vadd.xlane.f32.xlu0 %v5164
      %v5166 = vpop.xlane.xlu0 %5165
      %v5167 = vsel %vm4953, %v4768, 0.0
      %5168 = vadd.xlane.f32.xlu0 %v5167
      %v5169 = vpop.xlane.xlu0 %5168
      %v5170 = vsel %vm4953, %v4769, 0.0
      %5171 = vadd.xlane.f32.xlu0 %v5170
      %v5172 = vpop.xlane.xlu0 %5171
      %v5173 = vsel %vm4953, %v4770, 0.0
      %5174 = vadd.xlane.f32.xlu0 %v5173
      %v5175 = vpop.xlane.xlu0 %5174
      %v5176 = vsel %vm4953, %v4771, 0.0
      %5177 = vadd.xlane.f32.xlu0 %v5176
      %v5178 = vpop.xlane.xlu0 %5177
      %v5179 = vsel %vm4953, %v4772, 0.0
      %5180 = vadd.xlane.f32.xlu0 %v5179
      %v5181 = vpop.xlane.xlu0 %5180
      %v5182 = vsel %vm4953, %v4773, 0.0
      %5183 = vadd.xlane.f32.xlu0 %v5182
      %v5184 = vpop.xlane.xlu0 %5183
      %v5185 = vsel %vm4953, %v4774, 0.0
      %5186 = vadd.xlane.f32.xlu0 %v5185
      %v5187 = vpop.xlane.xlu0 %5186
      %v5188 = vsel %vm4953, %v4775, 0.0
      %5189 = vadd.xlane.f32.xlu0 %v5188
      %v5190 = vpop.xlane.xlu0 %5189
      %v5191 = vsel %vm4953, %v4776, 0.0
      %5192 = vadd.xlane.f32.xlu0 %v5191
      %v5193 = vpop.xlane.xlu0 %5192
      %v5194 = vsel %vm4953, %v4777, 0.0
      %5195 = vadd.xlane.f32.xlu0 %v5194
      %v5196 = vpop.xlane.xlu0 %5195
      %v5197 = vsel %vm4953, %v4778, 0.0
      %5198 = vadd.xlane.f32.xlu0 %v5197
      %v5199 = vpop.xlane.xlu0 %5198
      %v5200 = vsel %vm4953, %v4779, 0.0
      %5201 = vadd.xlane.f32.xlu0 %v5200
      %v5202 = vpop.xlane.xlu0 %5201
      %v5203 = vsel %vm4953, %v4780, 0.0
      %5204 = vadd.xlane.f32.xlu0 %v5203
      %v5205 = vpop.xlane.xlu0 %5204
      %v5206 = vsel %vm4953, %v4781, 0.0
      %5207 = vadd.xlane.f32.xlu0 %v5206
      %v5208 = vpop.xlane.xlu0 %5207
      %v5209 = vsel %vm4953, %v4782, 0.0
      %5210 = vadd.xlane.f32.xlu0 %v5209
      %v5211 = vpop.xlane.xlu0 %5210
      %v5212 = vsel %vm4953, %v4783, 0.0
      %5213 = vadd.xlane.f32.xlu0 %v5212
      %v5214 = vpop.xlane.xlu0 %5213
      %v5215 = vsel %vm4953, %v4784, 0.0
      %5216 = vadd.xlane.f32.xlu0 %v5215
      %v5217 = vpop.xlane.xlu0 %5216
      %v5218 = vsel %vm4953, %v4785, 0.0
      %5219 = vadd.xlane.f32.xlu0 %v5218
      %v5220 = vpop.xlane.xlu0 %5219
      %v5221 = vsel %vm4953, %v4786, 0.0
      %5222 = vadd.xlane.f32.xlu0 %v5221
      %v5223 = vpop.xlane.xlu0 %5222
      %v5224 = vsel %vm4953, %v4787, 0.0
      %5225 = vadd.xlane.f32.xlu0 %v5224
      %v5226 = vpop.xlane.xlu0 %5225
      %v5227 = vsel %vm4953, %v4788, 0.0
      %5228 = vadd.xlane.f32.xlu0 %v5227
      %v5229 = vpop.xlane.xlu0 %5228
      %v5230 = vsel %vm4953, %v4789, 0.0
      %5231 = vadd.xlane.f32.xlu0 %v5230
      %v5232 = vpop.xlane.xlu0 %5231
      %v5233 = vsel %vm4953, %v4790, 0.0
      %5234 = vadd.xlane.f32.xlu0 %v5233
      %v5235 = vpop.xlane.xlu0 %5234
      %v5236 = vsel %vm4953, %v4791, 0.0
      %5237 = vadd.xlane.f32.xlu0 %v5236
      %v5238 = vpop.xlane.xlu0 %5237
      %v5239 = vsel %vm4953, %v4792, 0.0
      %5240 = vadd.xlane.f32.xlu0 %v5239
      %v5241 = vpop.xlane.xlu0 %5240
      %v5242 = vsel %vm4953, %v4793, 0.0
      %5243 = vadd.xlane.f32.xlu0 %v5242
      %v5244 = vpop.xlane.xlu0 %5243
      %v5245 = vsel %vm4953, %v4794, 0.0
      %5246 = vadd.xlane.f32.xlu0 %v5245
      %v5247 = vpop.xlane.xlu0 %5246
      %v5248 = vsel %vm4953, %v4795, 0.0
      %5249 = vadd.xlane.f32.xlu0 %v5248
      %v5250 = vpop.xlane.xlu0 %5249
      %v5251 = vsel %vm4953, %v4796, 0.0
      %5252 = vadd.xlane.f32.xlu0 %v5251
      %v5253 = vpop.xlane.xlu0 %5252
      %v5254 = vsel %vm4953, %v4797, 0.0
      %5255 = vadd.xlane.f32.xlu0 %v5254
      %v5256 = vpop.xlane.xlu0 %5255
      %v5257 = vsel %vm4953, %v4798, 0.0
      %5258 = vadd.xlane.f32.xlu0 %v5257
      %v5259 = vpop.xlane.xlu0 %5258
      %v5260 = vsel %vm4953, %v4799, 0.0
      %5261 = vadd.xlane.f32.xlu0 %v5260
      %v5262 = vpop.xlane.xlu0 %5261
      %v5263 = vsel %vm4953, %v4800, 0.0
      %5264 = vadd.xlane.f32.xlu0 %v5263
      %v5265 = vpop.xlane.xlu0 %5264
      %v5266 = vsel %vm4953, %v4801, 0.0
      %5267 = vadd.xlane.f32.xlu0 %v5266
      %v5268 = vpop.xlane.xlu0 %5267
      %v5269 = vsel %vm4953, %v4802, 0.0
      %5270 = vadd.xlane.f32.xlu0 %v5269
      %v5271 = vpop.xlane.xlu0 %5270
      %v5272 = vsel %vm4953, %v4803, 0.0
      %5273 = vadd.xlane.f32.xlu0 %v5272
      %v5274 = vpop.xlane.xlu0 %5273
      %v5275 = vsel %vm4953, %v4804, 0.0
      %5276 = vadd.xlane.f32.xlu0 %v5275
      %v5277 = vpop.xlane.xlu0 %5276
      %v5278 = vsel %vm4953, %v4805, 0.0
      %5279 = vadd.xlane.f32.xlu0 %v5278
      %v5280 = vpop.xlane.xlu0 %5279
      %v5281 = vsel %vm4953, %v4806, 0.0
      %5282 = vadd.xlane.f32.xlu0 %v5281
      %v5283 = vpop.xlane.xlu0 %5282
      %v5284 = vsel %vm4953, %v4807, 0.0
      %5285 = vadd.xlane.f32.xlu0 %v5284
      %v5286 = vpop.xlane.xlu0 %5285
      %v5287 = vsel %vm4953, %v4808, 0.0
      %5288 = vadd.xlane.f32.xlu0 %v5287
      %v5289 = vpop.xlane.xlu0 %5288
      %v5290 = vsel %vm4953, %v4809, 0.0
      %5291 = vadd.xlane.f32.xlu0 %v5290
      %v5292 = vpop.xlane.xlu0 %5291
      %v5293 = vsel %vm4953, %v4810, 0.0
      %5294 = vadd.xlane.f32.xlu0 %v5293
      %v5295 = vpop.xlane.xlu0 %5294
      %v5296 = vsel %vm4953, %v4811, 0.0
      %5297 = vadd.xlane.f32.xlu0 %v5296
      %v5298 = vpop.xlane.xlu0 %5297
      %v5299 = vsel %vm4953, %v4812, 0.0
      %5300 = vadd.xlane.f32.xlu0 %v5299
      %v5301 = vpop.xlane.xlu0 %5300
      %v5302 = vsel %vm4953, %v4813, 0.0
      %5303 = vadd.xlane.f32.xlu0 %v5302
      %v5304 = vpop.xlane.xlu0 %5303
      %v5305 = vsel %vm4953, %v4814, 0.0
      %5306 = vadd.xlane.f32.xlu0 %v5305
      %v5307 = vpop.xlane.xlu0 %5306
      %v5308 = vsel %vm4953, %v4815, 0.0
      %5309 = vadd.xlane.f32.xlu0 %v5308
      %v5310 = vpop.xlane.xlu0 %5309
      %v5311 = vsel %vm4953, %v4816, 0.0
      %5312 = vadd.xlane.f32.xlu0 %v5311
      %v5313 = vpop.xlane.xlu0 %5312
      %v5314 = vsel %vm4953, %v4817, 0.0
      %5315 = vadd.xlane.f32.xlu0 %v5314
      %v5316 = vpop.xlane.xlu0 %5315
      %v5317 = vsel %vm4953, %v4818, 0.0
      %5318 = vadd.xlane.f32.xlu0 %v5317
      %v5319 = vpop.xlane.xlu0 %5318
      %v5320 = vsel %vm4953, %v4819, 0.0
      %5321 = vadd.xlane.f32.xlu0 %v5320
      %v5322 = vpop.xlane.xlu0 %5321
      %v5323 = vsel %vm4953, %v4820, 0.0
      %5324 = vadd.xlane.f32.xlu0 %v5323
      %v5325 = vpop.xlane.xlu0 %5324
      %v5326 = vsel %vm4953, %v4821, 0.0
      %5327 = vadd.xlane.f32.xlu0 %v5326
      %v5328 = vpop.xlane.xlu0 %5327
      %v5329 = vsel %vm4953, %v4822, 0.0
      %5330 = vadd.xlane.f32.xlu0 %v5329
      %v5331 = vpop.xlane.xlu0 %5330
      %v5332 = vsel %vm4953, %v4823, 0.0
      %5333 = vadd.xlane.f32.xlu0 %v5332
      %v5334 = vpop.xlane.xlu0 %5333
      %v5335 = vsel %vm4953, %v4824, 0.0
      %5336 = vadd.xlane.f32.xlu0 %v5335
      %v5337 = vpop.xlane.xlu0 %5336
      %v5338 = vsel %vm4953, %v4825, 0.0
      %5339 = vadd.xlane.f32.xlu0 %v5338
      %v5340 = vpop.xlane.xlu0 %5339
      %v5341 = vsel %vm4953, %v4826, 0.0
      %5342 = vadd.xlane.f32.xlu0 %v5341
      %v5343 = vpop.xlane.xlu0 %5342
      %v5344 = vsel %vm4953, %v4827, 0.0
      %5345 = vadd.xlane.f32.xlu0 %v5344
      %v5346 = vpop.xlane.xlu0 %5345
      %v5347 = vsel %vm4953, %v4828, 0.0
      %5348 = vadd.xlane.f32.xlu0 %v5347
      %v5349 = vpop.xlane.xlu0 %5348
      %v5350 = vsel %vm4953, %v4829, 0.0
      %5351 = vadd.xlane.f32.xlu0 %v5350
      %v5352 = vpop.xlane.xlu0 %5351
      %v5353 = vsel %vm4953, %v4830, 0.0
      %5354 = vadd.xlane.f32.xlu0 %v5353
      %v5355 = vpop.xlane.xlu0 %5354
      %v5356 = vsel %vm4953, %v4831, 0.0
      %5357 = vadd.xlane.f32.xlu0 %v5356
      %v5358 = vpop.xlane.xlu0 %5357
      %v5359 = vsel %vm4953, %v4832, 0.0
      %5360 = vadd.xlane.f32.xlu0 %v5359
      %v5361 = vpop.xlane.xlu0 %5360
      %v5362 = vsel %vm4953, %v4833, 0.0
      %5363 = vadd.xlane.f32.xlu0 %v5362
      %v5364 = vpop.xlane.xlu0 %5363
      %v5365 = vsel %vm4953, %v4834, 0.0
      %5366 = vadd.xlane.f32.xlu0 %v5365
      %v5367 = vpop.xlane.xlu0 %5366
      %v5368 = vsel %vm4953, %v4835, 0.0
      %5369 = vadd.xlane.f32.xlu0 %v5368
      %v5370 = vpop.xlane.xlu0 %5369
      %v5371 = vsel %vm4953, %v4836, 0.0
      %5372 = vadd.xlane.f32.xlu0 %v5371
      %v5373 = vpop.xlane.xlu0 %5372
      %v5374 = vsel %vm4953, %v4837, 0.0
      %5375 = vadd.xlane.f32.xlu0 %v5374
      %v5376 = vpop.xlane.xlu0 %5375
      %v5377 = vsel %vm4953, %v4838, 0.0
      %5378 = vadd.xlane.f32.xlu0 %v5377
      %v5379 = vpop.xlane.xlu0 %5378
      %v5380 = vsel %vm4953, %v4839, 0.0
      %5381 = vadd.xlane.f32.xlu0 %v5380
      %v5382 = vpop.xlane.xlu0 %5381
      %v5383 = vsel %vm4953, %v4840, 0.0
      %5384 = vadd.xlane.f32.xlu0 %v5383
      %v5385 = vpop.xlane.xlu0 %5384
      %v5386 = vsel %vm4953, %v4841, 0.0
      %5387 = vadd.xlane.f32.xlu0 %v5386
      %v5388 = vpop.xlane.xlu0 %5387
      %v5389 = vsel %vm4953, %v4842, 0.0
      %5390 = vadd.xlane.f32.xlu0 %v5389
      %v5391 = vpop.xlane.xlu0 %5390
      %v5392 = vsel %vm4953, %v4843, 0.0
      %5393 = vadd.xlane.f32.xlu0 %v5392
      %v5394 = vpop.xlane.xlu0 %5393
      %v5395 = vsel %vm4953, %v4844, 0.0
      %5396 = vadd.xlane.f32.xlu0 %v5395
      %v5397 = vpop.xlane.xlu0 %5396
      %v5398 = vsel %vm4953, %v4845, 0.0
      %5399 = vadd.xlane.f32.xlu0 %v5398
      %v5400 = vpop.xlane.xlu0 %5399
      %v5401 = vsel %vm4953, %v4846, 0.0
      %5402 = vadd.xlane.f32.xlu0 %v5401
      %v5403 = vpop.xlane.xlu0 %5402
      %v5404 = vsel %vm4953, %v4847, 0.0
      %5405 = vadd.xlane.f32.xlu0 %v5404
      %v5406 = vpop.xlane.xlu0 %5405
      %v5407 = vsel %vm4953, %v4848, 0.0
      %5408 = vadd.xlane.f32.xlu0 %v5407
      %v5409 = vpop.xlane.xlu0 %5408
      %v5410 = vsel %vm4953, %v4849, 0.0
      %5411 = vadd.xlane.f32.xlu0 %v5410
      %v5412 = vpop.xlane.xlu0 %5411
      %v5413 = vsel %vm4953, %v4850, 0.0
      %5414 = vadd.xlane.f32.xlu0 %v5413
      %v5415 = vpop.xlane.xlu0 %5414
      %v5416 = vsel %vm4953, %v4851, 0.0
      %5417 = vadd.xlane.f32.xlu0 %v5416
      %v5418 = vpop.xlane.xlu0 %5417
      %v5419 = vsel %vm4953, %v4852, 0.0
      %5420 = vadd.xlane.f32.xlu0 %v5419
      %v5421 = vpop.xlane.xlu0 %5420
      %v5422 = vsel %vm4953, %v4853, 0.0
      %5423 = vadd.xlane.f32.xlu0 %v5422
      %v5424 = vpop.xlane.xlu0 %5423
      %v5425 = vsel %vm4953, %v4854, 0.0
      %5426 = vadd.xlane.f32.xlu0 %v5425
      %v5427 = vpop.xlane.xlu0 %5426
      %v5428 = vsel %vm4953, %v4855, 0.0
      %5429 = vadd.xlane.f32.xlu0 %v5428
      %v5430 = vpop.xlane.xlu0 %5429
      %v5431 = vsel %vm4953, %v4856, 0.0
      %5432 = vadd.xlane.f32.xlu0 %v5431
      %v5433 = vpop.xlane.xlu0 %5432
      %v5434 = vsel %vm4953, %v4857, 0.0
      %5435 = vadd.xlane.f32.xlu0 %v5434
      %v5436 = vpop.xlane.xlu0 %5435
      %v5437 = vsel %vm4953, %v4858, 0.0
      %5438 = vadd.xlane.f32.xlu0 %v5437
      %v5439 = vpop.xlane.xlu0 %5438
      %v5440 = vsel %vm4953, %v4859, 0.0
      %5441 = vadd.xlane.f32.xlu0 %v5440
      %v5442 = vpop.xlane.xlu0 %5441
      %v5443 = vsel %vm4953, %v4860, 0.0
      %5444 = vadd.xlane.f32.xlu0 %v5443
      %v5445 = vpop.xlane.xlu0 %5444
      %v5446 = vsel %vm4953, %v4861, 0.0
      %5447 = vadd.xlane.f32.xlu0 %v5446
      %v5448 = vpop.xlane.xlu0 %5447
      %v5449 = vsel %vm4953, %v4862, 0.0
      %5450 = vadd.xlane.f32.xlu0 %v5449
      %v5451 = vpop.xlane.xlu0 %5450
      %v5452 = vsel %vm4953, %v4863, 0.0
      %5453 = vadd.xlane.f32.xlu0 %v5452
      %v5454 = vpop.xlane.xlu0 %5453
      %v5455 = vsel %vm4953, %v4864, 0.0
      %5456 = vadd.xlane.f32.xlu0 %v5455
      %v5457 = vpop.xlane.xlu0 %5456
      %v5458 = vsel %vm4953, %v4865, 0.0
      %5459 = vadd.xlane.f32.xlu0 %v5458
      %v5460 = vpop.xlane.xlu0 %5459
      %v5461 = vsel %vm4953, %v4866, 0.0
      %5462 = vadd.xlane.f32.xlu0 %v5461
      %v5463 = vpop.xlane.xlu0 %5462
      %v5464 = vsel %vm4953, %v4867, 0.0
      %5465 = vadd.xlane.f32.xlu0 %v5464
      %v5466 = vpop.xlane.xlu0 %5465
      %v5467 = vsel %vm4953, %v4868, 0.0
      %5468 = vadd.xlane.f32.xlu0 %v5467
      %v5469 = vpop.xlane.xlu0 %5468
      %v5470 = vsel %vm4953, %v4869, 0.0
      %5471 = vadd.xlane.f32.xlu0 %v5470
      %v5472 = vpop.xlane.xlu0 %5471
      %v5473 = vsel %vm4953, %v4870, 0.0
      %5474 = vadd.xlane.f32.xlu0 %v5473
      %v5475 = vpop.xlane.xlu0 %5474
      %v5476 = vsel %vm4953, %v4871, 0.0
      %5477 = vadd.xlane.f32.xlu0 %v5476
      %v5478 = vpop.xlane.xlu0 %5477
      %v5479 = vsel %vm4953, %v4872, 0.0
      %5480 = vadd.xlane.f32.xlu0 %v5479
      %v5481 = vpop.xlane.xlu0 %5480
      %v5482 = vsel %vm4953, %v4873, 0.0
      %5483 = vadd.xlane.f32.xlu0 %v5482
      %v5484 = vpop.xlane.xlu0 %5483
      %v5485 = vsel %vm4953, %v4874, 0.0
      %5486 = vadd.xlane.f32.xlu0 %v5485
      %v5487 = vpop.xlane.xlu0 %5486
      %v5488 = vsel %vm4953, %v4875, 0.0
      %5489 = vadd.xlane.f32.xlu0 %v5488
      %v5490 = vpop.xlane.xlu0 %5489
      %v5491 = vsel %vm4953, %v4876, 0.0
      %5492 = vadd.xlane.f32.xlu0 %v5491
      %v5493 = vpop.xlane.xlu0 %5492
      %v5494 = vsel %vm4953, %v4877, 0.0
      %5495 = vadd.xlane.f32.xlu0 %v5494
      %v5496 = vpop.xlane.xlu0 %5495
      %v5497 = vsel %vm4953, %v4878, 0.0
      %5498 = vadd.xlane.f32.xlu0 %v5497
      %v5499 = vpop.xlane.xlu0 %5498
      %v5500 = vsel %vm4953, %v4879, 0.0
      %5501 = vadd.xlane.f32.xlu0 %v5500
      %v5502 = vpop.xlane.xlu0 %5501
      %v5503 = vsel %vm4953, %v4880, 0.0
      %5504 = vadd.xlane.f32.xlu0 %v5503
      %v5505 = vpop.xlane.xlu0 %5504
      %v5506 = vsel %vm4953, %v4881, 0.0
      %5507 = vadd.xlane.f32.xlu0 %v5506
      %v5508 = vpop.xlane.xlu0 %5507
      %v5509 = vsel %vm4953, %v4882, 0.0
      %5510 = vadd.xlane.f32.xlu0 %v5509
      %v5511 = vpop.xlane.xlu0 %5510
      %v5512 = vsel %vm4953, %v4883, 0.0
      %5513 = vadd.xlane.f32.xlu0 %v5512
      %v5514 = vpop.xlane.xlu0 %5513
      %v5515 = vsel %vm4953, %v4884, 0.0
      %5516 = vadd.xlane.f32.xlu0 %v5515
      %v5517 = vpop.xlane.xlu0 %5516
      %v5518 = vsel %vm4953, %v4885, 0.0
      %5519 = vadd.xlane.f32.xlu0 %v5518
      %v5520 = vpop.xlane.xlu0 %5519
      %v5521 = vsel %vm4953, %v4886, 0.0
      %5522 = vadd.xlane.f32.xlu0 %v5521
      %v5523 = vpop.xlane.xlu0 %5522
      %v5524 = vsel %vm4953, %v4887, 0.0
      %5525 = vadd.xlane.f32.xlu0 %v5524
      %v5526 = vpop.xlane.xlu0 %5525
      %v5527 = vsel %vm4953, %v4888, 0.0
      %5528 = vadd.xlane.f32.xlu0 %v5527
      %v5529 = vpop.xlane.xlu0 %5528
      %v5530 = vsel %vm4953, %v4889, 0.0
      %5531 = vadd.xlane.f32.xlu0 %v5530
      %v5532 = vpop.xlane.xlu0 %5531
      %v5533 = vsel %vm4953, %v4890, 0.0
      %5534 = vadd.xlane.f32.xlu0 %v5533
      %v5535 = vpop.xlane.xlu0 %5534
      %v5536 = vsel %vm4953, %v4891, 0.0
      %5537 = vadd.xlane.f32.xlu0 %v5536
      %v5538 = vpop.xlane.xlu0 %5537
      %v5539 = vsel %vm4953, %v4892, 0.0
      %5540 = vadd.xlane.f32.xlu0 %v5539
      %v5541 = vpop.xlane.xlu0 %5540
      %v5542 = vsel %vm4953, %v4893, 0.0
      %5543 = vadd.xlane.f32.xlu0 %v5542
      %v5544 = vpop.xlane.xlu0 %5543
      %v5545 = vsel %vm4953, %v4894, 0.0
      %5546 = vadd.xlane.f32.xlu0 %v5545
      %v5547 = vpop.xlane.xlu0 %5546
      %v5548 = vsel %vm4953, %v4895, 0.0
      %5549 = vadd.xlane.f32.xlu0 %v5548
      %v5550 = vpop.xlane.xlu0 %5549
      %v5551 = vsel %vm4953, %v4896, 0.0
      %5552 = vadd.xlane.f32.xlu0 %v5551
      %v5553 = vpop.xlane.xlu0 %5552
      %v5554 = vsel %vm4953, %v4897, 0.0
      %5555 = vadd.xlane.f32.xlu0 %v5554
      %v5556 = vpop.xlane.xlu0 %5555
      %v5557 = vsel %vm4953, %v4898, 0.0
      %5558 = vadd.xlane.f32.xlu0 %v5557
      %v5559 = vpop.xlane.xlu0 %5558
      %v5560 = vsel %vm4953, %v4899, 0.0
      %5561 = vadd.xlane.f32.xlu0 %v5560
      %v5562 = vpop.xlane.xlu0 %5561
      %v5563 = vsel %vm4953, %v4900, 0.0
      %5564 = vadd.xlane.f32.xlu0 %v5563
      %v5565 = vpop.xlane.xlu0 %5564
      %v5566 = vsel %vm4953, %v4901, 0.0
      %5567 = vadd.xlane.f32.xlu0 %v5566
      %v5568 = vpop.xlane.xlu0 %5567
      %v5569 = vsel %vm4953, %v4902, 0.0
      %5570 = vadd.xlane.f32.xlu0 %v5569
      %v5571 = vpop.xlane.xlu0 %5570
      %v5572 = vsel %vm4953, %v4903, 0.0
      %5573 = vadd.xlane.f32.xlu0 %v5572
      %v5574 = vpop.xlane.xlu0 %5573
      %v5575 = vsel %vm4953, %v4904, 0.0
      %5576 = vadd.xlane.f32.xlu0 %v5575
      %v5577 = vpop.xlane.xlu0 %5576
      %v5578 = vsel %vm4953, %v4905, 0.0
      %5579 = vadd.xlane.f32.xlu0 %v5578
      %v5580 = vpop.xlane.xlu0 %5579
      %v5581 = vsel %vm4953, %v4906, 0.0
      %5582 = vadd.xlane.f32.xlu0 %v5581
      %v5583 = vpop.xlane.xlu0 %5582
      %v5584 = vsel %vm4953, %v4907, 0.0
      %5585 = vadd.xlane.f32.xlu0 %v5584
      %v5586 = vpop.xlane.xlu0 %5585
      %v5587 = vsel %vm4953, %v4908, 0.0
      %5588 = vadd.xlane.f32.xlu0 %v5587
      %v5589 = vpop.xlane.xlu0 %5588
      %v5590 = vsel %vm4953, %v4909, 0.0
      %5591 = vadd.xlane.f32.xlu0 %v5590
      %v5592 = vpop.xlane.xlu0 %5591
      %v5593 = vsel %vm4953, %v4910, 0.0
      %5594 = vadd.xlane.f32.xlu0 %v5593
      %v5595 = vpop.xlane.xlu0 %5594
      %v5596 = vsel %vm4953, %v4911, 0.0
      %5597 = vadd.xlane.f32.xlu0 %v5596
      %v5598 = vpop.xlane.xlu0 %5597
      %v5599 = vsel %vm4953, %v4912, 0.0
      %5600 = vadd.xlane.f32.xlu0 %v5599
      %v5601 = vpop.xlane.xlu0 %5600
      %v5602 = vsel %vm4953, %v4913, 0.0
      %5603 = vadd.xlane.f32.xlu0 %v5602
      %v5604 = vpop.xlane.xlu0 %5603
      %v5605 = vsel %vm4953, %v4914, 0.0
      %5606 = vadd.xlane.f32.xlu0 %v5605
      %v5607 = vpop.xlane.xlu0 %5606
      %v5608 = vsel %vm4953, %v4915, 0.0
      %5609 = vadd.xlane.f32.xlu0 %v5608
      %v5610 = vpop.xlane.xlu0 %5609
      %v5611 = vsel %vm4953, %v4916, 0.0
      %5612 = vadd.xlane.f32.xlu0 %v5611
      %v5613 = vpop.xlane.xlu0 %5612
      %v5614 = vsel %vm4953, %v4917, 0.0
      %5615 = vadd.xlane.f32.xlu0 %v5614
      %v5616 = vpop.xlane.xlu0 %5615
      %v5617 = vsel %vm4953, %v4918, 0.0
      %5618 = vadd.xlane.f32.xlu0 %v5617
      %v5619 = vpop.xlane.xlu0 %5618
      %v5620 = vsel %vm4953, %v4919, 0.0
      %5621 = vadd.xlane.f32.xlu0 %v5620
      %v5622 = vpop.xlane.xlu0 %5621
      %v5623 = vsel %vm4953, %v4920, 0.0
      %5624 = vadd.xlane.f32.xlu0 %v5623
      %v5625 = vpop.xlane.xlu0 %5624
      %v5626 = vsel %vm4953, %v4921, 0.0
      %5627 = vadd.xlane.f32.xlu0 %v5626
      %v5628 = vpop.xlane.xlu0 %5627
      %v5629 = vsel %vm4953, %v4922, 0.0
      %5630 = vadd.xlane.f32.xlu0 %v5629
      %v5631 = vpop.xlane.xlu0 %5630
      %v5632 = vsel %vm4953, %v4923, 0.0
      %5633 = vadd.xlane.f32.xlu0 %v5632
      %v5634 = vpop.xlane.xlu0 %5633
      %v5635 = vsel %vm4953, %v4924, 0.0
      %5636 = vadd.xlane.f32.xlu0 %v5635
      %v5637 = vpop.xlane.xlu0 %5636
      %v5638 = vsel %vm4953, %v4925, 0.0
      %5639 = vadd.xlane.f32.xlu0 %v5638
      %v5640 = vpop.xlane.xlu0 %5639
      %v5641 = vsel %vm4953, %v4926, 0.0
      %5642 = vadd.xlane.f32.xlu0 %v5641
      %v5643 = vpop.xlane.xlu0 %5642
      %v5644 = vsel %vm4953, %v4927, 0.0
      %5645 = vadd.xlane.f32.xlu0 %v5644
      %v5646 = vpop.xlane.xlu0 %5645
      %v5647 = vsel %vm4953, %v4928, 0.0
      %5648 = vadd.xlane.f32.xlu0 %v5647
      %v5649 = vpop.xlane.xlu0 %5648
      %v5650 = vsel %vm4953, %v4929, 0.0
      %5651 = vadd.xlane.f32.xlu0 %v5650
      %v5652 = vpop.xlane.xlu0 %5651
      %v5653 = vsel %vm4953, %v4930, 0.0
      %5654 = vadd.xlane.f32.xlu0 %v5653
      %v5655 = vpop.xlane.xlu0 %5654
      %v5656 = vsel %vm4953, %v4931, 0.0
      %5657 = vadd.xlane.f32.xlu0 %v5656
      %v5658 = vpop.xlane.xlu0 %5657
      %v5659 = vsel %vm4953, %v4932, 0.0
      %5660 = vadd.xlane.f32.xlu0 %v5659
      %v5661 = vpop.xlane.xlu0 %5660
      %v5662 = vsel %vm4953, %v4933, 0.0
      %5663 = vadd.xlane.f32.xlu0 %v5662
      %v5664 = vpop.xlane.xlu0 %5663
      %v5665 = vsel %vm4953, %v4934, 0.0
      %5666 = vadd.xlane.f32.xlu0 %v5665
      %v5667 = vpop.xlane.xlu0 %5666
      %v5668 = vsel %vm4953, %v4935, 0.0
      %5669 = vadd.xlane.f32.xlu0 %v5668
      %v5670 = vpop.xlane.xlu0 %5669
      %v5671 = vsel %vm4953, %v4936, 0.0
      %5672 = vadd.xlane.f32.xlu0 %v5671
      %v5673 = vpop.xlane.xlu0 %5672
      %v5674 = vsel %vm4953, %v4937, 0.0
      %5675 = vadd.xlane.f32.xlu0 %v5674
      %v5676 = vpop.xlane.xlu0 %5675
      %v5677 = vsel %vm4953, %v4938, 0.0
      %5678 = vadd.xlane.f32.xlu0 %v5677
      %v5679 = vpop.xlane.xlu0 %5678
      %v5680 = vsel %vm4953, %v4939, 0.0
      %5681 = vadd.xlane.f32.xlu0 %v5680
      %v5682 = vpop.xlane.xlu0 %5681
      %v5683 = vsel %vm4953, %v4940, 0.0
      %5684 = vadd.xlane.f32.xlu0 %v5683
      %v5685 = vpop.xlane.xlu0 %5684
      %v5686 = vsel %vm4953, %v4941, 0.0
      %5687 = vadd.xlane.f32.xlu0 %v5686
      %v5688 = vpop.xlane.xlu0 %5687
      %v5689 = vsel %vm4953, %v4942, 0.0
      %5690 = vadd.xlane.f32.xlu0 %v5689
      %v5691 = vpop.xlane.xlu0 %5690
      %v5692 = vsel %vm4953, %v4943, 0.0
      %5693 = vadd.xlane.f32.xlu0 %v5692
      %v5694 = vpop.xlane.xlu0 %5693
      %v5695 = vsel %vm4953, %v4944, 0.0
      %5696 = vadd.xlane.f32.xlu0 %v5695
      %v5697 = vpop.xlane.xlu0 %5696
      %v5698 = vsel %vm4953, %v4945, 0.0
      %5699 = vadd.xlane.f32.xlu0 %v5698
      %v5700 = vpop.xlane.xlu0 %5699
      %v5701 = vsel %vm4953, %v4946, 0.0
      %5702 = vadd.xlane.f32.xlu0 %v5701
      %v5703 = vpop.xlane.xlu0 %5702
      %v5704 = vsel %vm4953, %v4947, 0.0
      %5705 = vadd.xlane.f32.xlu0 %v5704
      %v5706 = vpop.xlane.xlu0 %5705
      %v5707 = vsel %vm4953, %v4948, 0.0
      %5708 = vadd.xlane.f32.xlu0 %v5707
      %v5709 = vpop.xlane.xlu0 %5708
      %v5710 = vsel %vm4953, %v4949, 0.0
      %5711 = vadd.xlane.f32.xlu0 %v5710
      %v5712 = vpop.xlane.xlu0 %5711
      %v5713 = vsel %vm4953, %v4950, 0.0
      %5714 = vadd.xlane.f32.xlu0 %v5713
      %v5715 = vpop.xlane.xlu0 %5714
      %v5716 = vsel %vm4953, %v4951, 0.0
      %5717 = vadd.xlane.f32.xlu0 %v5716
      %v5718 = vpop.xlane.xlu0 %5717
      %v5719 = vsel %vm4953, %v4952, 0.0
      %5720 = vadd.xlane.f32.xlu0 %v5719
      %v5721 = vpop.xlane.xlu0 %5720
      %v5722 = vmul.f32 %v4956, 0.25
      %v5723 = vmul.f32 %v4959, 0.25
      %v5724 = vmul.f32 %v4962, 0.25
      %v5725 = vmul.f32 %v4965, 0.25
      %v5726 = vmul.f32 %v4968, 0.25
      %v5727 = vmul.f32 %v4971, 0.25
      %v5728 = vmul.f32 %v4974, 0.25
      %v5729 = vmul.f32 %v4977, 0.25
      %v5730 = vmul.f32 %v4980, 0.25
      %v5731 = vmul.f32 %v4983, 0.25
      %v5732 = vmul.f32 %v4986, 0.25
      %v5733 = vmul.f32 %v4989, 0.25
      %v5734 = vmul.f32 %v4992, 0.25
      %v5735 = vmul.f32 %v4995, 0.25
      %v5736 = vmul.f32 %v4998, 0.25
      %v5737 = vmul.f32 %v5001, 0.25
      %v5738 = vmul.f32 %v5004, 0.25
      %v5739 = vmul.f32 %v5007, 0.25
      %v5740 = vmul.f32 %v5010, 0.25
      %v5741 = vmul.f32 %v5013, 0.25
      %v5742 = vmul.f32 %v5016, 0.25
      %v5743 = vmul.f32 %v5019, 0.25
      %v5744 = vmul.f32 %v5022, 0.25
      %v5745 = vmul.f32 %v5025, 0.25
      %v5746 = vmul.f32 %v5028, 0.25
      %v5747 = vmul.f32 %v5031, 0.25
      %v5748 = vmul.f32 %v5034, 0.25
      %v5749 = vmul.f32 %v5037, 0.25
      %v5750 = vmul.f32 %v5040, 0.25
      %v5751 = vmul.f32 %v5043, 0.25
      %v5752 = vmul.f32 %v5046, 0.25
      %v5753 = vmul.f32 %v5049, 0.25
      %v5754 = vmul.f32 %v5052, 0.25
      %v5755 = vmul.f32 %v5055, 0.25
      %v5756 = vmul.f32 %v5058, 0.25
      %v5757 = vmul.f32 %v5061, 0.25
      %v5758 = vmul.f32 %v5064, 0.25
      %v5759 = vmul.f32 %v5067, 0.25
      %v5760 = vmul.f32 %v5070, 0.25
      %v5761 = vmul.f32 %v5073, 0.25
      %v5762 = vmul.f32 %v5076, 0.25
      %v5763 = vmul.f32 %v5079, 0.25
      %v5764 = vmul.f32 %v5082, 0.25
      %v5765 = vmul.f32 %v5085, 0.25
      %v5766 = vmul.f32 %v5088, 0.25
      %v5767 = vmul.f32 %v5091, 0.25
      %v5768 = vmul.f32 %v5094, 0.25
      %v5769 = vmul.f32 %v5097, 0.25
      %v5770 = vmul.f32 %v5100, 0.25
      %v5771 = vmul.f32 %v5103, 0.25
      %v5772 = vmul.f32 %v5106, 0.25
      %v5773 = vmul.f32 %v5109, 0.25
      %v5774 = vmul.f32 %v5112, 0.25
      %v5775 = vmul.f32 %v5115, 0.25
      %v5776 = vmul.f32 %v5118, 0.25
      %v5777 = vmul.f32 %v5121, 0.25
      %v5778 = vmul.f32 %v5124, 0.25
      %v5779 = vmul.f32 %v5127, 0.25
      %v5780 = vmul.f32 %v5130, 0.25
      %v5781 = vmul.f32 %v5133, 0.25
      %v5782 = vmul.f32 %v5136, 0.25
      %v5783 = vmul.f32 %v5139, 0.25
      %v5784 = vmul.f32 %v5142, 0.25
      %v5785 = vmul.f32 %v5145, 0.25
      %v5786 = vmul.f32 %v5148, 0.25
      %v5787 = vmul.f32 %v5151, 0.25
      %v5788 = vmul.f32 %v5154, 0.25
      %v5789 = vmul.f32 %v5157, 0.25
      %v5790 = vmul.f32 %v5160, 0.25
      %v5791 = vmul.f32 %v5163, 0.25
      %v5792 = vmul.f32 %v5166, 0.25
      %v5793 = vmul.f32 %v5169, 0.25
      %v5794 = vmul.f32 %v5172, 0.25
      %v5795 = vmul.f32 %v5175, 0.25
      %v5796 = vmul.f32 %v5178, 0.25
      %v5797 = vmul.f32 %v5181, 0.25
      %v5798 = vmul.f32 %v5184, 0.25
      %v5799 = vmul.f32 %v5187, 0.25
      %v5800 = vmul.f32 %v5190, 0.25
      %v5801 = vmul.f32 %v5193, 0.25
      %v5802 = vmul.f32 %v5196, 0.25
      %v5803 = vmul.f32 %v5199, 0.25
      %v5804 = vmul.f32 %v5202, 0.25
      %v5805 = vmul.f32 %v5205, 0.25
      %v5806 = vmul.f32 %v5208, 0.25
      %v5807 = vmul.f32 %v5211, 0.25
      %v5808 = vmul.f32 %v5214, 0.25
      %v5809 = vmul.f32 %v5217, 0.25
      %v5810 = vmul.f32 %v5220, 0.25
      %v5811 = vmul.f32 %v5223, 0.25
      %v5812 = vmul.f32 %v5226, 0.25
      %v5813 = vmul.f32 %v5229, 0.25
      %v5814 = vmul.f32 %v5232, 0.25
      %v5815 = vmul.f32 %v5235, 0.25
      %v5816 = vmul.f32 %v5238, 0.25
      %v5817 = vmul.f32 %v5241, 0.25
      %v5818 = vmul.f32 %v5244, 0.25
      %v5819 = vmul.f32 %v5247, 0.25
      %v5820 = vmul.f32 %v5250, 0.25
      %v5821 = vmul.f32 %v5253, 0.25
      %v5822 = vmul.f32 %v5256, 0.25
      %v5823 = vmul.f32 %v5259, 0.25
      %v5824 = vmul.f32 %v5262, 0.25
      %v5825 = vmul.f32 %v5265, 0.25
      %v5826 = vmul.f32 %v5268, 0.25
      %v5827 = vmul.f32 %v5271, 0.25
      %v5828 = vmul.f32 %v5274, 0.25
      %v5829 = vmul.f32 %v5277, 0.25
      %v5830 = vmul.f32 %v5280, 0.25
      %v5831 = vmul.f32 %v5283, 0.25
      %v5832 = vmul.f32 %v5286, 0.25
      %v5833 = vmul.f32 %v5289, 0.25
      %v5834 = vmul.f32 %v5292, 0.25
      %v5835 = vmul.f32 %v5295, 0.25
      %v5836 = vmul.f32 %v5298, 0.25
      %v5837 = vmul.f32 %v5301, 0.25
      %v5838 = vmul.f32 %v5304, 0.25
      %v5839 = vmul.f32 %v5307, 0.25
      %v5840 = vmul.f32 %v5310, 0.25
      %v5841 = vmul.f32 %v5313, 0.25
      %v5842 = vmul.f32 %v5316, 0.25
      %v5843 = vmul.f32 %v5319, 0.25
      %v5844 = vmul.f32 %v5322, 0.25
      %v5845 = vmul.f32 %v5325, 0.25
      %v5846 = vmul.f32 %v5328, 0.25
      %v5847 = vmul.f32 %v5331, 0.25
      %v5848 = vmul.f32 %v5334, 0.25
      %v5849 = vmul.f32 %v5337, 0.25
      %v5850 = vmul.f32 %v5340, 0.25
      %v5851 = vmul.f32 %v5343, 0.25
      %v5852 = vmul.f32 %v5346, 0.25
      %v5853 = vmul.f32 %v5349, 0.25
      %v5854 = vmul.f32 %v5352, 0.25
      %v5855 = vmul.f32 %v5355, 0.25
      %v5856 = vmul.f32 %v5358, 0.25
      %v5857 = vmul.f32 %v5361, 0.25
      %v5858 = vmul.f32 %v5364, 0.25
      %v5859 = vmul.f32 %v5367, 0.25
      %v5860 = vmul.f32 %v5370, 0.25
      %v5861 = vmul.f32 %v5373, 0.25
      %v5862 = vmul.f32 %v5376, 0.25
      %v5863 = vmul.f32 %v5379, 0.25
      %v5864 = vmul.f32 %v5382, 0.25
      %v5865 = vmul.f32 %v5385, 0.25
      %v5866 = vmul.f32 %v5388, 0.25
      %v5867 = vmul.f32 %v5391, 0.25
      %v5868 = vmul.f32 %v5394, 0.25
      %v5869 = vmul.f32 %v5397, 0.25
      %v5870 = vmul.f32 %v5400, 0.25
      %v5871 = vmul.f32 %v5403, 0.25
      %v5872 = vmul.f32 %v5406, 0.25
      %v5873 = vmul.f32 %v5409, 0.25
      %v5874 = vmul.f32 %v5412, 0.25
      %v5875 = vmul.f32 %v5415, 0.25
      %v5876 = vmul.f32 %v5418, 0.25
      %v5877 = vmul.f32 %v5421, 0.25
      %v5878 = vmul.f32 %v5424, 0.25
      %v5879 = vmul.f32 %v5427, 0.25
      %v5880 = vmul.f32 %v5430, 0.25
      %v5881 = vmul.f32 %v5433, 0.25
      %v5882 = vmul.f32 %v5436, 0.25
      %v5883 = vmul.f32 %v5439, 0.25
      %v5884 = vmul.f32 %v5442, 0.25
      %v5885 = vmul.f32 %v5445, 0.25
      %v5886 = vmul.f32 %v5448, 0.25
      %v5887 = vmul.f32 %v5451, 0.25
      %v5888 = vmul.f32 %v5454, 0.25
      %v5889 = vmul.f32 %v5457, 0.25
      %v5890 = vmul.f32 %v5460, 0.25
      %v5891 = vmul.f32 %v5463, 0.25
      %v5892 = vmul.f32 %v5466, 0.25
      %v5893 = vmul.f32 %v5469, 0.25
      %v5894 = vmul.f32 %v5472, 0.25
      %v5895 = vmul.f32 %v5475, 0.25
      %v5896 = vmul.f32 %v5478, 0.25
      %v5897 = vmul.f32 %v5481, 0.25
      %v5898 = vmul.f32 %v5484, 0.25
      %v5899 = vmul.f32 %v5487, 0.25
      %v5900 = vmul.f32 %v5490, 0.25
      %v5901 = vmul.f32 %v5493, 0.25
      %v5902 = vmul.f32 %v5496, 0.25
      %v5903 = vmul.f32 %v5499, 0.25
      %v5904 = vmul.f32 %v5502, 0.25
      %v5905 = vmul.f32 %v5505, 0.25
      %v5906 = vmul.f32 %v5508, 0.25
      %v5907 = vmul.f32 %v5511, 0.25
      %v5908 = vmul.f32 %v5514, 0.25
      %v5909 = vmul.f32 %v5517, 0.25
      %v5910 = vmul.f32 %v5520, 0.25
      %v5911 = vmul.f32 %v5523, 0.25
      %v5912 = vmul.f32 %v5526, 0.25
      %v5913 = vmul.f32 %v5529, 0.25
      %v5914 = vmul.f32 %v5532, 0.25
      %v5915 = vmul.f32 %v5535, 0.25
      %v5916 = vmul.f32 %v5538, 0.25
      %v5917 = vmul.f32 %v5541, 0.25
      %v5918 = vmul.f32 %v5544, 0.25
      %v5919 = vmul.f32 %v5547, 0.25
      %v5920 = vmul.f32 %v5550, 0.25
      %v5921 = vmul.f32 %v5553, 0.25
      %v5922 = vmul.f32 %v5556, 0.25
      %v5923 = vmul.f32 %v5559, 0.25
      %v5924 = vmul.f32 %v5562, 0.25
      %v5925 = vmul.f32 %v5565, 0.25
      %v5926 = vmul.f32 %v5568, 0.25
      %v5927 = vmul.f32 %v5571, 0.25
      %v5928 = vmul.f32 %v5574, 0.25
      %v5929 = vmul.f32 %v5577, 0.25
      %v5930 = vmul.f32 %v5580, 0.25
      %v5931 = vmul.f32 %v5583, 0.25
      %v5932 = vmul.f32 %v5586, 0.25
      %v5933 = vmul.f32 %v5589, 0.25
      %v5934 = vmul.f32 %v5592, 0.25
      %v5935 = vmul.f32 %v5595, 0.25
      %v5936 = vmul.f32 %v5598, 0.25
      %v5937 = vmul.f32 %v5601, 0.25
      %v5938 = vmul.f32 %v5604, 0.25
      %v5939 = vmul.f32 %v5607, 0.25
      %v5940 = vmul.f32 %v5610, 0.25
      %v5941 = vmul.f32 %v5613, 0.25
      %v5942 = vmul.f32 %v5616, 0.25
      %v5943 = vmul.f32 %v5619, 0.25
      %v5944 = vmul.f32 %v5622, 0.25
      %v5945 = vmul.f32 %v5625, 0.25
      %v5946 = vmul.f32 %v5628, 0.25
      %v5947 = vmul.f32 %v5631, 0.25
      %v5948 = vmul.f32 %v5634, 0.25
      %v5949 = vmul.f32 %v5637, 0.25
      %v5950 = vmul.f32 %v5640, 0.25
      %v5951 = vmul.f32 %v5643, 0.25
      %v5952 = vmul.f32 %v5646, 0.25
      %v5953 = vmul.f32 %v5649, 0.25
      %v5954 = vmul.f32 %v5652, 0.25
      %v5955 = vmul.f32 %v5655, 0.25
      %v5956 = vmul.f32 %v5658, 0.25
      %v5957 = vmul.f32 %v5661, 0.25
      %v5958 = vmul.f32 %v5664, 0.25
      %v5959 = vmul.f32 %v5667, 0.25
      %v5960 = vmul.f32 %v5670, 0.25
      %v5961 = vmul.f32 %v5673, 0.25
      %v5962 = vmul.f32 %v5676, 0.25
      %v5963 = vmul.f32 %v5679, 0.25
      %v5964 = vmul.f32 %v5682, 0.25
      %v5965 = vmul.f32 %v5685, 0.25
      %v5966 = vmul.f32 %v5688, 0.25
      %v5967 = vmul.f32 %v5691, 0.25
      %v5968 = vmul.f32 %v5694, 0.25
      %v5969 = vmul.f32 %v5697, 0.25
      %v5970 = vmul.f32 %v5700, 0.25
      %v5971 = vmul.f32 %v5703, 0.25
      %v5972 = vmul.f32 %v5706, 0.25
      %v5973 = vmul.f32 %v5709, 0.25
      %v5974 = vmul.f32 %v5712, 0.25
      %v5975 = vmul.f32 %v5715, 0.25
      %v5976 = vmul.f32 %v5718, 0.25
      %v5977 = vmul.f32 %v5721, 0.25
      %v6234 = vlaneseq
      %v6235 = vand.u32 %v6234, 127
      %v6236 = vlaneseq
      %v6237 = vshrl.u32 %v6236, 7
      %v6238 = vsub.s32 %v6235, %v6237
      %v6239 = vrot.slane %v5722, %v6238
      %v6240 = vadd.s32 %v6235, 4294967288
      %v6241 = vlaneseq
      %v6242 = vshrl.u32 %v6241, 7
      %v6243 = vsub.s32 %v6240, %v6242
      %v6244 = vrot.slane %v5723, %v6243
      %vm6245 = vcmask 130112
      %v6246 = vsel %vm6245, %v6244, %v6239
      %v6247 = vlaneseq
      %v6248 = vshrl.u32 %v6247, 7
      %v6249 = vsub.s32 %v6235, %v6248
      %v6250 = vrot.slane %v5724, %v6249
      %v6251 = vlaneseq
      %v6252 = vshrl.u32 %v6251, 7
      %v6253 = vsub.s32 %v6240, %v6252
      %v6254 = vrot.slane %v5725, %v6253
      %v6255 = vsel %vm6245, %v6254, %v6250
      %v6256 = vlaneseq
      %v6257 = vshrl.u32 %v6256, 7
      %v6258 = vsub.s32 %v6235, %v6257
      %v6259 = vrot.slane %v5726, %v6258
      %v6260 = vlaneseq
      %v6261 = vshrl.u32 %v6260, 7
      %v6262 = vsub.s32 %v6240, %v6261
      %v6263 = vrot.slane %v5727, %v6262
      %v6264 = vsel %vm6245, %v6263, %v6259
      %v6265 = vlaneseq
      %v6266 = vshrl.u32 %v6265, 7
      %v6267 = vsub.s32 %v6235, %v6266
      %v6268 = vrot.slane %v5728, %v6267
      %v6269 = vlaneseq
      %v6270 = vshrl.u32 %v6269, 7
      %v6271 = vsub.s32 %v6240, %v6270
      %v6272 = vrot.slane %v5729, %v6271
      %v6273 = vsel %vm6245, %v6272, %v6268
      %v6274 = vlaneseq
      %v6275 = vshrl.u32 %v6274, 7
      %v6276 = vsub.s32 %v6235, %v6275
      %v6277 = vrot.slane %v5730, %v6276
      %v6278 = vlaneseq
      %v6279 = vshrl.u32 %v6278, 7
      %v6280 = vsub.s32 %v6240, %v6279
      %v6281 = vrot.slane %v5731, %v6280
      %v6282 = vsel %vm6245, %v6281, %v6277
      %v6283 = vlaneseq
      %v6284 = vshrl.u32 %v6283, 7
      %v6285 = vsub.s32 %v6235, %v6284
      %v6286 = vrot.slane %v5732, %v6285
      %v6287 = vlaneseq
      %v6288 = vshrl.u32 %v6287, 7
      %v6289 = vsub.s32 %v6240, %v6288
      %v6290 = vrot.slane %v5733, %v6289
      %v6291 = vsel %vm6245, %v6290, %v6286
      %v6292 = vlaneseq
      %v6293 = vshrl.u32 %v6292, 7
      %v6294 = vsub.s32 %v6235, %v6293
      %v6295 = vrot.slane %v5734, %v6294
      %v6296 = vlaneseq
      %v6297 = vshrl.u32 %v6296, 7
      %v6298 = vsub.s32 %v6240, %v6297
      %v6299 = vrot.slane %v5735, %v6298
      %v6300 = vsel %vm6245, %v6299, %v6295
      %v6301 = vlaneseq
      %v6302 = vshrl.u32 %v6301, 7
      %v6303 = vsub.s32 %v6235, %v6302
      %v6304 = vrot.slane %v5736, %v6303
      %v6305 = vlaneseq
      %v6306 = vshrl.u32 %v6305, 7
      %v6307 = vsub.s32 %v6240, %v6306
      %v6308 = vrot.slane %v5737, %v6307
      %v6309 = vsel %vm6245, %v6308, %v6304
      %v6310 = vlaneseq
      %v6311 = vshrl.u32 %v6310, 7
      %v6312 = vsub.s32 %v6235, %v6311
      %v6313 = vrot.slane %v5738, %v6312
      %v6314 = vlaneseq
      %v6315 = vshrl.u32 %v6314, 7
      %v6316 = vsub.s32 %v6240, %v6315
      %v6317 = vrot.slane %v5739, %v6316
      %v6318 = vsel %vm6245, %v6317, %v6313
      %v6319 = vlaneseq
      %v6320 = vshrl.u32 %v6319, 7
      %v6321 = vsub.s32 %v6235, %v6320
      %v6322 = vrot.slane %v5740, %v6321
      %v6323 = vlaneseq
      %v6324 = vshrl.u32 %v6323, 7
      %v6325 = vsub.s32 %v6240, %v6324
      %v6326 = vrot.slane %v5741, %v6325
      %v6327 = vsel %vm6245, %v6326, %v6322
      %v6328 = vlaneseq
      %v6329 = vshrl.u32 %v6328, 7
      %v6330 = vsub.s32 %v6235, %v6329
      %v6331 = vrot.slane %v5742, %v6330
      %v6332 = vlaneseq
      %v6333 = vshrl.u32 %v6332, 7
      %v6334 = vsub.s32 %v6240, %v6333
      %v6335 = vrot.slane %v5743, %v6334
      %v6336 = vsel %vm6245, %v6335, %v6331
      %v6337 = vlaneseq
      %v6338 = vshrl.u32 %v6337, 7
      %v6339 = vsub.s32 %v6235, %v6338
      %v6340 = vrot.slane %v5744, %v6339
      %v6341 = vlaneseq
      %v6342 = vshrl.u32 %v6341, 7
      %v6343 = vsub.s32 %v6240, %v6342
      %v6344 = vrot.slane %v5745, %v6343
      %v6345 = vsel %vm6245, %v6344, %v6340
      %v6346 = vlaneseq
      %v6347 = vshrl.u32 %v6346, 7
      %v6348 = vsub.s32 %v6235, %v6347
      %v6349 = vrot.slane %v5746, %v6348
      %v6350 = vlaneseq
      %v6351 = vshrl.u32 %v6350, 7
      %v6352 = vsub.s32 %v6240, %v6351
      %v6353 = vrot.slane %v5747, %v6352
      %v6354 = vsel %vm6245, %v6353, %v6349
      %v6355 = vlaneseq
      %v6356 = vshrl.u32 %v6355, 7
      %v6357 = vsub.s32 %v6235, %v6356
      %v6358 = vrot.slane %v5748, %v6357
      %v6359 = vlaneseq
      %v6360 = vshrl.u32 %v6359, 7
      %v6361 = vsub.s32 %v6240, %v6360
      %v6362 = vrot.slane %v5749, %v6361
      %v6363 = vsel %vm6245, %v6362, %v6358
      %v6364 = vlaneseq
      %v6365 = vshrl.u32 %v6364, 7
      %v6366 = vsub.s32 %v6235, %v6365
      %v6367 = vrot.slane %v5750, %v6366
      %v6368 = vlaneseq
      %v6369 = vshrl.u32 %v6368, 7
      %v6370 = vsub.s32 %v6240, %v6369
      %v6371 = vrot.slane %v5751, %v6370
      %v6372 = vsel %vm6245, %v6371, %v6367
      %v6373 = vlaneseq
      %v6374 = vshrl.u32 %v6373, 7
      %v6375 = vsub.s32 %v6235, %v6374
      %v6376 = vrot.slane %v5752, %v6375
      %v6377 = vlaneseq
      %v6378 = vshrl.u32 %v6377, 7
      %v6379 = vsub.s32 %v6240, %v6378
      %v6380 = vrot.slane %v5753, %v6379
      %v6381 = vsel %vm6245, %v6380, %v6376
      %v6382 = vlaneseq
      %v6383 = vshrl.u32 %v6382, 7
      %v6384 = vsub.s32 %v6235, %v6383
      %v6385 = vrot.slane %v5754, %v6384
      %v6386 = vlaneseq
      %v6387 = vshrl.u32 %v6386, 7
      %v6388 = vsub.s32 %v6240, %v6387
      %v6389 = vrot.slane %v5755, %v6388
      %v6390 = vsel %vm6245, %v6389, %v6385
      %v6391 = vlaneseq
      %v6392 = vshrl.u32 %v6391, 7
      %v6393 = vsub.s32 %v6235, %v6392
      %v6394 = vrot.slane %v5756, %v6393
      %v6395 = vlaneseq
      %v6396 = vshrl.u32 %v6395, 7
      %v6397 = vsub.s32 %v6240, %v6396
      %v6398 = vrot.slane %v5757, %v6397
      %v6399 = vsel %vm6245, %v6398, %v6394
      %v6400 = vlaneseq
      %v6401 = vshrl.u32 %v6400, 7
      %v6402 = vsub.s32 %v6235, %v6401
      %v6403 = vrot.slane %v5758, %v6402
      %v6404 = vlaneseq
      %v6405 = vshrl.u32 %v6404, 7
      %v6406 = vsub.s32 %v6240, %v6405
      %v6407 = vrot.slane %v5759, %v6406
      %v6408 = vsel %vm6245, %v6407, %v6403
      %v6409 = vlaneseq
      %v6410 = vshrl.u32 %v6409, 7
      %v6411 = vsub.s32 %v6235, %v6410
      %v6412 = vrot.slane %v5760, %v6411
      %v6413 = vlaneseq
      %v6414 = vshrl.u32 %v6413, 7
      %v6415 = vsub.s32 %v6240, %v6414
      %v6416 = vrot.slane %v5761, %v6415
      %v6417 = vsel %vm6245, %v6416, %v6412
      %v6418 = vlaneseq
      %v6419 = vshrl.u32 %v6418, 7
      %v6420 = vsub.s32 %v6235, %v6419
      %v6421 = vrot.slane %v5762, %v6420
      %v6422 = vlaneseq
      %v6423 = vshrl.u32 %v6422, 7
      %v6424 = vsub.s32 %v6240, %v6423
      %v6425 = vrot.slane %v5763, %v6424
      %v6426 = vsel %vm6245, %v6425, %v6421
      %v6427 = vlaneseq
      %v6428 = vshrl.u32 %v6427, 7
      %v6429 = vsub.s32 %v6235, %v6428
      %v6430 = vrot.slane %v5764, %v6429
      %v6431 = vlaneseq
      %v6432 = vshrl.u32 %v6431, 7
      %v6433 = vsub.s32 %v6240, %v6432
      %v6434 = vrot.slane %v5765, %v6433
      %v6435 = vsel %vm6245, %v6434, %v6430
      %v6436 = vlaneseq
      %v6437 = vshrl.u32 %v6436, 7
      %v6438 = vsub.s32 %v6235, %v6437
      %v6439 = vrot.slane %v5766, %v6438
      %v6440 = vlaneseq
      %v6441 = vshrl.u32 %v6440, 7
      %v6442 = vsub.s32 %v6240, %v6441
      %v6443 = vrot.slane %v5767, %v6442
      %v6444 = vsel %vm6245, %v6443, %v6439
      %v6445 = vlaneseq
      %v6446 = vshrl.u32 %v6445, 7
      %v6447 = vsub.s32 %v6235, %v6446
      %v6448 = vrot.slane %v5768, %v6447
      %v6449 = vlaneseq
      %v6450 = vshrl.u32 %v6449, 7
      %v6451 = vsub.s32 %v6240, %v6450
      %v6452 = vrot.slane %v5769, %v6451
      %v6453 = vsel %vm6245, %v6452, %v6448
      %v6454 = vlaneseq
      %v6455 = vshrl.u32 %v6454, 7
      %v6456 = vsub.s32 %v6235, %v6455
      %v6457 = vrot.slane %v5770, %v6456
      %v6458 = vlaneseq
      %v6459 = vshrl.u32 %v6458, 7
      %v6460 = vsub.s32 %v6240, %v6459
      %v6461 = vrot.slane %v5771, %v6460
      %v6462 = vsel %vm6245, %v6461, %v6457
      %v6463 = vlaneseq
      %v6464 = vshrl.u32 %v6463, 7
      %v6465 = vsub.s32 %v6235, %v6464
      %v6466 = vrot.slane %v5772, %v6465
      %v6467 = vlaneseq
      %v6468 = vshrl.u32 %v6467, 7
      %v6469 = vsub.s32 %v6240, %v6468
      %v6470 = vrot.slane %v5773, %v6469
      %v6471 = vsel %vm6245, %v6470, %v6466
      %v6472 = vlaneseq
      %v6473 = vshrl.u32 %v6472, 7
      %v6474 = vsub.s32 %v6235, %v6473
      %v6475 = vrot.slane %v5774, %v6474
      %v6476 = vlaneseq
      %v6477 = vshrl.u32 %v6476, 7
      %v6478 = vsub.s32 %v6240, %v6477
      %v6479 = vrot.slane %v5775, %v6478
      %v6480 = vsel %vm6245, %v6479, %v6475
      %v6481 = vlaneseq
      %v6482 = vshrl.u32 %v6481, 7
      %v6483 = vsub.s32 %v6235, %v6482
      %v6484 = vrot.slane %v5776, %v6483
      %v6485 = vlaneseq
      %v6486 = vshrl.u32 %v6485, 7
      %v6487 = vsub.s32 %v6240, %v6486
      %v6488 = vrot.slane %v5777, %v6487
      %v6489 = vsel %vm6245, %v6488, %v6484
      %v6490 = vlaneseq
      %v6491 = vshrl.u32 %v6490, 7
      %v6492 = vsub.s32 %v6235, %v6491
      %v6493 = vrot.slane %v5778, %v6492
      %v6494 = vlaneseq
      %v6495 = vshrl.u32 %v6494, 7
      %v6496 = vsub.s32 %v6240, %v6495
      %v6497 = vrot.slane %v5779, %v6496
      %v6498 = vsel %vm6245, %v6497, %v6493
      %v6499 = vlaneseq
      %v6500 = vshrl.u32 %v6499, 7
      %v6501 = vsub.s32 %v6235, %v6500
      %v6502 = vrot.slane %v5780, %v6501
      %v6503 = vlaneseq
      %v6504 = vshrl.u32 %v6503, 7
      %v6505 = vsub.s32 %v6240, %v6504
      %v6506 = vrot.slane %v5781, %v6505
      %v6507 = vsel %vm6245, %v6506, %v6502
      %v6508 = vlaneseq
      %v6509 = vshrl.u32 %v6508, 7
      %v6510 = vsub.s32 %v6235, %v6509
      %v6511 = vrot.slane %v5782, %v6510
      %v6512 = vlaneseq
      %v6513 = vshrl.u32 %v6512, 7
      %v6514 = vsub.s32 %v6240, %v6513
      %v6515 = vrot.slane %v5783, %v6514
      %v6516 = vsel %vm6245, %v6515, %v6511
      %v6517 = vlaneseq
      %v6518 = vshrl.u32 %v6517, 7
      %v6519 = vsub.s32 %v6235, %v6518
      %v6520 = vrot.slane %v5784, %v6519
      %v6521 = vlaneseq
      %v6522 = vshrl.u32 %v6521, 7
      %v6523 = vsub.s32 %v6240, %v6522
      %v6524 = vrot.slane %v5785, %v6523
      %v6525 = vsel %vm6245, %v6524, %v6520
      %v6526 = vlaneseq
      %v6527 = vshrl.u32 %v6526, 7
      %v6528 = vsub.s32 %v6235, %v6527
      %v6529 = vrot.slane %v5786, %v6528
      %v6530 = vlaneseq
      %v6531 = vshrl.u32 %v6530, 7
      %v6532 = vsub.s32 %v6240, %v6531
      %v6533 = vrot.slane %v5787, %v6532
      %v6534 = vsel %vm6245, %v6533, %v6529
      %v6535 = vlaneseq
      %v6536 = vshrl.u32 %v6535, 7
      %v6537 = vsub.s32 %v6235, %v6536
      %v6538 = vrot.slane %v5788, %v6537
      %v6539 = vlaneseq
      %v6540 = vshrl.u32 %v6539, 7
      %v6541 = vsub.s32 %v6240, %v6540
      %v6542 = vrot.slane %v5789, %v6541
      %v6543 = vsel %vm6245, %v6542, %v6538
      %v6544 = vlaneseq
      %v6545 = vshrl.u32 %v6544, 7
      %v6546 = vsub.s32 %v6235, %v6545
      %v6547 = vrot.slane %v5790, %v6546
      %v6548 = vlaneseq
      %v6549 = vshrl.u32 %v6548, 7
      %v6550 = vsub.s32 %v6240, %v6549
      %v6551 = vrot.slane %v5791, %v6550
      %v6552 = vsel %vm6245, %v6551, %v6547
      %v6553 = vlaneseq
      %v6554 = vshrl.u32 %v6553, 7
      %v6555 = vsub.s32 %v6235, %v6554
      %v6556 = vrot.slane %v5792, %v6555
      %v6557 = vlaneseq
      %v6558 = vshrl.u32 %v6557, 7
      %v6559 = vsub.s32 %v6240, %v6558
      %v6560 = vrot.slane %v5793, %v6559
      %v6561 = vsel %vm6245, %v6560, %v6556
      %v6562 = vlaneseq
      %v6563 = vshrl.u32 %v6562, 7
      %v6564 = vsub.s32 %v6235, %v6563
      %v6565 = vrot.slane %v5794, %v6564
      %v6566 = vlaneseq
      %v6567 = vshrl.u32 %v6566, 7
      %v6568 = vsub.s32 %v6240, %v6567
      %v6569 = vrot.slane %v5795, %v6568
      %v6570 = vsel %vm6245, %v6569, %v6565
      %v6571 = vlaneseq
      %v6572 = vshrl.u32 %v6571, 7
      %v6573 = vsub.s32 %v6235, %v6572
      %v6574 = vrot.slane %v5796, %v6573
      %v6575 = vlaneseq
      %v6576 = vshrl.u32 %v6575, 7
      %v6577 = vsub.s32 %v6240, %v6576
      %v6578 = vrot.slane %v5797, %v6577
      %v6579 = vsel %vm6245, %v6578, %v6574
      %v6580 = vlaneseq
      %v6581 = vshrl.u32 %v6580, 7
      %v6582 = vsub.s32 %v6235, %v6581
      %v6583 = vrot.slane %v5798, %v6582
      %v6584 = vlaneseq
      %v6585 = vshrl.u32 %v6584, 7
      %v6586 = vsub.s32 %v6240, %v6585
      %v6587 = vrot.slane %v5799, %v6586
      %v6588 = vsel %vm6245, %v6587, %v6583
      %v6589 = vlaneseq
      %v6590 = vshrl.u32 %v6589, 7
      %v6591 = vsub.s32 %v6235, %v6590
      %v6592 = vrot.slane %v5800, %v6591
      %v6593 = vlaneseq
      %v6594 = vshrl.u32 %v6593, 7
      %v6595 = vsub.s32 %v6240, %v6594
      %v6596 = vrot.slane %v5801, %v6595
      %v6597 = vsel %vm6245, %v6596, %v6592
      %v6598 = vlaneseq
      %v6599 = vshrl.u32 %v6598, 7
      %v6600 = vsub.s32 %v6235, %v6599
      %v6601 = vrot.slane %v5802, %v6600
      %v6602 = vlaneseq
      %v6603 = vshrl.u32 %v6602, 7
      %v6604 = vsub.s32 %v6240, %v6603
      %v6605 = vrot.slane %v5803, %v6604
      %v6606 = vsel %vm6245, %v6605, %v6601
      %v6607 = vlaneseq
      %v6608 = vshrl.u32 %v6607, 7
      %v6609 = vsub.s32 %v6235, %v6608
      %v6610 = vrot.slane %v5804, %v6609
      %v6611 = vlaneseq
      %v6612 = vshrl.u32 %v6611, 7
      %v6613 = vsub.s32 %v6240, %v6612
      %v6614 = vrot.slane %v5805, %v6613
      %v6615 = vsel %vm6245, %v6614, %v6610
      %v6616 = vlaneseq
      %v6617 = vshrl.u32 %v6616, 7
      %v6618 = vsub.s32 %v6235, %v6617
      %v6619 = vrot.slane %v5806, %v6618
      %v6620 = vlaneseq
      %v6621 = vshrl.u32 %v6620, 7
      %v6622 = vsub.s32 %v6240, %v6621
      %v6623 = vrot.slane %v5807, %v6622
      %v6624 = vsel %vm6245, %v6623, %v6619
      %v6625 = vlaneseq
      %v6626 = vshrl.u32 %v6625, 7
      %v6627 = vsub.s32 %v6235, %v6626
      %v6628 = vrot.slane %v5808, %v6627
      %v6629 = vlaneseq
      %v6630 = vshrl.u32 %v6629, 7
      %v6631 = vsub.s32 %v6240, %v6630
      %v6632 = vrot.slane %v5809, %v6631
      %v6633 = vsel %vm6245, %v6632, %v6628
      %v6634 = vlaneseq
      %v6635 = vshrl.u32 %v6634, 7
      %v6636 = vsub.s32 %v6235, %v6635
      %v6637 = vrot.slane %v5810, %v6636
      %v6638 = vlaneseq
      %v6639 = vshrl.u32 %v6638, 7
      %v6640 = vsub.s32 %v6240, %v6639
      %v6641 = vrot.slane %v5811, %v6640
      %v6642 = vsel %vm6245, %v6641, %v6637
      %v6643 = vlaneseq
      %v6644 = vshrl.u32 %v6643, 7
      %v6645 = vsub.s32 %v6235, %v6644
      %v6646 = vrot.slane %v5812, %v6645
      %v6647 = vlaneseq
      %v6648 = vshrl.u32 %v6647, 7
      %v6649 = vsub.s32 %v6240, %v6648
      %v6650 = vrot.slane %v5813, %v6649
      %v6651 = vsel %vm6245, %v6650, %v6646
      %v6652 = vlaneseq
      %v6653 = vshrl.u32 %v6652, 7
      %v6654 = vsub.s32 %v6235, %v6653
      %v6655 = vrot.slane %v5814, %v6654
      %v6656 = vlaneseq
      %v6657 = vshrl.u32 %v6656, 7
      %v6658 = vsub.s32 %v6240, %v6657
      %v6659 = vrot.slane %v5815, %v6658
      %v6660 = vsel %vm6245, %v6659, %v6655
      %v6661 = vlaneseq
      %v6662 = vshrl.u32 %v6661, 7
      %v6663 = vsub.s32 %v6235, %v6662
      %v6664 = vrot.slane %v5816, %v6663
      %v6665 = vlaneseq
      %v6666 = vshrl.u32 %v6665, 7
      %v6667 = vsub.s32 %v6240, %v6666
      %v6668 = vrot.slane %v5817, %v6667
      %v6669 = vsel %vm6245, %v6668, %v6664
      %v6670 = vlaneseq
      %v6671 = vshrl.u32 %v6670, 7
      %v6672 = vsub.s32 %v6235, %v6671
      %v6673 = vrot.slane %v5818, %v6672
      %v6674 = vlaneseq
      %v6675 = vshrl.u32 %v6674, 7
      %v6676 = vsub.s32 %v6240, %v6675
      %v6677 = vrot.slane %v5819, %v6676
      %v6678 = vsel %vm6245, %v6677, %v6673
      %v6679 = vlaneseq
      %v6680 = vshrl.u32 %v6679, 7
      %v6681 = vsub.s32 %v6235, %v6680
      %v6682 = vrot.slane %v5820, %v6681
      %v6683 = vlaneseq
      %v6684 = vshrl.u32 %v6683, 7
      %v6685 = vsub.s32 %v6240, %v6684
      %v6686 = vrot.slane %v5821, %v6685
      %v6687 = vsel %vm6245, %v6686, %v6682
      %v6688 = vlaneseq
      %v6689 = vshrl.u32 %v6688, 7
      %v6690 = vsub.s32 %v6235, %v6689
      %v6691 = vrot.slane %v5822, %v6690
      %v6692 = vlaneseq
      %v6693 = vshrl.u32 %v6692, 7
      %v6694 = vsub.s32 %v6240, %v6693
      %v6695 = vrot.slane %v5823, %v6694
      %v6696 = vsel %vm6245, %v6695, %v6691
      %v6697 = vlaneseq
      %v6698 = vshrl.u32 %v6697, 7
      %v6699 = vsub.s32 %v6235, %v6698
      %v6700 = vrot.slane %v5824, %v6699
      %v6701 = vlaneseq
      %v6702 = vshrl.u32 %v6701, 7
      %v6703 = vsub.s32 %v6240, %v6702
      %v6704 = vrot.slane %v5825, %v6703
      %v6705 = vsel %vm6245, %v6704, %v6700
      %v6706 = vlaneseq
      %v6707 = vshrl.u32 %v6706, 7
      %v6708 = vsub.s32 %v6235, %v6707
      %v6709 = vrot.slane %v5826, %v6708
      %v6710 = vlaneseq
      %v6711 = vshrl.u32 %v6710, 7
      %v6712 = vsub.s32 %v6240, %v6711
      %v6713 = vrot.slane %v5827, %v6712
      %v6714 = vsel %vm6245, %v6713, %v6709
      %v6715 = vlaneseq
      %v6716 = vshrl.u32 %v6715, 7
      %v6717 = vsub.s32 %v6235, %v6716
      %v6718 = vrot.slane %v5828, %v6717
      %v6719 = vlaneseq
      %v6720 = vshrl.u32 %v6719, 7
      %v6721 = vsub.s32 %v6240, %v6720
      %v6722 = vrot.slane %v5829, %v6721
      %v6723 = vsel %vm6245, %v6722, %v6718
      %v6724 = vlaneseq
      %v6725 = vshrl.u32 %v6724, 7
      %v6726 = vsub.s32 %v6235, %v6725
      %v6727 = vrot.slane %v5830, %v6726
      %v6728 = vlaneseq
      %v6729 = vshrl.u32 %v6728, 7
      %v6730 = vsub.s32 %v6240, %v6729
      %v6731 = vrot.slane %v5831, %v6730
      %v6732 = vsel %vm6245, %v6731, %v6727
      %v6733 = vlaneseq
      %v6734 = vshrl.u32 %v6733, 7
      %v6735 = vsub.s32 %v6235, %v6734
      %v6736 = vrot.slane %v5832, %v6735
      %v6737 = vlaneseq
      %v6738 = vshrl.u32 %v6737, 7
      %v6739 = vsub.s32 %v6240, %v6738
      %v6740 = vrot.slane %v5833, %v6739
      %v6741 = vsel %vm6245, %v6740, %v6736
      %v6742 = vlaneseq
      %v6743 = vshrl.u32 %v6742, 7
      %v6744 = vsub.s32 %v6235, %v6743
      %v6745 = vrot.slane %v5834, %v6744
      %v6746 = vlaneseq
      %v6747 = vshrl.u32 %v6746, 7
      %v6748 = vsub.s32 %v6240, %v6747
      %v6749 = vrot.slane %v5835, %v6748
      %v6750 = vsel %vm6245, %v6749, %v6745
      %v6751 = vlaneseq
      %v6752 = vshrl.u32 %v6751, 7
      %v6753 = vsub.s32 %v6235, %v6752
      %v6754 = vrot.slane %v5836, %v6753
      %v6755 = vlaneseq
      %v6756 = vshrl.u32 %v6755, 7
      %v6757 = vsub.s32 %v6240, %v6756
      %v6758 = vrot.slane %v5837, %v6757
      %v6759 = vsel %vm6245, %v6758, %v6754
      %v6760 = vlaneseq
      %v6761 = vshrl.u32 %v6760, 7
      %v6762 = vsub.s32 %v6235, %v6761
      %v6763 = vrot.slane %v5838, %v6762
      %v6764 = vlaneseq
      %v6765 = vshrl.u32 %v6764, 7
      %v6766 = vsub.s32 %v6240, %v6765
      %v6767 = vrot.slane %v5839, %v6766
      %v6768 = vsel %vm6245, %v6767, %v6763
      %v6769 = vlaneseq
      %v6770 = vshrl.u32 %v6769, 7
      %v6771 = vsub.s32 %v6235, %v6770
      %v6772 = vrot.slane %v5840, %v6771
      %v6773 = vlaneseq
      %v6774 = vshrl.u32 %v6773, 7
      %v6775 = vsub.s32 %v6240, %v6774
      %v6776 = vrot.slane %v5841, %v6775
      %v6777 = vsel %vm6245, %v6776, %v6772
      %v6778 = vlaneseq
      %v6779 = vshrl.u32 %v6778, 7
      %v6780 = vsub.s32 %v6235, %v6779
      %v6781 = vrot.slane %v5842, %v6780
      %v6782 = vlaneseq
      %v6783 = vshrl.u32 %v6782, 7
      %v6784 = vsub.s32 %v6240, %v6783
      %v6785 = vrot.slane %v5843, %v6784
      %v6786 = vsel %vm6245, %v6785, %v6781
      %v6787 = vlaneseq
      %v6788 = vshrl.u32 %v6787, 7
      %v6789 = vsub.s32 %v6235, %v6788
      %v6790 = vrot.slane %v5844, %v6789
      %v6791 = vlaneseq
      %v6792 = vshrl.u32 %v6791, 7
      %v6793 = vsub.s32 %v6240, %v6792
      %v6794 = vrot.slane %v5845, %v6793
      %v6795 = vsel %vm6245, %v6794, %v6790
      %v6796 = vlaneseq
      %v6797 = vshrl.u32 %v6796, 7
      %v6798 = vsub.s32 %v6235, %v6797
      %v6799 = vrot.slane %v5846, %v6798
      %v6800 = vlaneseq
      %v6801 = vshrl.u32 %v6800, 7
      %v6802 = vsub.s32 %v6240, %v6801
      %v6803 = vrot.slane %v5847, %v6802
      %v6804 = vsel %vm6245, %v6803, %v6799
      %v6805 = vlaneseq
      %v6806 = vshrl.u32 %v6805, 7
      %v6807 = vsub.s32 %v6235, %v6806
      %v6808 = vrot.slane %v5848, %v6807
      %v6809 = vlaneseq
      %v6810 = vshrl.u32 %v6809, 7
      %v6811 = vsub.s32 %v6240, %v6810
      %v6812 = vrot.slane %v5849, %v6811
      %v6813 = vsel %vm6245, %v6812, %v6808
      %v6814 = vlaneseq
      %v6815 = vshrl.u32 %v6814, 7
      %v6816 = vsub.s32 %v6235, %v6815
      %v6817 = vrot.slane %v5850, %v6816
      %v6818 = vlaneseq
      %v6819 = vshrl.u32 %v6818, 7
      %v6820 = vsub.s32 %v6240, %v6819
      %v6821 = vrot.slane %v5851, %v6820
      %v6822 = vsel %vm6245, %v6821, %v6817
      %v6823 = vlaneseq
      %v6824 = vshrl.u32 %v6823, 7
      %v6825 = vsub.s32 %v6235, %v6824
      %v6826 = vrot.slane %v5852, %v6825
      %v6827 = vlaneseq
      %v6828 = vshrl.u32 %v6827, 7
      %v6829 = vsub.s32 %v6240, %v6828
      %v6830 = vrot.slane %v5853, %v6829
      %v6831 = vsel %vm6245, %v6830, %v6826
      %v6832 = vlaneseq
      %v6833 = vshrl.u32 %v6832, 7
      %v6834 = vsub.s32 %v6235, %v6833
      %v6835 = vrot.slane %v5854, %v6834
      %v6836 = vlaneseq
      %v6837 = vshrl.u32 %v6836, 7
      %v6838 = vsub.s32 %v6240, %v6837
      %v6839 = vrot.slane %v5855, %v6838
      %v6840 = vsel %vm6245, %v6839, %v6835
      %v6841 = vlaneseq
      %v6842 = vshrl.u32 %v6841, 7
      %v6843 = vsub.s32 %v6235, %v6842
      %v6844 = vrot.slane %v5856, %v6843
      %v6845 = vlaneseq
      %v6846 = vshrl.u32 %v6845, 7
      %v6847 = vsub.s32 %v6240, %v6846
      %v6848 = vrot.slane %v5857, %v6847
      %v6849 = vsel %vm6245, %v6848, %v6844
      %v6850 = vlaneseq
      %v6851 = vshrl.u32 %v6850, 7
      %v6852 = vsub.s32 %v6235, %v6851
      %v6853 = vrot.slane %v5858, %v6852
      %v6854 = vlaneseq
      %v6855 = vshrl.u32 %v6854, 7
      %v6856 = vsub.s32 %v6240, %v6855
      %v6857 = vrot.slane %v5859, %v6856
      %v6858 = vsel %vm6245, %v6857, %v6853
      %v6859 = vlaneseq
      %v6860 = vshrl.u32 %v6859, 7
      %v6861 = vsub.s32 %v6235, %v6860
      %v6862 = vrot.slane %v5860, %v6861
      %v6863 = vlaneseq
      %v6864 = vshrl.u32 %v6863, 7
      %v6865 = vsub.s32 %v6240, %v6864
      %v6866 = vrot.slane %v5861, %v6865
      %v6867 = vsel %vm6245, %v6866, %v6862
      %v6868 = vlaneseq
      %v6869 = vshrl.u32 %v6868, 7
      %v6870 = vsub.s32 %v6235, %v6869
      %v6871 = vrot.slane %v5862, %v6870
      %v6872 = vlaneseq
      %v6873 = vshrl.u32 %v6872, 7
      %v6874 = vsub.s32 %v6240, %v6873
      %v6875 = vrot.slane %v5863, %v6874
      %v6876 = vsel %vm6245, %v6875, %v6871
      %v6877 = vlaneseq
      %v6878 = vshrl.u32 %v6877, 7
      %v6879 = vsub.s32 %v6235, %v6878
      %v6880 = vrot.slane %v5864, %v6879
      %v6881 = vlaneseq
      %v6882 = vshrl.u32 %v6881, 7
      %v6883 = vsub.s32 %v6240, %v6882
      %v6884 = vrot.slane %v5865, %v6883
      %v6885 = vsel %vm6245, %v6884, %v6880
      %v6886 = vlaneseq
      %v6887 = vshrl.u32 %v6886, 7
      %v6888 = vsub.s32 %v6235, %v6887
      %v6889 = vrot.slane %v5866, %v6888
      %v6890 = vlaneseq
      %v6891 = vshrl.u32 %v6890, 7
      %v6892 = vsub.s32 %v6240, %v6891
      %v6893 = vrot.slane %v5867, %v6892
      %v6894 = vsel %vm6245, %v6893, %v6889
      %v6895 = vlaneseq
      %v6896 = vshrl.u32 %v6895, 7
      %v6897 = vsub.s32 %v6235, %v6896
      %v6898 = vrot.slane %v5868, %v6897
      %v6899 = vlaneseq
      %v6900 = vshrl.u32 %v6899, 7
      %v6901 = vsub.s32 %v6240, %v6900
      %v6902 = vrot.slane %v5869, %v6901
      %v6903 = vsel %vm6245, %v6902, %v6898
      %v6904 = vlaneseq
      %v6905 = vshrl.u32 %v6904, 7
      %v6906 = vsub.s32 %v6235, %v6905
      %v6907 = vrot.slane %v5870, %v6906
      %v6908 = vlaneseq
      %v6909 = vshrl.u32 %v6908, 7
      %v6910 = vsub.s32 %v6240, %v6909
      %v6911 = vrot.slane %v5871, %v6910
      %v6912 = vsel %vm6245, %v6911, %v6907
      %v6913 = vlaneseq
      %v6914 = vshrl.u32 %v6913, 7
      %v6915 = vsub.s32 %v6235, %v6914
      %v6916 = vrot.slane %v5872, %v6915
      %v6917 = vlaneseq
      %v6918 = vshrl.u32 %v6917, 7
      %v6919 = vsub.s32 %v6240, %v6918
      %v6920 = vrot.slane %v5873, %v6919
      %v6921 = vsel %vm6245, %v6920, %v6916
      %v6922 = vlaneseq
      %v6923 = vshrl.u32 %v6922, 7
      %v6924 = vsub.s32 %v6235, %v6923
      %v6925 = vrot.slane %v5874, %v6924
      %v6926 = vlaneseq
      %v6927 = vshrl.u32 %v6926, 7
      %v6928 = vsub.s32 %v6240, %v6927
      %v6929 = vrot.slane %v5875, %v6928
      %v6930 = vsel %vm6245, %v6929, %v6925
      %v6931 = vlaneseq
      %v6932 = vshrl.u32 %v6931, 7
      %v6933 = vsub.s32 %v6235, %v6932
      %v6934 = vrot.slane %v5876, %v6933
      %v6935 = vlaneseq
      %v6936 = vshrl.u32 %v6935, 7
      %v6937 = vsub.s32 %v6240, %v6936
      %v6938 = vrot.slane %v5877, %v6937
      %v6939 = vsel %vm6245, %v6938, %v6934
      %v6940 = vlaneseq
      %v6941 = vshrl.u32 %v6940, 7
      %v6942 = vsub.s32 %v6235, %v6941
      %v6943 = vrot.slane %v5878, %v6942
      %v6944 = vlaneseq
      %v6945 = vshrl.u32 %v6944, 7
      %v6946 = vsub.s32 %v6240, %v6945
      %v6947 = vrot.slane %v5879, %v6946
      %v6948 = vsel %vm6245, %v6947, %v6943
      %v6949 = vlaneseq
      %v6950 = vshrl.u32 %v6949, 7
      %v6951 = vsub.s32 %v6235, %v6950
      %v6952 = vrot.slane %v5880, %v6951
      %v6953 = vlaneseq
      %v6954 = vshrl.u32 %v6953, 7
      %v6955 = vsub.s32 %v6240, %v6954
      %v6956 = vrot.slane %v5881, %v6955
      %v6957 = vsel %vm6245, %v6956, %v6952
      %v6958 = vlaneseq
      %v6959 = vshrl.u32 %v6958, 7
      %v6960 = vsub.s32 %v6235, %v6959
      %v6961 = vrot.slane %v5882, %v6960
      %v6962 = vlaneseq
      %v6963 = vshrl.u32 %v6962, 7
      %v6964 = vsub.s32 %v6240, %v6963
      %v6965 = vrot.slane %v5883, %v6964
      %v6966 = vsel %vm6245, %v6965, %v6961
      %v6967 = vlaneseq
      %v6968 = vshrl.u32 %v6967, 7
      %v6969 = vsub.s32 %v6235, %v6968
      %v6970 = vrot.slane %v5884, %v6969
      %v6971 = vlaneseq
      %v6972 = vshrl.u32 %v6971, 7
      %v6973 = vsub.s32 %v6240, %v6972
      %v6974 = vrot.slane %v5885, %v6973
      %v6975 = vsel %vm6245, %v6974, %v6970
      %v6976 = vlaneseq
      %v6977 = vshrl.u32 %v6976, 7
      %v6978 = vsub.s32 %v6235, %v6977
      %v6979 = vrot.slane %v5886, %v6978
      %v6980 = vlaneseq
      %v6981 = vshrl.u32 %v6980, 7
      %v6982 = vsub.s32 %v6240, %v6981
      %v6983 = vrot.slane %v5887, %v6982
      %v6984 = vsel %vm6245, %v6983, %v6979
      %v6985 = vlaneseq
      %v6986 = vshrl.u32 %v6985, 7
      %v6987 = vsub.s32 %v6235, %v6986
      %v6988 = vrot.slane %v5888, %v6987
      %v6989 = vlaneseq
      %v6990 = vshrl.u32 %v6989, 7
      %v6991 = vsub.s32 %v6240, %v6990
      %v6992 = vrot.slane %v5889, %v6991
      %v6993 = vsel %vm6245, %v6992, %v6988
      %v6994 = vlaneseq
      %v6995 = vshrl.u32 %v6994, 7
      %v6996 = vsub.s32 %v6235, %v6995
      %v6997 = vrot.slane %v5890, %v6996
      %v6998 = vlaneseq
      %v6999 = vshrl.u32 %v6998, 7
      %v7000 = vsub.s32 %v6240, %v6999
      %v7001 = vrot.slane %v5891, %v7000
      %v7002 = vsel %vm6245, %v7001, %v6997
      %v7003 = vlaneseq
      %v7004 = vshrl.u32 %v7003, 7
      %v7005 = vsub.s32 %v6235, %v7004
      %v7006 = vrot.slane %v5892, %v7005
      %v7007 = vlaneseq
      %v7008 = vshrl.u32 %v7007, 7
      %v7009 = vsub.s32 %v6240, %v7008
      %v7010 = vrot.slane %v5893, %v7009
      %v7011 = vsel %vm6245, %v7010, %v7006
      %v7012 = vlaneseq
      %v7013 = vshrl.u32 %v7012, 7
      %v7014 = vsub.s32 %v6235, %v7013
      %v7015 = vrot.slane %v5894, %v7014
      %v7016 = vlaneseq
      %v7017 = vshrl.u32 %v7016, 7
      %v7018 = vsub.s32 %v6240, %v7017
      %v7019 = vrot.slane %v5895, %v7018
      %v7020 = vsel %vm6245, %v7019, %v7015
      %v7021 = vlaneseq
      %v7022 = vshrl.u32 %v7021, 7
      %v7023 = vsub.s32 %v6235, %v7022
      %v7024 = vrot.slane %v5896, %v7023
      %v7025 = vlaneseq
      %v7026 = vshrl.u32 %v7025, 7
      %v7027 = vsub.s32 %v6240, %v7026
      %v7028 = vrot.slane %v5897, %v7027
      %v7029 = vsel %vm6245, %v7028, %v7024
      %v7030 = vlaneseq
      %v7031 = vshrl.u32 %v7030, 7
      %v7032 = vsub.s32 %v6235, %v7031
      %v7033 = vrot.slane %v5898, %v7032
      %v7034 = vlaneseq
      %v7035 = vshrl.u32 %v7034, 7
      %v7036 = vsub.s32 %v6240, %v7035
      %v7037 = vrot.slane %v5899, %v7036
      %v7038 = vsel %vm6245, %v7037, %v7033
      %v7039 = vlaneseq
      %v7040 = vshrl.u32 %v7039, 7
      %v7041 = vsub.s32 %v6235, %v7040
      %v7042 = vrot.slane %v5900, %v7041
      %v7043 = vlaneseq
      %v7044 = vshrl.u32 %v7043, 7
      %v7045 = vsub.s32 %v6240, %v7044
      %v7046 = vrot.slane %v5901, %v7045
      %v7047 = vsel %vm6245, %v7046, %v7042
      %v7048 = vlaneseq
      %v7049 = vshrl.u32 %v7048, 7
      %v7050 = vsub.s32 %v6235, %v7049
      %v7051 = vrot.slane %v5902, %v7050
      %v7052 = vlaneseq
      %v7053 = vshrl.u32 %v7052, 7
      %v7054 = vsub.s32 %v6240, %v7053
      %v7055 = vrot.slane %v5903, %v7054
      %v7056 = vsel %vm6245, %v7055, %v7051
      %v7057 = vlaneseq
      %v7058 = vshrl.u32 %v7057, 7
      %v7059 = vsub.s32 %v6235, %v7058
      %v7060 = vrot.slane %v5904, %v7059
      %v7061 = vlaneseq
      %v7062 = vshrl.u32 %v7061, 7
      %v7063 = vsub.s32 %v6240, %v7062
      %v7064 = vrot.slane %v5905, %v7063
      %v7065 = vsel %vm6245, %v7064, %v7060
      %v7066 = vlaneseq
      %v7067 = vshrl.u32 %v7066, 7
      %v7068 = vsub.s32 %v6235, %v7067
      %v7069 = vrot.slane %v5906, %v7068
      %v7070 = vlaneseq
      %v7071 = vshrl.u32 %v7070, 7
      %v7072 = vsub.s32 %v6240, %v7071
      %v7073 = vrot.slane %v5907, %v7072
      %v7074 = vsel %vm6245, %v7073, %v7069
      %v7075 = vlaneseq
      %v7076 = vshrl.u32 %v7075, 7
      %v7077 = vsub.s32 %v6235, %v7076
      %v7078 = vrot.slane %v5908, %v7077
      %v7079 = vlaneseq
      %v7080 = vshrl.u32 %v7079, 7
      %v7081 = vsub.s32 %v6240, %v7080
      %v7082 = vrot.slane %v5909, %v7081
      %v7083 = vsel %vm6245, %v7082, %v7078
      %v7084 = vlaneseq
      %v7085 = vshrl.u32 %v7084, 7
      %v7086 = vsub.s32 %v6235, %v7085
      %v7087 = vrot.slane %v5910, %v7086
      %v7088 = vlaneseq
      %v7089 = vshrl.u32 %v7088, 7
      %v7090 = vsub.s32 %v6240, %v7089
      %v7091 = vrot.slane %v5911, %v7090
      %v7092 = vsel %vm6245, %v7091, %v7087
      %v7093 = vlaneseq
      %v7094 = vshrl.u32 %v7093, 7
      %v7095 = vsub.s32 %v6235, %v7094
      %v7096 = vrot.slane %v5912, %v7095
      %v7097 = vlaneseq
      %v7098 = vshrl.u32 %v7097, 7
      %v7099 = vsub.s32 %v6240, %v7098
      %v7100 = vrot.slane %v5913, %v7099
      %v7101 = vsel %vm6245, %v7100, %v7096
      %v7102 = vlaneseq
      %v7103 = vshrl.u32 %v7102, 7
      %v7104 = vsub.s32 %v6235, %v7103
      %v7105 = vrot.slane %v5914, %v7104
      %v7106 = vlaneseq
      %v7107 = vshrl.u32 %v7106, 7
      %v7108 = vsub.s32 %v6240, %v7107
      %v7109 = vrot.slane %v5915, %v7108
      %v7110 = vsel %vm6245, %v7109, %v7105
      %v7111 = vlaneseq
      %v7112 = vshrl.u32 %v7111, 7
      %v7113 = vsub.s32 %v6235, %v7112
      %v7114 = vrot.slane %v5916, %v7113
      %v7115 = vlaneseq
      %v7116 = vshrl.u32 %v7115, 7
      %v7117 = vsub.s32 %v6240, %v7116
      %v7118 = vrot.slane %v5917, %v7117
      %v7119 = vsel %vm6245, %v7118, %v7114
      %v7120 = vlaneseq
      %v7121 = vshrl.u32 %v7120, 7
      %v7122 = vsub.s32 %v6235, %v7121
      %v7123 = vrot.slane %v5918, %v7122
      %v7124 = vlaneseq
      %v7125 = vshrl.u32 %v7124, 7
      %v7126 = vsub.s32 %v6240, %v7125
      %v7127 = vrot.slane %v5919, %v7126
      %v7128 = vsel %vm6245, %v7127, %v7123
      %v7129 = vlaneseq
      %v7130 = vshrl.u32 %v7129, 7
      %v7131 = vsub.s32 %v6235, %v7130
      %v7132 = vrot.slane %v5920, %v7131
      %v7133 = vlaneseq
      %v7134 = vshrl.u32 %v7133, 7
      %v7135 = vsub.s32 %v6240, %v7134
      %v7136 = vrot.slane %v5921, %v7135
      %v7137 = vsel %vm6245, %v7136, %v7132
      %v7138 = vlaneseq
      %v7139 = vshrl.u32 %v7138, 7
      %v7140 = vsub.s32 %v6235, %v7139
      %v7141 = vrot.slane %v5922, %v7140
      %v7142 = vlaneseq
      %v7143 = vshrl.u32 %v7142, 7
      %v7144 = vsub.s32 %v6240, %v7143
      %v7145 = vrot.slane %v5923, %v7144
      %v7146 = vsel %vm6245, %v7145, %v7141
      %v7147 = vlaneseq
      %v7148 = vshrl.u32 %v7147, 7
      %v7149 = vsub.s32 %v6235, %v7148
      %v7150 = vrot.slane %v5924, %v7149
      %v7151 = vlaneseq
      %v7152 = vshrl.u32 %v7151, 7
      %v7153 = vsub.s32 %v6240, %v7152
      %v7154 = vrot.slane %v5925, %v7153
      %v7155 = vsel %vm6245, %v7154, %v7150
      %v7156 = vlaneseq
      %v7157 = vshrl.u32 %v7156, 7
      %v7158 = vsub.s32 %v6235, %v7157
      %v7159 = vrot.slane %v5926, %v7158
      %v7160 = vlaneseq
      %v7161 = vshrl.u32 %v7160, 7
      %v7162 = vsub.s32 %v6240, %v7161
      %v7163 = vrot.slane %v5927, %v7162
      %v7164 = vsel %vm6245, %v7163, %v7159
      %v7165 = vlaneseq
      %v7166 = vshrl.u32 %v7165, 7
      %v7167 = vsub.s32 %v6235, %v7166
      %v7168 = vrot.slane %v5928, %v7167
      %v7169 = vlaneseq
      %v7170 = vshrl.u32 %v7169, 7
      %v7171 = vsub.s32 %v6240, %v7170
      %v7172 = vrot.slane %v5929, %v7171
      %v7173 = vsel %vm6245, %v7172, %v7168
      %v7174 = vlaneseq
      %v7175 = vshrl.u32 %v7174, 7
      %v7176 = vsub.s32 %v6235, %v7175
      %v7177 = vrot.slane %v5930, %v7176
      %v7178 = vlaneseq
      %v7179 = vshrl.u32 %v7178, 7
      %v7180 = vsub.s32 %v6240, %v7179
      %v7181 = vrot.slane %v5931, %v7180
      %v7182 = vsel %vm6245, %v7181, %v7177
      %v7183 = vlaneseq
      %v7184 = vshrl.u32 %v7183, 7
      %v7185 = vsub.s32 %v6235, %v7184
      %v7186 = vrot.slane %v5932, %v7185
      %v7187 = vlaneseq
      %v7188 = vshrl.u32 %v7187, 7
      %v7189 = vsub.s32 %v6240, %v7188
      %v7190 = vrot.slane %v5933, %v7189
      %v7191 = vsel %vm6245, %v7190, %v7186
      %v7192 = vlaneseq
      %v7193 = vshrl.u32 %v7192, 7
      %v7194 = vsub.s32 %v6235, %v7193
      %v7195 = vrot.slane %v5934, %v7194
      %v7196 = vlaneseq
      %v7197 = vshrl.u32 %v7196, 7
      %v7198 = vsub.s32 %v6240, %v7197
      %v7199 = vrot.slane %v5935, %v7198
      %v7200 = vsel %vm6245, %v7199, %v7195
      %v7201 = vlaneseq
      %v7202 = vshrl.u32 %v7201, 7
      %v7203 = vsub.s32 %v6235, %v7202
      %v7204 = vrot.slane %v5936, %v7203
      %v7205 = vlaneseq
      %v7206 = vshrl.u32 %v7205, 7
      %v7207 = vsub.s32 %v6240, %v7206
      %v7208 = vrot.slane %v5937, %v7207
      %v7209 = vsel %vm6245, %v7208, %v7204
      %v7210 = vlaneseq
      %v7211 = vshrl.u32 %v7210, 7
      %v7212 = vsub.s32 %v6235, %v7211
      %v7213 = vrot.slane %v5938, %v7212
      %v7214 = vlaneseq
      %v7215 = vshrl.u32 %v7214, 7
      %v7216 = vsub.s32 %v6240, %v7215
      %v7217 = vrot.slane %v5939, %v7216
      %v7218 = vsel %vm6245, %v7217, %v7213
      %v7219 = vlaneseq
      %v7220 = vshrl.u32 %v7219, 7
      %v7221 = vsub.s32 %v6235, %v7220
      %v7222 = vrot.slane %v5940, %v7221
      %v7223 = vlaneseq
      %v7224 = vshrl.u32 %v7223, 7
      %v7225 = vsub.s32 %v6240, %v7224
      %v7226 = vrot.slane %v5941, %v7225
      %v7227 = vsel %vm6245, %v7226, %v7222
      %v7228 = vlaneseq
      %v7229 = vshrl.u32 %v7228, 7
      %v7230 = vsub.s32 %v6235, %v7229
      %v7231 = vrot.slane %v5942, %v7230
      %v7232 = vlaneseq
      %v7233 = vshrl.u32 %v7232, 7
      %v7234 = vsub.s32 %v6240, %v7233
      %v7235 = vrot.slane %v5943, %v7234
      %v7236 = vsel %vm6245, %v7235, %v7231
      %v7237 = vlaneseq
      %v7238 = vshrl.u32 %v7237, 7
      %v7239 = vsub.s32 %v6235, %v7238
      %v7240 = vrot.slane %v5944, %v7239
      %v7241 = vlaneseq
      %v7242 = vshrl.u32 %v7241, 7
      %v7243 = vsub.s32 %v6240, %v7242
      %v7244 = vrot.slane %v5945, %v7243
      %v7245 = vsel %vm6245, %v7244, %v7240
      %v7246 = vlaneseq
      %v7247 = vshrl.u32 %v7246, 7
      %v7248 = vsub.s32 %v6235, %v7247
      %v7249 = vrot.slane %v5946, %v7248
      %v7250 = vlaneseq
      %v7251 = vshrl.u32 %v7250, 7
      %v7252 = vsub.s32 %v6240, %v7251
      %v7253 = vrot.slane %v5947, %v7252
      %v7254 = vsel %vm6245, %v7253, %v7249
      %v7255 = vlaneseq
      %v7256 = vshrl.u32 %v7255, 7
      %v7257 = vsub.s32 %v6235, %v7256
      %v7258 = vrot.slane %v5948, %v7257
      %v7259 = vlaneseq
      %v7260 = vshrl.u32 %v7259, 7
      %v7261 = vsub.s32 %v6240, %v7260
      %v7262 = vrot.slane %v5949, %v7261
      %v7263 = vsel %vm6245, %v7262, %v7258
      %v7264 = vlaneseq
      %v7265 = vshrl.u32 %v7264, 7
      %v7266 = vsub.s32 %v6235, %v7265
      %v7267 = vrot.slane %v5950, %v7266
      %v7268 = vlaneseq
      %v7269 = vshrl.u32 %v7268, 7
      %v7270 = vsub.s32 %v6240, %v7269
      %v7271 = vrot.slane %v5951, %v7270
      %v7272 = vsel %vm6245, %v7271, %v7267
      %v7273 = vlaneseq
      %v7274 = vshrl.u32 %v7273, 7
      %v7275 = vsub.s32 %v6235, %v7274
      %v7276 = vrot.slane %v5952, %v7275
      %v7277 = vlaneseq
      %v7278 = vshrl.u32 %v7277, 7
      %v7279 = vsub.s32 %v6240, %v7278
      %v7280 = vrot.slane %v5953, %v7279
      %v7281 = vsel %vm6245, %v7280, %v7276
      %v7282 = vlaneseq
      %v7283 = vshrl.u32 %v7282, 7
      %v7284 = vsub.s32 %v6235, %v7283
      %v7285 = vrot.slane %v5954, %v7284
      %v7286 = vlaneseq
      %v7287 = vshrl.u32 %v7286, 7
      %v7288 = vsub.s32 %v6240, %v7287
      %v7289 = vrot.slane %v5955, %v7288
      %v7290 = vsel %vm6245, %v7289, %v7285
      %v7291 = vlaneseq
      %v7292 = vshrl.u32 %v7291, 7
      %v7293 = vsub.s32 %v6235, %v7292
      %v7294 = vrot.slane %v5956, %v7293
      %v7295 = vlaneseq
      %v7296 = vshrl.u32 %v7295, 7
      %v7297 = vsub.s32 %v6240, %v7296
      %v7298 = vrot.slane %v5957, %v7297
      %v7299 = vsel %vm6245, %v7298, %v7294
      %v7300 = vlaneseq
      %v7301 = vshrl.u32 %v7300, 7
      %v7302 = vsub.s32 %v6235, %v7301
      %v7303 = vrot.slane %v5958, %v7302
      %v7304 = vlaneseq
      %v7305 = vshrl.u32 %v7304, 7
      %v7306 = vsub.s32 %v6240, %v7305
      %v7307 = vrot.slane %v5959, %v7306
      %v7308 = vsel %vm6245, %v7307, %v7303
      %v7309 = vlaneseq
      %v7310 = vshrl.u32 %v7309, 7
      %v7311 = vsub.s32 %v6235, %v7310
      %v7312 = vrot.slane %v5960, %v7311
      %v7313 = vlaneseq
      %v7314 = vshrl.u32 %v7313, 7
      %v7315 = vsub.s32 %v6240, %v7314
      %v7316 = vrot.slane %v5961, %v7315
      %v7317 = vsel %vm6245, %v7316, %v7312
      %v7318 = vlaneseq
      %v7319 = vshrl.u32 %v7318, 7
      %v7320 = vsub.s32 %v6235, %v7319
      %v7321 = vrot.slane %v5962, %v7320
      %v7322 = vlaneseq
      %v7323 = vshrl.u32 %v7322, 7
      %v7324 = vsub.s32 %v6240, %v7323
      %v7325 = vrot.slane %v5963, %v7324
      %v7326 = vsel %vm6245, %v7325, %v7321
      %v7327 = vlaneseq
      %v7328 = vshrl.u32 %v7327, 7
      %v7329 = vsub.s32 %v6235, %v7328
      %v7330 = vrot.slane %v5964, %v7329
      %v7331 = vlaneseq
      %v7332 = vshrl.u32 %v7331, 7
      %v7333 = vsub.s32 %v6240, %v7332
      %v7334 = vrot.slane %v5965, %v7333
      %v7335 = vsel %vm6245, %v7334, %v7330
      %v7336 = vlaneseq
      %v7337 = vshrl.u32 %v7336, 7
      %v7338 = vsub.s32 %v6235, %v7337
      %v7339 = vrot.slane %v5966, %v7338
      %v7340 = vlaneseq
      %v7341 = vshrl.u32 %v7340, 7
      %v7342 = vsub.s32 %v6240, %v7341
      %v7343 = vrot.slane %v5967, %v7342
      %v7344 = vsel %vm6245, %v7343, %v7339
      %v7345 = vlaneseq
      %v7346 = vshrl.u32 %v7345, 7
      %v7347 = vsub.s32 %v6235, %v7346
      %v7348 = vrot.slane %v5968, %v7347
      %v7349 = vlaneseq
      %v7350 = vshrl.u32 %v7349, 7
      %v7351 = vsub.s32 %v6240, %v7350
      %v7352 = vrot.slane %v5969, %v7351
      %v7353 = vsel %vm6245, %v7352, %v7348
      %v7354 = vlaneseq
      %v7355 = vshrl.u32 %v7354, 7
      %v7356 = vsub.s32 %v6235, %v7355
      %v7357 = vrot.slane %v5970, %v7356
      %v7358 = vlaneseq
      %v7359 = vshrl.u32 %v7358, 7
      %v7360 = vsub.s32 %v6240, %v7359
      %v7361 = vrot.slane %v5971, %v7360
      %v7362 = vsel %vm6245, %v7361, %v7357
      %v7363 = vlaneseq
      %v7364 = vshrl.u32 %v7363, 7
      %v7365 = vsub.s32 %v6235, %v7364
      %v7366 = vrot.slane %v5972, %v7365
      %v7367 = vlaneseq
      %v7368 = vshrl.u32 %v7367, 7
      %v7369 = vsub.s32 %v6240, %v7368
      %v7370 = vrot.slane %v5973, %v7369
      %v7371 = vsel %vm6245, %v7370, %v7366
      %v7372 = vlaneseq
      %v7373 = vshrl.u32 %v7372, 7
      %v7374 = vsub.s32 %v6235, %v7373
      %v7375 = vrot.slane %v5974, %v7374
      %v7376 = vlaneseq
      %v7377 = vshrl.u32 %v7376, 7
      %v7378 = vsub.s32 %v6240, %v7377
      %v7379 = vrot.slane %v5975, %v7378
      %v7380 = vsel %vm6245, %v7379, %v7375
      %v7381 = vlaneseq
      %v7382 = vshrl.u32 %v7381, 7
      %v7383 = vsub.s32 %v6235, %v7382
      %v7384 = vrot.slane %v5976, %v7383
      %v7385 = vlaneseq
      %v7386 = vshrl.u32 %v7385, 7
      %v7387 = vsub.s32 %v6240, %v7386
      %v7388 = vrot.slane %v5977, %v7387
      %v7389 = vsel %vm6245, %v7388, %v7384
      %vm7390 = vcmask 1041409
      %v7391 = vsel %vm7390, %v6255, %v6246
      %vm7392 = vcmask 1042434
      %v7393 = vsel %vm7392, %v6264, %v7391
      %vm7394 = vcmask 1043459
      %v7395 = vsel %vm7394, %v6273, %v7393
      %vm7396 = vcmask 1044484
      %v7397 = vsel %vm7396, %v6282, %v7395
      %vm7398 = vcmask 1045509
      %v7399 = vsel %vm7398, %v6291, %v7397
      %vm7400 = vcmask 1046534
      %v7401 = vsel %vm7400, %v6300, %v7399
      %vm7402 = vcmask 1047559
      %v7403 = vsel %vm7402, %v6309, %v7401
      %v7404 = vsel %vm7390, %v6327, %v6318
      %v7405 = vsel %vm7392, %v6336, %v7404
      %v7406 = vsel %vm7394, %v6345, %v7405
      %v7407 = vsel %vm7396, %v6354, %v7406
      %v7408 = vsel %vm7398, %v6363, %v7407
      %v7409 = vsel %vm7400, %v6372, %v7408
      %v7410 = vsel %vm7402, %v6381, %v7409
      %v7411 = vsel %vm7390, %v6399, %v6390
      %v7412 = vsel %vm7392, %v6408, %v7411
      %v7413 = vsel %vm7394, %v6417, %v7412
      %v7414 = vsel %vm7396, %v6426, %v7413
      %v7415 = vsel %vm7398, %v6435, %v7414
      %v7416 = vsel %vm7400, %v6444, %v7415
      %v7417 = vsel %vm7402, %v6453, %v7416
      %v7418 = vsel %vm7390, %v6471, %v6462
      %v7419 = vsel %vm7392, %v6480, %v7418
      %v7420 = vsel %vm7394, %v6489, %v7419
      %v7421 = vsel %vm7396, %v6498, %v7420
      %v7422 = vsel %vm7398, %v6507, %v7421
      %v7423 = vsel %vm7400, %v6516, %v7422
      %v7424 = vsel %vm7402, %v6525, %v7423
      %v7425 = vsel %vm7390, %v6543, %v6534
      %v7426 = vsel %vm7392, %v6552, %v7425
      %v7427 = vsel %vm7394, %v6561, %v7426
      %v7428 = vsel %vm7396, %v6570, %v7427
      %v7429 = vsel %vm7398, %v6579, %v7428
      %v7430 = vsel %vm7400, %v6588, %v7429
      %v7431 = vsel %vm7402, %v6597, %v7430
      %v7432 = vsel %vm7390, %v6615, %v6606
      %v7433 = vsel %vm7392, %v6624, %v7432
      %v7434 = vsel %vm7394, %v6633, %v7433
      %v7435 = vsel %vm7396, %v6642, %v7434
      %v7436 = vsel %vm7398, %v6651, %v7435
      %v7437 = vsel %vm7400, %v6660, %v7436
      %v7438 = vsel %vm7402, %v6669, %v7437
      %v7439 = vsel %vm7390, %v6687, %v6678
      %v7440 = vsel %vm7392, %v6696, %v7439
      %v7441 = vsel %vm7394, %v6705, %v7440
      %v7442 = vsel %vm7396, %v6714, %v7441
      %v7443 = vsel %vm7398, %v6723, %v7442
      %v7444 = vsel %vm7400, %v6732, %v7443
      %v7445 = vsel %vm7402, %v6741, %v7444
      %v7446 = vsel %vm7390, %v6759, %v6750
      %v7447 = vsel %vm7392, %v6768, %v7446
      %v7448 = vsel %vm7394, %v6777, %v7447
      %v7449 = vsel %vm7396, %v6786, %v7448
      %v7450 = vsel %vm7398, %v6795, %v7449
      %v7451 = vsel %vm7400, %v6804, %v7450
      %v7452 = vsel %vm7402, %v6813, %v7451
      %v7453 = vsel %vm7390, %v6831, %v6822
      %v7454 = vsel %vm7392, %v6840, %v7453
      %v7455 = vsel %vm7394, %v6849, %v7454
      %v7456 = vsel %vm7396, %v6858, %v7455
      %v7457 = vsel %vm7398, %v6867, %v7456
      %v7458 = vsel %vm7400, %v6876, %v7457
      %v7459 = vsel %vm7402, %v6885, %v7458
      %v7460 = vsel %vm7390, %v6903, %v6894
      %v7461 = vsel %vm7392, %v6912, %v7460
      %v7462 = vsel %vm7394, %v6921, %v7461
      %v7463 = vsel %vm7396, %v6930, %v7462
      %v7464 = vsel %vm7398, %v6939, %v7463
      %v7465 = vsel %vm7400, %v6948, %v7464
      %v7466 = vsel %vm7402, %v6957, %v7465
      %v7467 = vsel %vm7390, %v6975, %v6966
      %v7468 = vsel %vm7392, %v6984, %v7467
      %v7469 = vsel %vm7394, %v6993, %v7468
      %v7470 = vsel %vm7396, %v7002, %v7469
      %v7471 = vsel %vm7398, %v7011, %v7470
      %v7472 = vsel %vm7400, %v7020, %v7471
      %v7473 = vsel %vm7402, %v7029, %v7472
      %v7474 = vsel %vm7390, %v7047, %v7038
      %v7475 = vsel %vm7392, %v7056, %v7474
      %v7476 = vsel %vm7394, %v7065, %v7475
      %v7477 = vsel %vm7396, %v7074, %v7476
      %v7478 = vsel %vm7398, %v7083, %v7477
      %v7479 = vsel %vm7400, %v7092, %v7478
      %v7480 = vsel %vm7402, %v7101, %v7479
      %v7481 = vsel %vm7390, %v7119, %v7110
      %v7482 = vsel %vm7392, %v7128, %v7481
      %v7483 = vsel %vm7394, %v7137, %v7482
      %v7484 = vsel %vm7396, %v7146, %v7483
      %v7485 = vsel %vm7398, %v7155, %v7484
      %v7486 = vsel %vm7400, %v7164, %v7485
      %v7487 = vsel %vm7402, %v7173, %v7486
      %v7488 = vsel %vm7390, %v7191, %v7182
      %v7489 = vsel %vm7392, %v7200, %v7488
      %v7490 = vsel %vm7394, %v7209, %v7489
      %v7491 = vsel %vm7396, %v7218, %v7490
      %v7492 = vsel %vm7398, %v7227, %v7491
      %v7493 = vsel %vm7400, %v7236, %v7492
      %v7494 = vsel %vm7402, %v7245, %v7493
      %v7495 = vsel %vm7390, %v7263, %v7254
      %v7496 = vsel %vm7392, %v7272, %v7495
      %v7497 = vsel %vm7394, %v7281, %v7496
      %v7498 = vsel %vm7396, %v7290, %v7497
      %v7499 = vsel %vm7398, %v7299, %v7498
      %v7500 = vsel %vm7400, %v7308, %v7499
      %v7501 = vsel %vm7402, %v7317, %v7500
      %v7502 = vsel %vm7390, %v7335, %v7326
      %v7503 = vsel %vm7392, %v7344, %v7502
      %v7504 = vsel %vm7394, %v7353, %v7503
      %v7505 = vsel %vm7396, %v7362, %v7504
      %v7506 = vsel %vm7398, %v7371, %v7505
      %v7507 = vsel %vm7400, %v7380, %v7506
      %v7508 = vsel %vm7402, %v7389, %v7507
      %vm7525 = vcmask 130048
      %7526 = vst.msk [vmem:[%s268] sm:$0xff] %vm7525, %v7403
      %7527 = vst.msk [vmem:[%s268 + $0x8] sm:$0xff] %vm7525, %v7410
      %7528 = vst.msk [vmem:[%s268 + $0x10] sm:$0xff] %vm7525, %v7417
      %7529 = vst.msk [vmem:[%s268 + $0x18] sm:$0xff] %vm7525, %v7424
      %7530 = vst.msk [vmem:[%s268 + $0x20] sm:$0xff] %vm7525, %v7431
      %7531 = vst.msk [vmem:[%s268 + $0x28] sm:$0xff] %vm7525, %v7438
      %7532 = vst.msk [vmem:[%s268 + $0x30] sm:$0xff] %vm7525, %v7445
      %7533 = vst.msk [vmem:[%s268 + $0x38] sm:$0xff] %vm7525, %v7452
      %7534 = vst.msk [vmem:[%s268 + $0x40] sm:$0xff] %vm7525, %v7459
      %7535 = vst.msk [vmem:[%s268 + $0x48] sm:$0xff] %vm7525, %v7466
      %7536 = vst.msk [vmem:[%s268 + $0x50] sm:$0xff] %vm7525, %v7473
      %7537 = vst.msk [vmem:[%s268 + $0x58] sm:$0xff] %vm7525, %v7480
      %7538 = vst.msk [vmem:[%s268 + $0x60] sm:$0xff] %vm7525, %v7487
      %7539 = vst.msk [vmem:[%s268 + $0x68] sm:$0xff] %vm7525, %v7494
      %7540 = vst.msk [vmem:[%s268 + $0x70] sm:$0xff] %vm7525, %v7501
      %7541 = vst.msk [vmem:[%s268 + $0x78] sm:$0xff] %vm7525, %v7508
      %s7542 = smul.u32 16, %s20
      %p7543 = scmp.lt.s32.totalorder %s7542, 31
      %s7544 = scalar_select %p7543, %s7542, 31
      %p7545 = scmp.lt.s32.totalorder %s21, 0
      %s7546 = scalar_select %p7545, %s21, 0
      %s7547 = sadd.s32 %s7546, %s7544
      %s7548 = smul.addr %s7547, 8
      %s7549 = scalar_lea.vmem %s5, %s7548
      // Predicated region
      $region41: #{tpu_custom_call.1} parent=39 // pred_check
        %p7550 = pneg %p163
      $region42: #{tpu_custom_call.1} parent=39 // pred_check_branch
        %7552 = sbr.rel (%p7550) target = $region44
      $region43: #{tpu_custom_call.1} parent=39 // pred_region
        %s7553 = smul.u32 16, %s20
      $region44: #{tpu_custom_call.1} parent=39 // pred_fallthru
        _
    $region40: #{tpu_custom_call.1} parent=5 // pred_fallthru
      _
    %p7554 = scmp.le.s32.totalorder 2, %s11
    // Predicated region
    $region45: #{tpu_custom_call.1} parent=5 // pred_check
      %p7555 = pneg %p7554
    $region46: #{tpu_custom_call.1} parent=5 // pred_check_branch
      %7557 = sbr.rel (%p7555) target = $region48
    $region47: #{tpu_custom_call.1} parent=5 // pred_region
      %s7558 = ssub.s32 %s11, 2
      // Predicated region
      $region49: #{tpu_custom_call.1} parent=47 // pred_check
        %p7559 = pneg %p169
      $region50: #{tpu_custom_call.1} parent=47 // pred_check_branch
        %7561 = sbr.rel (%p7559) target = $region52
      $region51: #{tpu_custom_call.1} parent=47 // pred_region
        %s7562 = smul.u32 16, %s22
        %p7563 = scmp.lt.s32.totalorder %s7562, 31
        %s7564 = scalar_select %p7563, %s7562, 31
        %p7565 = scmp.lt.s32.totalorder %s23, 0
        %s7566 = scalar_select %p7565, %s23, 0
        %s7567 = sadd.s32 %s7566, %s7564
        %s7568 = smul.addr %s7567, 8
        %s7569 = scalar_lea.vmem %s5, %s7568
      $region52: #{tpu_custom_call.1} parent=47 // pred_fallthru
        _
    $region48: #{tpu_custom_call.1} parent=5 // pred_fallthru
      _
  $region6: #{tpu_custom_call.1} parent=0 // loop_footer
    %s15 = sadd.s32 1, %s11
  $region7: #{tpu_custom_call.1} parent=0 // loop_footer_branch
    %10 = sbr.rel target = $region3
  $region8: #{tpu_custom_call.1} parent=0 // loop_exit
    _

</llo_original>
